<compile_context>
chip_gen: v7x
topology: tpu7x:2x2x1
jax: 0.10.0
libtpu: 0.0.40
codegen_flags: <defaults>
</compile_context>

<pallas_src>
import jax
import jax.numpy as jnp
from jax.experimental import pallas as pl
from jax.experimental.pallas import tpu as pltpu


def _cdiv(a, b):
    return -(-a // b)


def _round_up(x, m):
    return _cdiv(x, m) * m


def _policy_kernel(obs_ref, w_pi_ref, b_pi_ref, w_head_ref, b_head_ref, out_ref):
    cdt = obs_ref.dtype                      # compute dtype (f32, or bf16 on v6e/v7x)
    # features_extractor tanh (obs is already stored in the compute dtype).
    x = jnp.tanh(obs_ref[...])
    # policy_net[0]: Linear (block-diag packed) with f32 MXU accumulation, then tanh.
    z = jnp.dot(x, w_pi_ref[...], preferred_element_type=jnp.float32) + b_pi_ref[...]
    h = jnp.tanh(z.astype(cdt))              # no-op cast on the f32 path
    # action_net: Linear (block-diag packed), f32 accumulation, f32 output.
    y = jnp.dot(h, w_head_ref[...], preferred_element_type=jnp.float32) + b_head_ref[...]
    out_ref[...] = y.astype(out_ref.dtype)


def scriptable_policy_forward(obs, w_pi, b_pi, w_head, b_head, *,
                              pack=32, max_tile_rows=256, target_steps=4,
                              compute_dtype=jnp.float32):
    """Fused ScriptablePolicy forward.

    obs:    (B, *obs_shape)   — flattened internally (FlattenExtractor)
    w_pi:   (hidden, obs_dim) — PyTorch (out, in) layout
    b_pi:   (hidden,)
    w_head: (n_act, hidden)
    b_head: (n_act,)

    pack:          number of samples packed along the lane axis (32 -> lane-dense
                   input/hidden/output; 8 -> smaller block-diag weights / MXU work).
    compute_dtype: f32 (default, exact PyTorch semantics, best on v5e) or bf16
                   (v6e/v7x bandwidth + EUP optimization; quantizes obs/weights).
    """
    B = obs.shape[0]
    obs_flat = obs.reshape(B, -1)                         # FlattenExtractor
    obs_dim = obs_flat.shape[1]
    hidden = w_pi.shape[0]
    n_act = w_head.shape[0]

    P = int(pack)
    obs_dim_p, hidden_p, act_p = obs_dim * P, hidden * P, n_act * P

    # --- one-time wrapper glue (not the hot path) -------------------------------
    # Block-diagonal packed weights: kron(I_P, W.T) keeps the P packed samples
    # independent, so the packed matmuls are exactly P independent copies of the
    # original Linear layers.
    f32 = jnp.float32
    w_pi_bd = jnp.kron(jnp.eye(P, dtype=f32), w_pi.T.astype(f32)).astype(compute_dtype)
    w_head_bd = jnp.kron(jnp.eye(P, dtype=f32), w_head.T.astype(f32)).astype(compute_dtype)
    b_pi_bd = jnp.tile(b_pi.astype(f32), P).reshape(1, hidden_p)        # f32 add after MXU
    b_head_bd = jnp.tile(b_head.astype(f32), P).reshape(1, act_p)

    # Pack the batch along lanes: (B, obs_dim) -> (rows, obs_dim * P).
    obs_flat = obs_flat.astype(compute_dtype)
    b_pad = _round_up(max(B, 1), P)
    if b_pad != B:
        obs_flat = jnp.pad(obs_flat, ((0, b_pad - B), (0, 0)))
    rows = b_pad // P
    obs_packed = obs_flat.reshape(rows, obs_dim_p)

    # Adaptive tiling: enough grid steps to pipeline DMAs and feed both v7x TCs,
    # padding only up to one (small) tile, tile_rows a multiple of 8 sublanes.
    max_tile_rows = max(8, _round_up(max_tile_rows, 8))
    n_steps = max(int(target_steps), _cdiv(rows, max_tile_rows))
    tile_rows = min(_round_up(_cdiv(rows, n_steps), 8), max_tile_rows)
    rows_pad = _round_up(rows, tile_rows)
    if rows_pad != rows:
        obs_packed = jnp.pad(obs_packed, ((0, rows_pad - rows), (0, 0)))

    out_packed = pl.pallas_call(
        _policy_kernel,
        out_shape=jax.ShapeDtypeStruct((rows_pad, act_p), jnp.float32),
        grid=(rows_pad // tile_rows,),
        in_specs=[
            pl.BlockSpec((tile_rows, obs_dim_p), lambda i: (i, 0)),   # streamed, lane-dense
            pl.BlockSpec((obs_dim_p, hidden_p), lambda i: (0, 0)),    # VMEM-resident
            pl.BlockSpec((1, hidden_p), lambda i: (0, 0)),            # VMEM-resident
            pl.BlockSpec((hidden_p, act_p), lambda i: (0, 0)),        # VMEM-resident
            pl.BlockSpec((1, act_p), lambda i: (0, 0)),               # VMEM-resident
        ],
        out_specs=pl.BlockSpec((tile_rows, act_p), lambda i: (i, 0)),  # lane-dense stores
        compiler_params=pltpu.CompilerParams(
            dimension_semantics=("parallel",),        # shard batch steps across v7x TCs
            vmem_limit_bytes=32 * 1024 * 1024,        # safe on v5e/v6e/v7x; ~17 MiB peak
        ),
    )(obs_packed, w_pi_bd, b_pi_bd, w_head_bd, b_head_bd)

    # Unpack: drop padded packed rows, restore (B, n_act).
    return out_packed[:rows].reshape(b_pad, n_act)[:B]


def _ref_forward(obs, w_pi, b_pi, w_head, b_head):
    """Pure-JAX reference matching the PyTorch module exactly."""
    x = jnp.tanh(obs.reshape(obs.shape[0], -1).astype(jnp.float32))
    x = jnp.tanh(x @ w_pi.T + b_pi)
    return x @ w_head.T + b_head


if __name__ == "__main__":
    key = jax.random.PRNGKey(0)
    k_obs, k_wpi, k_bpi, k_wh, k_bh = jax.random.split(key, 5)

    # Small shapes consistent with an SB3 MlpPolicy: obs_dim=16, hidden=64, n_actions=4.
    B, OBS_DIM, HIDDEN, N_ACT = 2, 16, 64, 4

    obs = jax.random.normal(k_obs, (B, OBS_DIM), dtype=jnp.float32)
    # Deterministic synthetic parameters (PyTorch-style (out, in) weight layout).
    w_pi = jax.random.uniform(k_wpi, (HIDDEN, OBS_DIM), jnp.float32, -0.25, 0.25)
    b_pi = jax.random.uniform(k_bpi, (HIDDEN,), jnp.float32, -0.1, 0.1)
    w_head = jax.random.uniform(k_wh, (N_ACT, HIDDEN), jnp.float32, -0.125, 0.125)
    b_head = jax.random.uniform(k_bh, (N_ACT,), jnp.float32, -0.1, 0.1)

    # 1) Small inference batch, f32 end to end, default lane-dense P=32 packing.
    out = jax.block_until_ready(
        scriptable_policy_forward(obs, w_pi, b_pi, w_head, b_head))
    ref = _ref_forward(obs, w_pi, b_pi, w_head, b_head)
    assert out.shape == (B, N_ACT)
    assert jnp.allclose(out, ref, atol=1e-5, rtol=1e-5), "f32 mismatch vs reference"

    # 2) Larger batch exercising a multi-step grid + batch/pack padding.
    B2 = 300
    obs2 = jax.random.normal(jax.random.PRNGKey(1), (B2, OBS_DIM), dtype=jnp.float32)
    out2 = jax.block_until_ready(
        scriptable_policy_forward(obs2, w_pi, b_pi, w_head, b_head,
                                  max_tile_rows=8, target_steps=2))
    ref2 = _ref_forward(obs2, w_pi, b_pi, w_head, b_head)
    assert out2.shape == (B2, N_ACT)
    assert jnp.allclose(out2, ref2, atol=1e-5, rtol=1e-5), "tiled mismatch vs reference"

    # 3) P=8 packing variant (lane-dense input, minimal MXU work) — same semantics.
    out3 = jax.block_until_ready(
        scriptable_policy_forward(obs2, w_pi, b_pi, w_head, b_head, pack=8))
    assert jnp.allclose(out3, ref2, atol=1e-5, rtol=1e-5), "pack=8 mismatch vs reference"

    # 4) bf16 compute path (v6e/v7x only): obs + weights quantized to bf16, tanh and
    #    matmul operands in bf16, f32 accumulation.  This is a documented semantic
    #    change vs the PyTorch module, so it is opt-in and compared against a
    #    bf16-quantized reference with loose tolerance.
    kind = jax.devices()[0].device_kind.lower()
    if ("v6" in kind) or ("v7" in kind) or ("7x" in kind):
        out4 = jax.block_until_ready(
            scriptable_policy_forward(obs2, w_pi, b_pi, w_head, b_head,
                                      compute_dtype=jnp.bfloat16))
        ref4 = _ref_forward(obs2.astype(jnp.bfloat16).astype(jnp.float32),
                            w_pi.astype(jnp.bfloat16).astype(jnp.float32), b_pi,
                            w_head.astype(jnp.bfloat16).astype(jnp.float32), b_head)
        assert jnp.allclose(out4, ref4, atol=5e-2, rtol=5e-2), "bf16 mismatch vs reference"

    print("KERNEL_OK")
</pallas_src>

<mosaic_0001>
module attributes {stable_mosaic.version = 11 : i64} {
  func.func @_policy_kernel(%arg0: i32, %arg1: memref<8x512xf32, #tpu.memory_space<vmem>>, %arg2: memref<512x2048xf32, #tpu.memory_space<vmem>>, %arg3: memref<1x2048xf32, #tpu.memory_space<vmem>>, %arg4: memref<2048x128xf32, #tpu.memory_space<vmem>>, %arg5: memref<1x128xf32, #tpu.memory_space<vmem>>, %arg6: memref<8x128xf32, #tpu.memory_space<vmem>>) attributes {dimension_semantics = [#tpu.dimension_semantics<parallel>], iteration_bounds = array<i64: 1>, scalar_prefetch = 0 : i64, scratch_operands = 0 : i64, tpu.core_type = #tpu.core_type<tc>, window_params = [{transform_indices = @transform_0, window_bounds = array<i64: 8, 512>}, {pipeline_mode = #tpu.pipeline_mode<synchronous>, transform_indices = @transform_1, window_bounds = array<i64: 512, 2048>}, {pipeline_mode = #tpu.pipeline_mode<synchronous>, transform_indices = @transform_2, window_bounds = array<i64: 1, 2048>}, {pipeline_mode = #tpu.pipeline_mode<synchronous>, transform_indices = @transform_3, window_bounds = array<i64: 2048, 128>}, {pipeline_mode = #tpu.pipeline_mode<synchronous>, transform_indices = @transform_4, window_bounds = array<i64: 1, 128>}, {transform_indices = @transform_5, window_bounds = array<i64: 8, 128>}]} {
    %c0 = arith.constant 0 : index
    %c0_0 = arith.constant 0 : index
    %0 = vector.load %arg1[%c0, %c0_0] : memref<8x512xf32, #tpu.memory_space<vmem>>, vector<8x512xf32>
    %1 = math.tanh %0 : vector<8x512xf32>
    %c0_1 = arith.constant 0 : index
    %c0_2 = arith.constant 0 : index
    %2 = vector.load %arg2[%c0_1, %c0_2] : memref<512x2048xf32, #tpu.memory_space<vmem>>, vector<512x2048xf32>
    %cst = arith.constant dense<0.000000e+00> : vector<8x2048xf32>
    %3 = tpu.matmul %1, %2, %cst {dimension_numbers = #tpu.dot_dimension_numbers<[1], [0], [0], [1], [0, 0, 1, 1], [], []>} : vector<8x512xf32>, vector<512x2048xf32>, vector<8x2048xf32> -> vector<8x2048xf32>
    %c0_3 = arith.constant 0 : index
    %c0_4 = arith.constant 0 : index
    %4 = vector.load %arg3[%c0_3, %c0_4] : memref<1x2048xf32, #tpu.memory_space<vmem>>, vector<1x2048xf32>
    %5 = vector.broadcast %4 : vector<1x2048xf32> to vector<8x2048xf32>
    %6 = arith.addf %3, %5 : vector<8x2048xf32>
    %7 = math.tanh %6 : vector<8x2048xf32>
    %c0_5 = arith.constant 0 : index
    %c0_6 = arith.constant 0 : index
    %8 = vector.load %arg4[%c0_5, %c0_6] : memref<2048x128xf32, #tpu.memory_space<vmem>>, vector<2048x128xf32>
    %cst_7 = arith.constant dense<0.000000e+00> : vector<8x128xf32>
    %9 = tpu.matmul %7, %8, %cst_7 {dimension_numbers = #tpu.dot_dimension_numbers<[1], [0], [0], [1], [0, 0, 1, 1], [], []>} : vector<8x2048xf32>, vector<2048x128xf32>, vector<8x128xf32> -> vector<8x128xf32>
    %c0_8 = arith.constant 0 : index
    %c0_9 = arith.constant 0 : index
    %10 = vector.load %arg5[%c0_8, %c0_9] : memref<1x128xf32, #tpu.memory_space<vmem>>, vector<1x128xf32>
    %11 = vector.broadcast %10 : vector<1x128xf32> to vector<8x128xf32>
    %12 = arith.addf %9, %11 : vector<8x128xf32>
    %c0_10 = arith.constant 0 : index
    %c0_11 = arith.constant 0 : index
    %13 = vector.load %arg6[%c0_10, %c0_11] : memref<8x128xf32, #tpu.memory_space<vmem>>, vector<8x128xf32>
    tpu.vector_store %arg6[%c0_10, %c0_11], %12 {strides = array<i32>} : memref<8x128xf32, #tpu.memory_space<vmem>>, vector<8x128xf32>,
    return
  }
  func.func @transform_0(%arg0: i32) -> (i32, i32) {
    %c0_i32 = arith.constant 0 : i32
    %c0_i32_0 = arith.constant 0 : i32
    return %arg0, %c0_i32 : i32, i32
  }
  func.func @transform_1(%arg0: i32) -> (i32, i32) {
    %c0_i32 = arith.constant 0 : i32
    %c0_i32_0 = arith.constant 0 : i32
    %c0_i32_1 = arith.constant 0 : i32
    return %c0_i32, %c0_i32_0 : i32, i32
  }
  func.func @transform_2(%arg0: i32) -> (i32, i32) {
    %c0_i32 = arith.constant 0 : i32
    %c0_i32_0 = arith.constant 0 : i32
    %c0_i32_1 = arith.constant 0 : i32
    return %c0_i32, %c0_i32_0 : i32, i32
  }
  func.func @transform_3(%arg0: i32) -> (i32, i32) {
    %c0_i32 = arith.constant 0 : i32
    %c0_i32_0 = arith.constant 0 : i32
    %c0_i32_1 = arith.constant 0 : i32
    return %c0_i32, %c0_i32_0 : i32, i32
  }
  func.func @transform_4(%arg0: i32) -> (i32, i32) {
    %c0_i32 = arith.constant 0 : i32
    %c0_i32_0 = arith.constant 0 : i32
    %c0_i32_1 = arith.constant 0 : i32
    return %c0_i32, %c0_i32_0 : i32, i32
  }
  func.func @transform_5(%arg0: i32) -> (i32, i32) {
    %c0_i32 = arith.constant 0 : i32
    %c0_i32_0 = arith.constant 0 : i32
    return %arg0, %c0_i32 : i32, i32
  }
}

</mosaic_0001>

<llo_original>
// kernel: tpu_custom_call.1
$region0: #{tpu_custom_call.1}
  #allocation0 [shape = 'u32[]', space=smem, size = 0x4, offset = 0x4, fixed_abs, tag = 'smem constant byte address 0x4 - core index']
  #allocation1 [shape = 'u32[144,128]{1,0:T(1,128)}', space=vmem, size = 0x12000, scoped, tag = 'internal scratch']
  %s0 = inlined_call_operand.hbm [shape: f32[8,512], index: 0, kind: input, shape index: {}]
  %s1 = inlined_call_operand.hbm [shape: f32[512,2048], index: 1, kind: input, shape index: {}]
  %s2 = inlined_call_operand.hbm [shape: f32[1,2048], index: 2, kind: input, shape index: {}]
  %s3 = inlined_call_operand.hbm [shape: f32[2048,128], index: 3, kind: input, shape index: {}]
  %s4 = inlined_call_operand.hbm [shape: f32[1,128], index: 4, kind: input, shape index: {}]
  %s5 = inlined_call_operand.hbm [shape: f32[8,128], index: 5, kind: output, shape index: {}]
  %s6 = sld [smem:[#allocation0]]
  $region50: #{tpu_custom_call.1} parent=0
    _
  %s8 = ssub.s32 1, %s6
  %s9 = scalar_select 0, %s8, %s6
  $region1: #{tpu_custom_call.1} parent=0
    #allocation2 [shape = 'u8[16384]{0}', space=vmem, size = 0x4000, scoped, tag = 'input window, operand 0, single buffered']
    #allocation3 [shape = 's32[1]{0}', space=sflag, size = 0x4, scoped, tag = 'scoped memory for tpu_custom_call.1']
    #allocation4 [shape = 's32[1]{0}', space=sflag, size = 0x4, scoped, tag = 'scoped memory for tpu_custom_call.1']
    #allocation5 [shape = 'u8[4194304]{0}', space=vmem, size = 0x400000, scoped, tag = 'input window, operand 1, single buffered']
    #allocation6 [shape = 's32[1]{0}', space=sflag, size = 0x4, scoped, tag = 'scoped memory for tpu_custom_call.1']
    #allocation7 [shape = 'u8[8192]{0}', space=vmem, size = 0x2000, scoped, tag = 'input window, operand 2, single buffered']
    #allocation8 [shape = 'u8[1048576]{0}', space=vmem, size = 0x100000, scoped, tag = 'input window, operand 3, single buffered']
    #allocation9 [shape = 's32[1]{0}', space=sflag, size = 0x4, scoped, tag = 'scoped memory for tpu_custom_call.1']
    #allocation10 [shape = 'u8[512]{0}', space=vmem, size = 0x400, scoped, tag = 'input window, operand 4, single buffered']
    #allocation11 [shape = 'u8[4096]{0}', space=vmem, size = 0x1000, scoped, tag = 'output window, operand 0, single buffered']
    %10 = vsyncpa [#allocation3], 0
    %11 = vsyncpa [#allocation6], 0
    %12 = vsyncpa [#allocation9], 0
    %13 = vsyncpa [#allocation4], 0
    // Predicated region
    $region2: #{tpu_custom_call.1} parent=1 // pred_check
      _
    $region3: #{tpu_custom_call.1} parent=1 // pred_check_branch
      %15 = sbr.rel (0) target = $region5
    $region4: #{tpu_custom_call.1} parent=1 // pred_region
      %s17 = ssub.s32 512, 512
      %18 = vsyncadd [#allocation3], %s17
      %s20 = sshll.u32 [#allocation2], 4
      %s21 = int_to_ptr.vmem [resolvable:$true] %s20
      %23 = dma.hbm_to_vmem [thread:$0]  %s0, 512, %s21, [#allocation3]
    $region5: #{tpu_custom_call.1} parent=1 // pred_fallthru
      _
    // Predicated region
    $region6: #{tpu_custom_call.1} parent=1 // pred_check
      _
    $region7: #{tpu_custom_call.1} parent=1 // pred_check_branch
      %25 = sbr.rel (0) target = $region9
    $region8: #{tpu_custom_call.1} parent=1 // pred_region
      %s27 = ssub.s32 131072, 131072
      %28 = vsyncadd [#allocation6], %s27
      %s29 = sshll.u32 [#allocation5], 4
      %s30 = int_to_ptr.vmem [resolvable:$true] %s29
      %35 = dma.hbm_to_vmem [thread:$0]  %s1, 131072, %s30, [#allocation6], 2048, 2048, 128
    $region9: #{tpu_custom_call.1} parent=1 // pred_fallthru
      _
    // Predicated region
    $region10: #{tpu_custom_call.1} parent=1 // pred_check
      _
    $region11: #{tpu_custom_call.1} parent=1 // pred_check_branch
      %37 = sbr.rel (0) target = $region13
    $region12: #{tpu_custom_call.1} parent=1 // pred_region
      %s39 = ssub.s32 256, 256
      %40 = vsyncadd [#allocation6], %s39
      %s42 = sshll.u32 [#allocation7], 4
      %s43 = int_to_ptr.vmem [resolvable:$true] %s42
      %45 = dma.hbm_to_vmem [thread:$0]  %s2, 256, %s43, [#allocation6]
    $region13: #{tpu_custom_call.1} parent=1 // pred_fallthru
      _
    // Predicated region
    $region14: #{tpu_custom_call.1} parent=1 // pred_check
      _
    $region15: #{tpu_custom_call.1} parent=1 // pred_check_branch
      %47 = sbr.rel (0) target = $region17
    $region16: #{tpu_custom_call.1} parent=1 // pred_region
      %s49 = ssub.s32 32768, 32768
      %50 = vsyncadd [#allocation9], %s49
      %s51 = sshll.u32 [#allocation8], 4
      %s52 = int_to_ptr.vmem [resolvable:$true] %s51
      %57 = dma.hbm_to_vmem [thread:$0]  %s3, 32768, %s52, [#allocation9], 128, 128, 8
    $region17: #{tpu_custom_call.1} parent=1 // pred_fallthru
      _
    // Predicated region
    $region18: #{tpu_custom_call.1} parent=1 // pred_check
      _
    $region19: #{tpu_custom_call.1} parent=1 // pred_check_branch
      %59 = sbr.rel (0) target = $region21
    $region20: #{tpu_custom_call.1} parent=1 // pred_region
      %s61 = ssub.s32 16, 16
      %62 = vsyncadd [#allocation9], %s61
      %s64 = sshll.u32 [#allocation10], 4
      %s65 = int_to_ptr.vmem [resolvable:$true] %s64
      %67 = dma.hbm_to_vmem [thread:$0]  %s4, 16, %s65, [#allocation9]
    $region21: #{tpu_custom_call.1} parent=1 // pred_fallthru
      _
    // Predicated region
    $region22: #{tpu_custom_call.1} parent=1 // pred_check
      _
    $region23: #{tpu_custom_call.1} parent=1 // pred_check_branch
      %69 = sbr.rel (0) target = $region25
    $region24: #{tpu_custom_call.1} parent=1 // pred_region
      %70 = dma.done [#allocation3], 512
    $region25: #{tpu_custom_call.1} parent=1 // pred_fallthru
      _
    // Predicated region
    $region26: #{tpu_custom_call.1} parent=1 // pred_check
      _
    $region27: #{tpu_custom_call.1} parent=1 // pred_check_branch
      %72 = sbr.rel (0) target = $region29
    $region28: #{tpu_custom_call.1} parent=1 // pred_region
      %73 = dma.done [#allocation6], 131072
    $region29: #{tpu_custom_call.1} parent=1 // pred_fallthru
      _
    // Predicated region
    $region30: #{tpu_custom_call.1} parent=1 // pred_check
      _
    $region31: #{tpu_custom_call.1} parent=1 // pred_check_branch
      %75 = sbr.rel (0) target = $region33
    $region32: #{tpu_custom_call.1} parent=1 // pred_region
      %76 = dma.done [#allocation6], 256
    $region33: #{tpu_custom_call.1} parent=1 // pred_fallthru
      _
    // Predicated region
    $region34: #{tpu_custom_call.1} parent=1 // pred_check
      _
    $region35: #{tpu_custom_call.1} parent=1 // pred_check_branch
      %78 = sbr.rel (0) target = $region37
    $region36: #{tpu_custom_call.1} parent=1 // pred_region
      %79 = dma.done [#allocation9], 32768
    $region37: #{tpu_custom_call.1} parent=1 // pred_fallthru
      _
    // Predicated region
    $region38: #{tpu_custom_call.1} parent=1 // pred_check
      _
    $region39: #{tpu_custom_call.1} parent=1 // pred_check_branch
      %81 = sbr.rel (0) target = $region41
    $region40: #{tpu_custom_call.1} parent=1 // pred_region
      %82 = dma.done [#allocation9], 16
    $region41: #{tpu_custom_call.1} parent=1 // pred_fallthru
      _
    %v83 = vld [vmem:[#allocation2] sm:$0xff]
    %v84 = vld [vmem:[#allocation2 + $0x8] sm:$0xff]
    %v85 = vld [vmem:[#allocation2 + $0x10] sm:$0xff]
    %v86 = vld [vmem:[#allocation2 + $0x18] sm:$0xff]
    %v87 = vtanh.pop %v83
    %v88 = vtanh.pop %v84
    %v89 = vtanh.pop %v85
    %v90 = vtanh.pop %v86
    %v91 = vld [vmem:[#allocation5] sm:$0xff]
    %v92 = vld [vmem:[#allocation5 + $0x8] sm:$0xff]
    %v93 = vld [vmem:[#allocation5 + $0x10] sm:$0xff]
    %v94 = vld [vmem:[#allocation5 + $0x18] sm:$0xff]
    %v95 = vld [vmem:[#allocation5 + $0x20] sm:$0xff]
    %v96 = vld [vmem:[#allocation5 + $0x28] sm:$0xff]
    %v97 = vld [vmem:[#allocation5 + $0x30] sm:$0xff]
    %v98 = vld [vmem:[#allocation5 + $0x38] sm:$0xff]
    %v99 = vld [vmem:[#allocation5 + $0x40] sm:$0xff]
    %v100 = vld [vmem:[#allocation5 + $0x48] sm:$0xff]
    %v101 = vld [vmem:[#allocation5 + $0x50] sm:$0xff]
    %v102 = vld [vmem:[#allocation5 + $0x58] sm:$0xff]
    %v103 = vld [vmem:[#allocation5 + $0x60] sm:$0xff]
    %v104 = vld [vmem:[#allocation5 + $0x68] sm:$0xff]
    %v105 = vld [vmem:[#allocation5 + $0x70] sm:$0xff]
    %v106 = vld [vmem:[#allocation5 + $0x78] sm:$0xff]
    %v107 = vld [vmem:[#allocation5 + $0x80] sm:$0xff]
    %v108 = vld [vmem:[#allocation5 + $0x88] sm:$0xff]
    %v109 = vld [vmem:[#allocation5 + $0x90] sm:$0xff]
    %v110 = vld [vmem:[#allocation5 + $0x98] sm:$0xff]
    %v111 = vld [vmem:[#allocation5 + $0xa0] sm:$0xff]
    %v112 = vld [vmem:[#allocation5 + $0xa8] sm:$0xff]
    %v113 = vld [vmem:[#allocation5 + $0xb0] sm:$0xff]
    %v114 = vld [vmem:[#allocation5 + $0xb8] sm:$0xff]
    %v115 = vld [vmem:[#allocation5 + $0xc0] sm:$0xff]
    %v116 = vld [vmem:[#allocation5 + $0xc8] sm:$0xff]
    %v117 = vld [vmem:[#allocation5 + $0xd0] sm:$0xff]
    %v118 = vld [vmem:[#allocation5 + $0xd8] sm:$0xff]
    %v119 = vld [vmem:[#allocation5 + $0xe0] sm:$0xff]
    %v120 = vld [vmem:[#allocation5 + $0xe8] sm:$0xff]
    %v121 = vld [vmem:[#allocation5 + $0xf0] sm:$0xff]
    %v122 = vld [vmem:[#allocation5 + $0xf8] sm:$0xff]
    %v123 = vld [vmem:[#allocation5 + $0x100] sm:$0xff]
    %v124 = vld [vmem:[#allocation5 + $0x108] sm:$0xff]
    %v125 = vld [vmem:[#allocation5 + $0x110] sm:$0xff]
    %v126 = vld [vmem:[#allocation5 + $0x118] sm:$0xff]
    %v127 = vld [vmem:[#allocation5 + $0x120] sm:$0xff]
    %v128 = vld [vmem:[#allocation5 + $0x128] sm:$0xff]
    %v129 = vld [vmem:[#allocation5 + $0x130] sm:$0xff]
    %v130 = vld [vmem:[#allocation5 + $0x138] sm:$0xff]
    %v131 = vld [vmem:[#allocation5 + $0x140] sm:$0xff]
    %v132 = vld [vmem:[#allocation5 + $0x148] sm:$0xff]
    %v133 = vld [vmem:[#allocation5 + $0x150] sm:$0xff]
    %v134 = vld [vmem:[#allocation5 + $0x158] sm:$0xff]
    %v135 = vld [vmem:[#allocation5 + $0x160] sm:$0xff]
    %v136 = vld [vmem:[#allocation5 + $0x168] sm:$0xff]
    %v137 = vld [vmem:[#allocation5 + $0x170] sm:$0xff]
    %v138 = vld [vmem:[#allocation5 + $0x178] sm:$0xff]
    %v139 = vld [vmem:[#allocation5 + $0x180] sm:$0xff]
    %v140 = vld [vmem:[#allocation5 + $0x188] sm:$0xff]
    %v141 = vld [vmem:[#allocation5 + $0x190] sm:$0xff]
    %v142 = vld [vmem:[#allocation5 + $0x198] sm:$0xff]
    %v143 = vld [vmem:[#allocation5 + $0x1a0] sm:$0xff]
    %v144 = vld [vmem:[#allocation5 + $0x1a8] sm:$0xff]
    %v145 = vld [vmem:[#allocation5 + $0x1b0] sm:$0xff]
    %v146 = vld [vmem:[#allocation5 + $0x1b8] sm:$0xff]
    %v147 = vld [vmem:[#allocation5 + $0x1c0] sm:$0xff]
    %v148 = vld [vmem:[#allocation5 + $0x1c8] sm:$0xff]
    %v149 = vld [vmem:[#allocation5 + $0x1d0] sm:$0xff]
    %v150 = vld [vmem:[#allocation5 + $0x1d8] sm:$0xff]
    %v151 = vld [vmem:[#allocation5 + $0x1e0] sm:$0xff]
    %v152 = vld [vmem:[#allocation5 + $0x1e8] sm:$0xff]
    %v153 = vld [vmem:[#allocation5 + $0x1f0] sm:$0xff]
    %v154 = vld [vmem:[#allocation5 + $0x1f8] sm:$0xff]
    %v155 = vld [vmem:[#allocation5 + $0x200] sm:$0xff]
    %v156 = vld [vmem:[#allocation5 + $0x208] sm:$0xff]
    %v157 = vld [vmem:[#allocation5 + $0x210] sm:$0xff]
    %v158 = vld [vmem:[#allocation5 + $0x218] sm:$0xff]
    %v159 = vld [vmem:[#allocation5 + $0x220] sm:$0xff]
    %v160 = vld [vmem:[#allocation5 + $0x228] sm:$0xff]
    %v161 = vld [vmem:[#allocation5 + $0x230] sm:$0xff]
    %v162 = vld [vmem:[#allocation5 + $0x238] sm:$0xff]
    %v163 = vld [vmem:[#allocation5 + $0x240] sm:$0xff]
    %v164 = vld [vmem:[#allocation5 + $0x248] sm:$0xff]
    %v165 = vld [vmem:[#allocation5 + $0x250] sm:$0xff]
    %v166 = vld [vmem:[#allocation5 + $0x258] sm:$0xff]
    %v167 = vld [vmem:[#allocation5 + $0x260] sm:$0xff]
    %v168 = vld [vmem:[#allocation5 + $0x268] sm:$0xff]
    %v169 = vld [vmem:[#allocation5 + $0x270] sm:$0xff]
    %v170 = vld [vmem:[#allocation5 + $0x278] sm:$0xff]
    %v171 = vld [vmem:[#allocation5 + $0x280] sm:$0xff]
    %v172 = vld [vmem:[#allocation5 + $0x288] sm:$0xff]
    %v173 = vld [vmem:[#allocation5 + $0x290] sm:$0xff]
    %v174 = vld [vmem:[#allocation5 + $0x298] sm:$0xff]
    %v175 = vld [vmem:[#allocation5 + $0x2a0] sm:$0xff]
    %v176 = vld [vmem:[#allocation5 + $0x2a8] sm:$0xff]
    %v177 = vld [vmem:[#allocation5 + $0x2b0] sm:$0xff]
    %v178 = vld [vmem:[#allocation5 + $0x2b8] sm:$0xff]
    %v179 = vld [vmem:[#allocation5 + $0x2c0] sm:$0xff]
    %v180 = vld [vmem:[#allocation5 + $0x2c8] sm:$0xff]
    %v181 = vld [vmem:[#allocation5 + $0x2d0] sm:$0xff]
    %v182 = vld [vmem:[#allocation5 + $0x2d8] sm:$0xff]
    %v183 = vld [vmem:[#allocation5 + $0x2e0] sm:$0xff]
    %v184 = vld [vmem:[#allocation5 + $0x2e8] sm:$0xff]
    %v185 = vld [vmem:[#allocation5 + $0x2f0] sm:$0xff]
    %v186 = vld [vmem:[#allocation5 + $0x2f8] sm:$0xff]
    %v187 = vld [vmem:[#allocation5 + $0x300] sm:$0xff]
    %v188 = vld [vmem:[#allocation5 + $0x308] sm:$0xff]
    %v189 = vld [vmem:[#allocation5 + $0x310] sm:$0xff]
    %v190 = vld [vmem:[#allocation5 + $0x318] sm:$0xff]
    %v191 = vld [vmem:[#allocation5 + $0x320] sm:$0xff]
    %v192 = vld [vmem:[#allocation5 + $0x328] sm:$0xff]
    %v193 = vld [vmem:[#allocation5 + $0x330] sm:$0xff]
    %v194 = vld [vmem:[#allocation5 + $0x338] sm:$0xff]
    %v195 = vld [vmem:[#allocation5 + $0x340] sm:$0xff]
    %v196 = vld [vmem:[#allocation5 + $0x348] sm:$0xff]
    %v197 = vld [vmem:[#allocation5 + $0x350] sm:$0xff]
    %v198 = vld [vmem:[#allocation5 + $0x358] sm:$0xff]
    %v199 = vld [vmem:[#allocation5 + $0x360] sm:$0xff]
    %v200 = vld [vmem:[#allocation5 + $0x368] sm:$0xff]
    %v201 = vld [vmem:[#allocation5 + $0x370] sm:$0xff]
    %v202 = vld [vmem:[#allocation5 + $0x378] sm:$0xff]
    %v203 = vld [vmem:[#allocation5 + $0x380] sm:$0xff]
    %v204 = vld [vmem:[#allocation5 + $0x388] sm:$0xff]
    %v205 = vld [vmem:[#allocation5 + $0x390] sm:$0xff]
    %v206 = vld [vmem:[#allocation5 + $0x398] sm:$0xff]
    %v207 = vld [vmem:[#allocation5 + $0x3a0] sm:$0xff]
    %v208 = vld [vmem:[#allocation5 + $0x3a8] sm:$0xff]
    %v209 = vld [vmem:[#allocation5 + $0x3b0] sm:$0xff]
    %v210 = vld [vmem:[#allocation5 + $0x3b8] sm:$0xff]
    %v211 = vld [vmem:[#allocation5 + $0x3c0] sm:$0xff]
    %v212 = vld [vmem:[#allocation5 + $0x3c8] sm:$0xff]
    %v213 = vld [vmem:[#allocation5 + $0x3d0] sm:$0xff]
    %v214 = vld [vmem:[#allocation5 + $0x3d8] sm:$0xff]
    %v215 = vld [vmem:[#allocation5 + $0x3e0] sm:$0xff]
    %v216 = vld [vmem:[#allocation5 + $0x3e8] sm:$0xff]
    %v217 = vld [vmem:[#allocation5 + $0x3f0] sm:$0xff]
    %v218 = vld [vmem:[#allocation5 + $0x3f8] sm:$0xff]
    %v219 = vld [vmem:[#allocation5 + $0x400] sm:$0xff]
    %v220 = vld [vmem:[#allocation5 + $0x408] sm:$0xff]
    %v221 = vld [vmem:[#allocation5 + $0x410] sm:$0xff]
    %v222 = vld [vmem:[#allocation5 + $0x418] sm:$0xff]
    %v223 = vld [vmem:[#allocation5 + $0x420] sm:$0xff]
    %v224 = vld [vmem:[#allocation5 + $0x428] sm:$0xff]
    %v225 = vld [vmem:[#allocation5 + $0x430] sm:$0xff]
    %v226 = vld [vmem:[#allocation5 + $0x438] sm:$0xff]
    %v227 = vld [vmem:[#allocation5 + $0x440] sm:$0xff]
    %v228 = vld [vmem:[#allocation5 + $0x448] sm:$0xff]
    %v229 = vld [vmem:[#allocation5 + $0x450] sm:$0xff]
    %v230 = vld [vmem:[#allocation5 + $0x458] sm:$0xff]
    %v231 = vld [vmem:[#allocation5 + $0x460] sm:$0xff]
    %v232 = vld [vmem:[#allocation5 + $0x468] sm:$0xff]
    %v233 = vld [vmem:[#allocation5 + $0x470] sm:$0xff]
    %v234 = vld [vmem:[#allocation5 + $0x478] sm:$0xff]
    %v235 = vld [vmem:[#allocation5 + $0x480] sm:$0xff]
    %v236 = vld [vmem:[#allocation5 + $0x488] sm:$0xff]
    %v237 = vld [vmem:[#allocation5 + $0x490] sm:$0xff]
    %v238 = vld [vmem:[#allocation5 + $0x498] sm:$0xff]
    %v239 = vld [vmem:[#allocation5 + $0x4a0] sm:$0xff]
    %v240 = vld [vmem:[#allocation5 + $0x4a8] sm:$0xff]
    %v241 = vld [vmem:[#allocation5 + $0x4b0] sm:$0xff]
    %v242 = vld [vmem:[#allocation5 + $0x4b8] sm:$0xff]
    %v243 = vld [vmem:[#allocation5 + $0x4c0] sm:$0xff]
    %v244 = vld [vmem:[#allocation5 + $0x4c8] sm:$0xff]
    %v245 = vld [vmem:[#allocation5 + $0x4d0] sm:$0xff]
    %v246 = vld [vmem:[#allocation5 + $0x4d8] sm:$0xff]
    %v247 = vld [vmem:[#allocation5 + $0x4e0] sm:$0xff]
    %v248 = vld [vmem:[#allocation5 + $0x4e8] sm:$0xff]
    %v249 = vld [vmem:[#allocation5 + $0x4f0] sm:$0xff]
    %v250 = vld [vmem:[#allocation5 + $0x4f8] sm:$0xff]
    %v251 = vld [vmem:[#allocation5 + $0x500] sm:$0xff]
    %v252 = vld [vmem:[#allocation5 + $0x508] sm:$0xff]
    %v253 = vld [vmem:[#allocation5 + $0x510] sm:$0xff]
    %v254 = vld [vmem:[#allocation5 + $0x518] sm:$0xff]
    %v255 = vld [vmem:[#allocation5 + $0x520] sm:$0xff]
    %v256 = vld [vmem:[#allocation5 + $0x528] sm:$0xff]
    %v257 = vld [vmem:[#allocation5 + $0x530] sm:$0xff]
    %v258 = vld [vmem:[#allocation5 + $0x538] sm:$0xff]
    %v259 = vld [vmem:[#allocation5 + $0x540] sm:$0xff]
    %v260 = vld [vmem:[#allocation5 + $0x548] sm:$0xff]
    %v261 = vld [vmem:[#allocation5 + $0x550] sm:$0xff]
    %v262 = vld [vmem:[#allocation5 + $0x558] sm:$0xff]
    %v263 = vld [vmem:[#allocation5 + $0x560] sm:$0xff]
    %v264 = vld [vmem:[#allocation5 + $0x568] sm:$0xff]
    %v265 = vld [vmem:[#allocation5 + $0x570] sm:$0xff]
    %v266 = vld [vmem:[#allocation5 + $0x578] sm:$0xff]
    %v267 = vld [vmem:[#allocation5 + $0x580] sm:$0xff]
    %v268 = vld [vmem:[#allocation5 + $0x588] sm:$0xff]
    %v269 = vld [vmem:[#allocation5 + $0x590] sm:$0xff]
    %v270 = vld [vmem:[#allocation5 + $0x598] sm:$0xff]
    %v271 = vld [vmem:[#allocation5 + $0x5a0] sm:$0xff]
    %v272 = vld [vmem:[#allocation5 + $0x5a8] sm:$0xff]
    %v273 = vld [vmem:[#allocation5 + $0x5b0] sm:$0xff]
    %v274 = vld [vmem:[#allocation5 + $0x5b8] sm:$0xff]
    %v275 = vld [vmem:[#allocation5 + $0x5c0] sm:$0xff]
    %v276 = vld [vmem:[#allocation5 + $0x5c8] sm:$0xff]
    %v277 = vld [vmem:[#allocation5 + $0x5d0] sm:$0xff]
    %v278 = vld [vmem:[#allocation5 + $0x5d8] sm:$0xff]
    %v279 = vld [vmem:[#allocation5 + $0x5e0] sm:$0xff]
    %v280 = vld [vmem:[#allocation5 + $0x5e8] sm:$0xff]
    %v281 = vld [vmem:[#allocation5 + $0x5f0] sm:$0xff]
    %v282 = vld [vmem:[#allocation5 + $0x5f8] sm:$0xff]
    %v283 = vld [vmem:[#allocation5 + $0x600] sm:$0xff]
    %v284 = vld [vmem:[#allocation5 + $0x608] sm:$0xff]
    %v285 = vld [vmem:[#allocation5 + $0x610] sm:$0xff]
    %v286 = vld [vmem:[#allocation5 + $0x618] sm:$0xff]
    %v287 = vld [vmem:[#allocation5 + $0x620] sm:$0xff]
    %v288 = vld [vmem:[#allocation5 + $0x628] sm:$0xff]
    %v289 = vld [vmem:[#allocation5 + $0x630] sm:$0xff]
    %v290 = vld [vmem:[#allocation5 + $0x638] sm:$0xff]
    %v291 = vld [vmem:[#allocation5 + $0x640] sm:$0xff]
    %v292 = vld [vmem:[#allocation5 + $0x648] sm:$0xff]
    %v293 = vld [vmem:[#allocation5 + $0x650] sm:$0xff]
    %v294 = vld [vmem:[#allocation5 + $0x658] sm:$0xff]
    %v295 = vld [vmem:[#allocation5 + $0x660] sm:$0xff]
    %v296 = vld [vmem:[#allocation5 + $0x668] sm:$0xff]
    %v297 = vld [vmem:[#allocation5 + $0x670] sm:$0xff]
    %v298 = vld [vmem:[#allocation5 + $0x678] sm:$0xff]
    %v299 = vld [vmem:[#allocation5 + $0x680] sm:$0xff]
    %v300 = vld [vmem:[#allocation5 + $0x688] sm:$0xff]
    %v301 = vld [vmem:[#allocation5 + $0x690] sm:$0xff]
    %v302 = vld [vmem:[#allocation5 + $0x698] sm:$0xff]
    %v303 = vld [vmem:[#allocation5 + $0x6a0] sm:$0xff]
    %v304 = vld [vmem:[#allocation5 + $0x6a8] sm:$0xff]
    %v305 = vld [vmem:[#allocation5 + $0x6b0] sm:$0xff]
    %v306 = vld [vmem:[#allocation5 + $0x6b8] sm:$0xff]
    %v307 = vld [vmem:[#allocation5 + $0x6c0] sm:$0xff]
    %v308 = vld [vmem:[#allocation5 + $0x6c8] sm:$0xff]
    %v309 = vld [vmem:[#allocation5 + $0x6d0] sm:$0xff]
    %v310 = vld [vmem:[#allocation5 + $0x6d8] sm:$0xff]
    %v311 = vld [vmem:[#allocation5 + $0x6e0] sm:$0xff]
    %v312 = vld [vmem:[#allocation5 + $0x6e8] sm:$0xff]
    %v313 = vld [vmem:[#allocation5 + $0x6f0] sm:$0xff]
    %v314 = vld [vmem:[#allocation5 + $0x6f8] sm:$0xff]
    %v315 = vld [vmem:[#allocation5 + $0x700] sm:$0xff]
    %v316 = vld [vmem:[#allocation5 + $0x708] sm:$0xff]
    %v317 = vld [vmem:[#allocation5 + $0x710] sm:$0xff]
    %v318 = vld [vmem:[#allocation5 + $0x718] sm:$0xff]
    %v319 = vld [vmem:[#allocation5 + $0x720] sm:$0xff]
    %v320 = vld [vmem:[#allocation5 + $0x728] sm:$0xff]
    %v321 = vld [vmem:[#allocation5 + $0x730] sm:$0xff]
    %v322 = vld [vmem:[#allocation5 + $0x738] sm:$0xff]
    %v323 = vld [vmem:[#allocation5 + $0x740] sm:$0xff]
    %v324 = vld [vmem:[#allocation5 + $0x748] sm:$0xff]
    %v325 = vld [vmem:[#allocation5 + $0x750] sm:$0xff]
    %v326 = vld [vmem:[#allocation5 + $0x758] sm:$0xff]
    %v327 = vld [vmem:[#allocation5 + $0x760] sm:$0xff]
    %v328 = vld [vmem:[#allocation5 + $0x768] sm:$0xff]
    %v329 = vld [vmem:[#allocation5 + $0x770] sm:$0xff]
    %v330 = vld [vmem:[#allocation5 + $0x778] sm:$0xff]
    %v331 = vld [vmem:[#allocation5 + $0x780] sm:$0xff]
    %v332 = vld [vmem:[#allocation5 + $0x788] sm:$0xff]
    %v333 = vld [vmem:[#allocation5 + $0x790] sm:$0xff]
    %v334 = vld [vmem:[#allocation5 + $0x798] sm:$0xff]
    %v335 = vld [vmem:[#allocation5 + $0x7a0] sm:$0xff]
    %v336 = vld [vmem:[#allocation5 + $0x7a8] sm:$0xff]
    %v337 = vld [vmem:[#allocation5 + $0x7b0] sm:$0xff]
    %v338 = vld [vmem:[#allocation5 + $0x7b8] sm:$0xff]
    %v339 = vld [vmem:[#allocation5 + $0x7c0] sm:$0xff]
    %v340 = vld [vmem:[#allocation5 + $0x7c8] sm:$0xff]
    %v341 = vld [vmem:[#allocation5 + $0x7d0] sm:$0xff]
    %v342 = vld [vmem:[#allocation5 + $0x7d8] sm:$0xff]
    %v343 = vld [vmem:[#allocation5 + $0x7e0] sm:$0xff]
    %v344 = vld [vmem:[#allocation5 + $0x7e8] sm:$0xff]
    %v345 = vld [vmem:[#allocation5 + $0x7f0] sm:$0xff]
    %v346 = vld [vmem:[#allocation5 + $0x7f8] sm:$0xff]
    %v347 = vld [vmem:[#allocation5 + $0x800] sm:$0xff]
    %v348 = vld [vmem:[#allocation5 + $0x808] sm:$0xff]
    %v349 = vld [vmem:[#allocation5 + $0x810] sm:$0xff]
    %v350 = vld [vmem:[#allocation5 + $0x818] sm:$0xff]
    %v351 = vld [vmem:[#allocation5 + $0x820] sm:$0xff]
    %v352 = vld [vmem:[#allocation5 + $0x828] sm:$0xff]
    %v353 = vld [vmem:[#allocation5 + $0x830] sm:$0xff]
    %v354 = vld [vmem:[#allocation5 + $0x838] sm:$0xff]
    %v355 = vld [vmem:[#allocation5 + $0x840] sm:$0xff]
    %v356 = vld [vmem:[#allocation5 + $0x848] sm:$0xff]
    %v357 = vld [vmem:[#allocation5 + $0x850] sm:$0xff]
    %v358 = vld [vmem:[#allocation5 + $0x858] sm:$0xff]
    %v359 = vld [vmem:[#allocation5 + $0x860] sm:$0xff]
    %v360 = vld [vmem:[#allocation5 + $0x868] sm:$0xff]
    %v361 = vld [vmem:[#allocation5 + $0x870] sm:$0xff]
    %v362 = vld [vmem:[#allocation5 + $0x878] sm:$0xff]
    %v363 = vld [vmem:[#allocation5 + $0x880] sm:$0xff]
    %v364 = vld [vmem:[#allocation5 + $0x888] sm:$0xff]
    %v365 = vld [vmem:[#allocation5 + $0x890] sm:$0xff]
    %v366 = vld [vmem:[#allocation5 + $0x898] sm:$0xff]
    %v367 = vld [vmem:[#allocation5 + $0x8a0] sm:$0xff]
    %v368 = vld [vmem:[#allocation5 + $0x8a8] sm:$0xff]
    %v369 = vld [vmem:[#allocation5 + $0x8b0] sm:$0xff]
    %v370 = vld [vmem:[#allocation5 + $0x8b8] sm:$0xff]
    %v371 = vld [vmem:[#allocation5 + $0x8c0] sm:$0xff]
    %v372 = vld [vmem:[#allocation5 + $0x8c8] sm:$0xff]
    %v373 = vld [vmem:[#allocation5 + $0x8d0] sm:$0xff]
    %v374 = vld [vmem:[#allocation5 + $0x8d8] sm:$0xff]
    %v375 = vld [vmem:[#allocation5 + $0x8e0] sm:$0xff]
    %v376 = vld [vmem:[#allocation5 + $0x8e8] sm:$0xff]
    %v377 = vld [vmem:[#allocation5 + $0x8f0] sm:$0xff]
    %v378 = vld [vmem:[#allocation5 + $0x8f8] sm:$0xff]
    %v379 = vld [vmem:[#allocation5 + $0x900] sm:$0xff]
    %v380 = vld [vmem:[#allocation5 + $0x908] sm:$0xff]
    %v381 = vld [vmem:[#allocation5 + $0x910] sm:$0xff]
    %v382 = vld [vmem:[#allocation5 + $0x918] sm:$0xff]
    %v383 = vld [vmem:[#allocation5 + $0x920] sm:$0xff]
    %v384 = vld [vmem:[#allocation5 + $0x928] sm:$0xff]
    %v385 = vld [vmem:[#allocation5 + $0x930] sm:$0xff]
    %v386 = vld [vmem:[#allocation5 + $0x938] sm:$0xff]
    %v387 = vld [vmem:[#allocation5 + $0x940] sm:$0xff]
    %v388 = vld [vmem:[#allocation5 + $0x948] sm:$0xff]
    %v389 = vld [vmem:[#allocation5 + $0x950] sm:$0xff]
    %v390 = vld [vmem:[#allocation5 + $0x958] sm:$0xff]
    %v391 = vld [vmem:[#allocation5 + $0x960] sm:$0xff]
    %v392 = vld [vmem:[#allocation5 + $0x968] sm:$0xff]
    %v393 = vld [vmem:[#allocation5 + $0x970] sm:$0xff]
    %v394 = vld [vmem:[#allocation5 + $0x978] sm:$0xff]
    %v395 = vld [vmem:[#allocation5 + $0x980] sm:$0xff]
    %v396 = vld [vmem:[#allocation5 + $0x988] sm:$0xff]
    %v397 = vld [vmem:[#allocation5 + $0x990] sm:$0xff]
    %v398 = vld [vmem:[#allocation5 + $0x998] sm:$0xff]
    %v399 = vld [vmem:[#allocation5 + $0x9a0] sm:$0xff]
    %v400 = vld [vmem:[#allocation5 + $0x9a8] sm:$0xff]
    %v401 = vld [vmem:[#allocation5 + $0x9b0] sm:$0xff]
    %v402 = vld [vmem:[#allocation5 + $0x9b8] sm:$0xff]
    %v403 = vld [vmem:[#allocation5 + $0x9c0] sm:$0xff]
    %v404 = vld [vmem:[#allocation5 + $0x9c8] sm:$0xff]
    %v405 = vld [vmem:[#allocation5 + $0x9d0] sm:$0xff]
    %v406 = vld [vmem:[#allocation5 + $0x9d8] sm:$0xff]
    %v407 = vld [vmem:[#allocation5 + $0x9e0] sm:$0xff]
    %v408 = vld [vmem:[#allocation5 + $0x9e8] sm:$0xff]
    %v409 = vld [vmem:[#allocation5 + $0x9f0] sm:$0xff]
    %v410 = vld [vmem:[#allocation5 + $0x9f8] sm:$0xff]
    %v411 = vld [vmem:[#allocation5 + $0xa00] sm:$0xff]
    %v412 = vld [vmem:[#allocation5 + $0xa08] sm:$0xff]
    %v413 = vld [vmem:[#allocation5 + $0xa10] sm:$0xff]
    %v414 = vld [vmem:[#allocation5 + $0xa18] sm:$0xff]
    %v415 = vld [vmem:[#allocation5 + $0xa20] sm:$0xff]
    %v416 = vld [vmem:[#allocation5 + $0xa28] sm:$0xff]
    %v417 = vld [vmem:[#allocation5 + $0xa30] sm:$0xff]
    %v418 = vld [vmem:[#allocation5 + $0xa38] sm:$0xff]
    %v419 = vld [vmem:[#allocation5 + $0xa40] sm:$0xff]
    %v420 = vld [vmem:[#allocation5 + $0xa48] sm:$0xff]
    %v421 = vld [vmem:[#allocation5 + $0xa50] sm:$0xff]
    %v422 = vld [vmem:[#allocation5 + $0xa58] sm:$0xff]
    %v423 = vld [vmem:[#allocation5 + $0xa60] sm:$0xff]
    %v424 = vld [vmem:[#allocation5 + $0xa68] sm:$0xff]
    %v425 = vld [vmem:[#allocation5 + $0xa70] sm:$0xff]
    %v426 = vld [vmem:[#allocation5 + $0xa78] sm:$0xff]
    %v427 = vld [vmem:[#allocation5 + $0xa80] sm:$0xff]
    %v428 = vld [vmem:[#allocation5 + $0xa88] sm:$0xff]
    %v429 = vld [vmem:[#allocation5 + $0xa90] sm:$0xff]
    %v430 = vld [vmem:[#allocation5 + $0xa98] sm:$0xff]
    %v431 = vld [vmem:[#allocation5 + $0xaa0] sm:$0xff]
    %v432 = vld [vmem:[#allocation5 + $0xaa8] sm:$0xff]
    %v433 = vld [vmem:[#allocation5 + $0xab0] sm:$0xff]
    %v434 = vld [vmem:[#allocation5 + $0xab8] sm:$0xff]
    %v435 = vld [vmem:[#allocation5 + $0xac0] sm:$0xff]
    %v436 = vld [vmem:[#allocation5 + $0xac8] sm:$0xff]
    %v437 = vld [vmem:[#allocation5 + $0xad0] sm:$0xff]
    %v438 = vld [vmem:[#allocation5 + $0xad8] sm:$0xff]
    %v439 = vld [vmem:[#allocation5 + $0xae0] sm:$0xff]
    %v440 = vld [vmem:[#allocation5 + $0xae8] sm:$0xff]
    %v441 = vld [vmem:[#allocation5 + $0xaf0] sm:$0xff]
    %v442 = vld [vmem:[#allocation5 + $0xaf8] sm:$0xff]
    %v443 = vld [vmem:[#allocation5 + $0xb00] sm:$0xff]
    %v444 = vld [vmem:[#allocation5 + $0xb08] sm:$0xff]
    %v445 = vld [vmem:[#allocation5 + $0xb10] sm:$0xff]
    %v446 = vld [vmem:[#allocation5 + $0xb18] sm:$0xff]
    %v447 = vld [vmem:[#allocation5 + $0xb20] sm:$0xff]
    %v448 = vld [vmem:[#allocation5 + $0xb28] sm:$0xff]
    %v449 = vld [vmem:[#allocation5 + $0xb30] sm:$0xff]
    %v450 = vld [vmem:[#allocation5 + $0xb38] sm:$0xff]
    %v451 = vld [vmem:[#allocation5 + $0xb40] sm:$0xff]
    %v452 = vld [vmem:[#allocation5 + $0xb48] sm:$0xff]
    %v453 = vld [vmem:[#allocation5 + $0xb50] sm:$0xff]
    %v454 = vld [vmem:[#allocation5 + $0xb58] sm:$0xff]
    %v455 = vld [vmem:[#allocation5 + $0xb60] sm:$0xff]
    %v456 = vld [vmem:[#allocation5 + $0xb68] sm:$0xff]
    %v457 = vld [vmem:[#allocation5 + $0xb70] sm:$0xff]
    %v458 = vld [vmem:[#allocation5 + $0xb78] sm:$0xff]
    %v459 = vld [vmem:[#allocation5 + $0xb80] sm:$0xff]
    %v460 = vld [vmem:[#allocation5 + $0xb88] sm:$0xff]
    %v461 = vld [vmem:[#allocation5 + $0xb90] sm:$0xff]
    %v462 = vld [vmem:[#allocation5 + $0xb98] sm:$0xff]
    %v463 = vld [vmem:[#allocation5 + $0xba0] sm:$0xff]
    %v464 = vld [vmem:[#allocation5 + $0xba8] sm:$0xff]
    %v465 = vld [vmem:[#allocation5 + $0xbb0] sm:$0xff]
    %v466 = vld [vmem:[#allocation5 + $0xbb8] sm:$0xff]
    %v467 = vld [vmem:[#allocation5 + $0xbc0] sm:$0xff]
    %v468 = vld [vmem:[#allocation5 + $0xbc8] sm:$0xff]
    %v469 = vld [vmem:[#allocation5 + $0xbd0] sm:$0xff]
    %v470 = vld [vmem:[#allocation5 + $0xbd8] sm:$0xff]
    %v471 = vld [vmem:[#allocation5 + $0xbe0] sm:$0xff]
    %v472 = vld [vmem:[#allocation5 + $0xbe8] sm:$0xff]
    %v473 = vld [vmem:[#allocation5 + $0xbf0] sm:$0xff]
    %v474 = vld [vmem:[#allocation5 + $0xbf8] sm:$0xff]
    %v475 = vld [vmem:[#allocation5 + $0xc00] sm:$0xff]
    %v476 = vld [vmem:[#allocation5 + $0xc08] sm:$0xff]
    %v477 = vld [vmem:[#allocation5 + $0xc10] sm:$0xff]
    %v478 = vld [vmem:[#allocation5 + $0xc18] sm:$0xff]
    %v479 = vld [vmem:[#allocation5 + $0xc20] sm:$0xff]
    %v480 = vld [vmem:[#allocation5 + $0xc28] sm:$0xff]
    %v481 = vld [vmem:[#allocation5 + $0xc30] sm:$0xff]
    %v482 = vld [vmem:[#allocation5 + $0xc38] sm:$0xff]
    %v483 = vld [vmem:[#allocation5 + $0xc40] sm:$0xff]
    %v484 = vld [vmem:[#allocation5 + $0xc48] sm:$0xff]
    %v485 = vld [vmem:[#allocation5 + $0xc50] sm:$0xff]
    %v486 = vld [vmem:[#allocation5 + $0xc58] sm:$0xff]
    %v487 = vld [vmem:[#allocation5 + $0xc60] sm:$0xff]
    %v488 = vld [vmem:[#allocation5 + $0xc68] sm:$0xff]
    %v489 = vld [vmem:[#allocation5 + $0xc70] sm:$0xff]
    %v490 = vld [vmem:[#allocation5 + $0xc78] sm:$0xff]
    %v491 = vld [vmem:[#allocation5 + $0xc80] sm:$0xff]
    %v492 = vld [vmem:[#allocation5 + $0xc88] sm:$0xff]
    %v493 = vld [vmem:[#allocation5 + $0xc90] sm:$0xff]
    %v494 = vld [vmem:[#allocation5 + $0xc98] sm:$0xff]
    %v495 = vld [vmem:[#allocation5 + $0xca0] sm:$0xff]
    %v496 = vld [vmem:[#allocation5 + $0xca8] sm:$0xff]
    %v497 = vld [vmem:[#allocation5 + $0xcb0] sm:$0xff]
    %v498 = vld [vmem:[#allocation5 + $0xcb8] sm:$0xff]
    %v499 = vld [vmem:[#allocation5 + $0xcc0] sm:$0xff]
    %v500 = vld [vmem:[#allocation5 + $0xcc8] sm:$0xff]
    %v501 = vld [vmem:[#allocation5 + $0xcd0] sm:$0xff]
    %v502 = vld [vmem:[#allocation5 + $0xcd8] sm:$0xff]
    %v503 = vld [vmem:[#allocation5 + $0xce0] sm:$0xff]
    %v504 = vld [vmem:[#allocation5 + $0xce8] sm:$0xff]
    %v505 = vld [vmem:[#allocation5 + $0xcf0] sm:$0xff]
    %v506 = vld [vmem:[#allocation5 + $0xcf8] sm:$0xff]
    %v507 = vld [vmem:[#allocation5 + $0xd00] sm:$0xff]
    %v508 = vld [vmem:[#allocation5 + $0xd08] sm:$0xff]
    %v509 = vld [vmem:[#allocation5 + $0xd10] sm:$0xff]
    %v510 = vld [vmem:[#allocation5 + $0xd18] sm:$0xff]
    %v511 = vld [vmem:[#allocation5 + $0xd20] sm:$0xff]
    %v512 = vld [vmem:[#allocation5 + $0xd28] sm:$0xff]
    %v513 = vld [vmem:[#allocation5 + $0xd30] sm:$0xff]
    %v514 = vld [vmem:[#allocation5 + $0xd38] sm:$0xff]
    %v515 = vld [vmem:[#allocation5 + $0xd40] sm:$0xff]
    %v516 = vld [vmem:[#allocation5 + $0xd48] sm:$0xff]
    %v517 = vld [vmem:[#allocation5 + $0xd50] sm:$0xff]
    %v518 = vld [vmem:[#allocation5 + $0xd58] sm:$0xff]
    %v519 = vld [vmem:[#allocation5 + $0xd60] sm:$0xff]
    %v520 = vld [vmem:[#allocation5 + $0xd68] sm:$0xff]
    %v521 = vld [vmem:[#allocation5 + $0xd70] sm:$0xff]
    %v522 = vld [vmem:[#allocation5 + $0xd78] sm:$0xff]
    %v523 = vld [vmem:[#allocation5 + $0xd80] sm:$0xff]
    %v524 = vld [vmem:[#allocation5 + $0xd88] sm:$0xff]
    %v525 = vld [vmem:[#allocation5 + $0xd90] sm:$0xff]
    %v526 = vld [vmem:[#allocation5 + $0xd98] sm:$0xff]
    %v527 = vld [vmem:[#allocation5 + $0xda0] sm:$0xff]
    %v528 = vld [vmem:[#allocation5 + $0xda8] sm:$0xff]
    %v529 = vld [vmem:[#allocation5 + $0xdb0] sm:$0xff]
    %v530 = vld [vmem:[#allocation5 + $0xdb8] sm:$0xff]
    %v531 = vld [vmem:[#allocation5 + $0xdc0] sm:$0xff]
    %v532 = vld [vmem:[#allocation5 + $0xdc8] sm:$0xff]
    %v533 = vld [vmem:[#allocation5 + $0xdd0] sm:$0xff]
    %v534 = vld [vmem:[#allocation5 + $0xdd8] sm:$0xff]
    %v535 = vld [vmem:[#allocation5 + $0xde0] sm:$0xff]
    %v536 = vld [vmem:[#allocation5 + $0xde8] sm:$0xff]
    %v537 = vld [vmem:[#allocation5 + $0xdf0] sm:$0xff]
    %v538 = vld [vmem:[#allocation5 + $0xdf8] sm:$0xff]
    %v539 = vld [vmem:[#allocation5 + $0xe00] sm:$0xff]
    %v540 = vld [vmem:[#allocation5 + $0xe08] sm:$0xff]
    %v541 = vld [vmem:[#allocation5 + $0xe10] sm:$0xff]
    %v542 = vld [vmem:[#allocation5 + $0xe18] sm:$0xff]
    %v543 = vld [vmem:[#allocation5 + $0xe20] sm:$0xff]
    %v544 = vld [vmem:[#allocation5 + $0xe28] sm:$0xff]
    %v545 = vld [vmem:[#allocation5 + $0xe30] sm:$0xff]
    %v546 = vld [vmem:[#allocation5 + $0xe38] sm:$0xff]
    %v547 = vld [vmem:[#allocation5 + $0xe40] sm:$0xff]
    %v548 = vld [vmem:[#allocation5 + $0xe48] sm:$0xff]
    %v549 = vld [vmem:[#allocation5 + $0xe50] sm:$0xff]
    %v550 = vld [vmem:[#allocation5 + $0xe58] sm:$0xff]
    %v551 = vld [vmem:[#allocation5 + $0xe60] sm:$0xff]
    %v552 = vld [vmem:[#allocation5 + $0xe68] sm:$0xff]
    %v553 = vld [vmem:[#allocation5 + $0xe70] sm:$0xff]
    %v554 = vld [vmem:[#allocation5 + $0xe78] sm:$0xff]
    %v555 = vld [vmem:[#allocation5 + $0xe80] sm:$0xff]
    %v556 = vld [vmem:[#allocation5 + $0xe88] sm:$0xff]
    %v557 = vld [vmem:[#allocation5 + $0xe90] sm:$0xff]
    %v558 = vld [vmem:[#allocation5 + $0xe98] sm:$0xff]
    %v559 = vld [vmem:[#allocation5 + $0xea0] sm:$0xff]
    %v560 = vld [vmem:[#allocation5 + $0xea8] sm:$0xff]
    %v561 = vld [vmem:[#allocation5 + $0xeb0] sm:$0xff]
    %v562 = vld [vmem:[#allocation5 + $0xeb8] sm:$0xff]
    %v563 = vld [vmem:[#allocation5 + $0xec0] sm:$0xff]
    %v564 = vld [vmem:[#allocation5 + $0xec8] sm:$0xff]
    %v565 = vld [vmem:[#allocation5 + $0xed0] sm:$0xff]
    %v566 = vld [vmem:[#allocation5 + $0xed8] sm:$0xff]
    %v567 = vld [vmem:[#allocation5 + $0xee0] sm:$0xff]
    %v568 = vld [vmem:[#allocation5 + $0xee8] sm:$0xff]
    %v569 = vld [vmem:[#allocation5 + $0xef0] sm:$0xff]
    %v570 = vld [vmem:[#allocation5 + $0xef8] sm:$0xff]
    %v571 = vld [vmem:[#allocation5 + $0xf00] sm:$0xff]
    %v572 = vld [vmem:[#allocation5 + $0xf08] sm:$0xff]
    %v573 = vld [vmem:[#allocation5 + $0xf10] sm:$0xff]
    %v574 = vld [vmem:[#allocation5 + $0xf18] sm:$0xff]
    %v575 = vld [vmem:[#allocation5 + $0xf20] sm:$0xff]
    %v576 = vld [vmem:[#allocation5 + $0xf28] sm:$0xff]
    %v577 = vld [vmem:[#allocation5 + $0xf30] sm:$0xff]
    %v578 = vld [vmem:[#allocation5 + $0xf38] sm:$0xff]
    %v579 = vld [vmem:[#allocation5 + $0xf40] sm:$0xff]
    %v580 = vld [vmem:[#allocation5 + $0xf48] sm:$0xff]
    %v581 = vld [vmem:[#allocation5 + $0xf50] sm:$0xff]
    %v582 = vld [vmem:[#allocation5 + $0xf58] sm:$0xff]
    %v583 = vld [vmem:[#allocation5 + $0xf60] sm:$0xff]
    %v584 = vld [vmem:[#allocation5 + $0xf68] sm:$0xff]
    %v585 = vld [vmem:[#allocation5 + $0xf70] sm:$0xff]
    %v586 = vld [vmem:[#allocation5 + $0xf78] sm:$0xff]
    %v587 = vld [vmem:[#allocation5 + $0xf80] sm:$0xff]
    %v588 = vld [vmem:[#allocation5 + $0xf88] sm:$0xff]
    %v589 = vld [vmem:[#allocation5 + $0xf90] sm:$0xff]
    %v590 = vld [vmem:[#allocation5 + $0xf98] sm:$0xff]
    %v591 = vld [vmem:[#allocation5 + $0xfa0] sm:$0xff]
    %v592 = vld [vmem:[#allocation5 + $0xfa8] sm:$0xff]
    %v593 = vld [vmem:[#allocation5 + $0xfb0] sm:$0xff]
    %v594 = vld [vmem:[#allocation5 + $0xfb8] sm:$0xff]
    %v595 = vld [vmem:[#allocation5 + $0xfc0] sm:$0xff]
    %v596 = vld [vmem:[#allocation5 + $0xfc8] sm:$0xff]
    %v597 = vld [vmem:[#allocation5 + $0xfd0] sm:$0xff]
    %v598 = vld [vmem:[#allocation5 + $0xfd8] sm:$0xff]
    %v599 = vld [vmem:[#allocation5 + $0xfe0] sm:$0xff]
    %v600 = vld [vmem:[#allocation5 + $0xfe8] sm:$0xff]
    %v601 = vld [vmem:[#allocation5 + $0xff0] sm:$0xff]
    %v602 = vld [vmem:[#allocation5 + $0xff8] sm:$0xff]
    %v603 = vld [vmem:[#allocation5 + $0x1000] sm:$0xff]
    %v604 = vld [vmem:[#allocation5 + $0x1008] sm:$0xff]
    %v605 = vld [vmem:[#allocation5 + $0x1010] sm:$0xff]
    %v606 = vld [vmem:[#allocation5 + $0x1018] sm:$0xff]
    %v607 = vld [vmem:[#allocation5 + $0x1020] sm:$0xff]
    %v608 = vld [vmem:[#allocation5 + $0x1028] sm:$0xff]
    %v609 = vld [vmem:[#allocation5 + $0x1030] sm:$0xff]
    %v610 = vld [vmem:[#allocation5 + $0x1038] sm:$0xff]
    %v611 = vld [vmem:[#allocation5 + $0x1040] sm:$0xff]
    %v612 = vld [vmem:[#allocation5 + $0x1048] sm:$0xff]
    %v613 = vld [vmem:[#allocation5 + $0x1050] sm:$0xff]
    %v614 = vld [vmem:[#allocation5 + $0x1058] sm:$0xff]
    %v615 = vld [vmem:[#allocation5 + $0x1060] sm:$0xff]
    %v616 = vld [vmem:[#allocation5 + $0x1068] sm:$0xff]
    %v617 = vld [vmem:[#allocation5 + $0x1070] sm:$0xff]
    %v618 = vld [vmem:[#allocation5 + $0x1078] sm:$0xff]
    %v619 = vld [vmem:[#allocation5 + $0x1080] sm:$0xff]
    %v620 = vld [vmem:[#allocation5 + $0x1088] sm:$0xff]
    %v621 = vld [vmem:[#allocation5 + $0x1090] sm:$0xff]
    %v622 = vld [vmem:[#allocation5 + $0x1098] sm:$0xff]
    %v623 = vld [vmem:[#allocation5 + $0x10a0] sm:$0xff]
    %v624 = vld [vmem:[#allocation5 + $0x10a8] sm:$0xff]
    %v625 = vld [vmem:[#allocation5 + $0x10b0] sm:$0xff]
    %v626 = vld [vmem:[#allocation5 + $0x10b8] sm:$0xff]
    %v627 = vld [vmem:[#allocation5 + $0x10c0] sm:$0xff]
    %v628 = vld [vmem:[#allocation5 + $0x10c8] sm:$0xff]
    %v629 = vld [vmem:[#allocation5 + $0x10d0] sm:$0xff]
    %v630 = vld [vmem:[#allocation5 + $0x10d8] sm:$0xff]
    %v631 = vld [vmem:[#allocation5 + $0x10e0] sm:$0xff]
    %v632 = vld [vmem:[#allocation5 + $0x10e8] sm:$0xff]
    %v633 = vld [vmem:[#allocation5 + $0x10f0] sm:$0xff]
    %v634 = vld [vmem:[#allocation5 + $0x10f8] sm:$0xff]
    %v635 = vld [vmem:[#allocation5 + $0x1100] sm:$0xff]
    %v636 = vld [vmem:[#allocation5 + $0x1108] sm:$0xff]
    %v637 = vld [vmem:[#allocation5 + $0x1110] sm:$0xff]
    %v638 = vld [vmem:[#allocation5 + $0x1118] sm:$0xff]
    %v639 = vld [vmem:[#allocation5 + $0x1120] sm:$0xff]
    %v640 = vld [vmem:[#allocation5 + $0x1128] sm:$0xff]
    %v641 = vld [vmem:[#allocation5 + $0x1130] sm:$0xff]
    %v642 = vld [vmem:[#allocation5 + $0x1138] sm:$0xff]
    %v643 = vld [vmem:[#allocation5 + $0x1140] sm:$0xff]
    %v644 = vld [vmem:[#allocation5 + $0x1148] sm:$0xff]
    %v645 = vld [vmem:[#allocation5 + $0x1150] sm:$0xff]
    %v646 = vld [vmem:[#allocation5 + $0x1158] sm:$0xff]
    %v647 = vld [vmem:[#allocation5 + $0x1160] sm:$0xff]
    %v648 = vld [vmem:[#allocation5 + $0x1168] sm:$0xff]
    %v649 = vld [vmem:[#allocation5 + $0x1170] sm:$0xff]
    %v650 = vld [vmem:[#allocation5 + $0x1178] sm:$0xff]
    %v651 = vld [vmem:[#allocation5 + $0x1180] sm:$0xff]
    %v652 = vld [vmem:[#allocation5 + $0x1188] sm:$0xff]
    %v653 = vld [vmem:[#allocation5 + $0x1190] sm:$0xff]
    %v654 = vld [vmem:[#allocation5 + $0x1198] sm:$0xff]
    %v655 = vld [vmem:[#allocation5 + $0x11a0] sm:$0xff]
    %v656 = vld [vmem:[#allocation5 + $0x11a8] sm:$0xff]
    %v657 = vld [vmem:[#allocation5 + $0x11b0] sm:$0xff]
    %v658 = vld [vmem:[#allocation5 + $0x11b8] sm:$0xff]
    %v659 = vld [vmem:[#allocation5 + $0x11c0] sm:$0xff]
    %v660 = vld [vmem:[#allocation5 + $0x11c8] sm:$0xff]
    %v661 = vld [vmem:[#allocation5 + $0x11d0] sm:$0xff]
    %v662 = vld [vmem:[#allocation5 + $0x11d8] sm:$0xff]
    %v663 = vld [vmem:[#allocation5 + $0x11e0] sm:$0xff]
    %v664 = vld [vmem:[#allocation5 + $0x11e8] sm:$0xff]
    %v665 = vld [vmem:[#allocation5 + $0x11f0] sm:$0xff]
    %v666 = vld [vmem:[#allocation5 + $0x11f8] sm:$0xff]
    %v667 = vld [vmem:[#allocation5 + $0x1200] sm:$0xff]
    %v668 = vld [vmem:[#allocation5 + $0x1208] sm:$0xff]
    %v669 = vld [vmem:[#allocation5 + $0x1210] sm:$0xff]
    %v670 = vld [vmem:[#allocation5 + $0x1218] sm:$0xff]
    %v671 = vld [vmem:[#allocation5 + $0x1220] sm:$0xff]
    %v672 = vld [vmem:[#allocation5 + $0x1228] sm:$0xff]
    %v673 = vld [vmem:[#allocation5 + $0x1230] sm:$0xff]
    %v674 = vld [vmem:[#allocation5 + $0x1238] sm:$0xff]
    %v675 = vld [vmem:[#allocation5 + $0x1240] sm:$0xff]
    %v676 = vld [vmem:[#allocation5 + $0x1248] sm:$0xff]
    %v677 = vld [vmem:[#allocation5 + $0x1250] sm:$0xff]
    %v678 = vld [vmem:[#allocation5 + $0x1258] sm:$0xff]
    %v679 = vld [vmem:[#allocation5 + $0x1260] sm:$0xff]
    %v680 = vld [vmem:[#allocation5 + $0x1268] sm:$0xff]
    %v681 = vld [vmem:[#allocation5 + $0x1270] sm:$0xff]
    %v682 = vld [vmem:[#allocation5 + $0x1278] sm:$0xff]
    %v683 = vld [vmem:[#allocation5 + $0x1280] sm:$0xff]
    %v684 = vld [vmem:[#allocation5 + $0x1288] sm:$0xff]
    %v685 = vld [vmem:[#allocation5 + $0x1290] sm:$0xff]
    %v686 = vld [vmem:[#allocation5 + $0x1298] sm:$0xff]
    %v687 = vld [vmem:[#allocation5 + $0x12a0] sm:$0xff]
    %v688 = vld [vmem:[#allocation5 + $0x12a8] sm:$0xff]
    %v689 = vld [vmem:[#allocation5 + $0x12b0] sm:$0xff]
    %v690 = vld [vmem:[#allocation5 + $0x12b8] sm:$0xff]
    %v691 = vld [vmem:[#allocation5 + $0x12c0] sm:$0xff]
    %v692 = vld [vmem:[#allocation5 + $0x12c8] sm:$0xff]
    %v693 = vld [vmem:[#allocation5 + $0x12d0] sm:$0xff]
    %v694 = vld [vmem:[#allocation5 + $0x12d8] sm:$0xff]
    %v695 = vld [vmem:[#allocation5 + $0x12e0] sm:$0xff]
    %v696 = vld [vmem:[#allocation5 + $0x12e8] sm:$0xff]
    %v697 = vld [vmem:[#allocation5 + $0x12f0] sm:$0xff]
    %v698 = vld [vmem:[#allocation5 + $0x12f8] sm:$0xff]
    %v699 = vld [vmem:[#allocation5 + $0x1300] sm:$0xff]
    %v700 = vld [vmem:[#allocation5 + $0x1308] sm:$0xff]
    %v701 = vld [vmem:[#allocation5 + $0x1310] sm:$0xff]
    %v702 = vld [vmem:[#allocation5 + $0x1318] sm:$0xff]
    %v703 = vld [vmem:[#allocation5 + $0x1320] sm:$0xff]
    %v704 = vld [vmem:[#allocation5 + $0x1328] sm:$0xff]
    %v705 = vld [vmem:[#allocation5 + $0x1330] sm:$0xff]
    %v706 = vld [vmem:[#allocation5 + $0x1338] sm:$0xff]
    %v707 = vld [vmem:[#allocation5 + $0x1340] sm:$0xff]
    %v708 = vld [vmem:[#allocation5 + $0x1348] sm:$0xff]
    %v709 = vld [vmem:[#allocation5 + $0x1350] sm:$0xff]
    %v710 = vld [vmem:[#allocation5 + $0x1358] sm:$0xff]
    %v711 = vld [vmem:[#allocation5 + $0x1360] sm:$0xff]
    %v712 = vld [vmem:[#allocation5 + $0x1368] sm:$0xff]
    %v713 = vld [vmem:[#allocation5 + $0x1370] sm:$0xff]
    %v714 = vld [vmem:[#allocation5 + $0x1378] sm:$0xff]
    %v715 = vld [vmem:[#allocation5 + $0x1380] sm:$0xff]
    %v716 = vld [vmem:[#allocation5 + $0x1388] sm:$0xff]
    %v717 = vld [vmem:[#allocation5 + $0x1390] sm:$0xff]
    %v718 = vld [vmem:[#allocation5 + $0x1398] sm:$0xff]
    %v719 = vld [vmem:[#allocation5 + $0x13a0] sm:$0xff]
    %v720 = vld [vmem:[#allocation5 + $0x13a8] sm:$0xff]
    %v721 = vld [vmem:[#allocation5 + $0x13b0] sm:$0xff]
    %v722 = vld [vmem:[#allocation5 + $0x13b8] sm:$0xff]
    %v723 = vld [vmem:[#allocation5 + $0x13c0] sm:$0xff]
    %v724 = vld [vmem:[#allocation5 + $0x13c8] sm:$0xff]
    %v725 = vld [vmem:[#allocation5 + $0x13d0] sm:$0xff]
    %v726 = vld [vmem:[#allocation5 + $0x13d8] sm:$0xff]
    %v727 = vld [vmem:[#allocation5 + $0x13e0] sm:$0xff]
    %v728 = vld [vmem:[#allocation5 + $0x13e8] sm:$0xff]
    %v729 = vld [vmem:[#allocation5 + $0x13f0] sm:$0xff]
    %v730 = vld [vmem:[#allocation5 + $0x13f8] sm:$0xff]
    %v731 = vld [vmem:[#allocation5 + $0x1400] sm:$0xff]
    %v732 = vld [vmem:[#allocation5 + $0x1408] sm:$0xff]
    %v733 = vld [vmem:[#allocation5 + $0x1410] sm:$0xff]
    %v734 = vld [vmem:[#allocation5 + $0x1418] sm:$0xff]
    %v735 = vld [vmem:[#allocation5 + $0x1420] sm:$0xff]
    %v736 = vld [vmem:[#allocation5 + $0x1428] sm:$0xff]
    %v737 = vld [vmem:[#allocation5 + $0x1430] sm:$0xff]
    %v738 = vld [vmem:[#allocation5 + $0x1438] sm:$0xff]
    %v739 = vld [vmem:[#allocation5 + $0x1440] sm:$0xff]
    %v740 = vld [vmem:[#allocation5 + $0x1448] sm:$0xff]
    %v741 = vld [vmem:[#allocation5 + $0x1450] sm:$0xff]
    %v742 = vld [vmem:[#allocation5 + $0x1458] sm:$0xff]
    %v743 = vld [vmem:[#allocation5 + $0x1460] sm:$0xff]
    %v744 = vld [vmem:[#allocation5 + $0x1468] sm:$0xff]
    %v745 = vld [vmem:[#allocation5 + $0x1470] sm:$0xff]
    %v746 = vld [vmem:[#allocation5 + $0x1478] sm:$0xff]
    %v747 = vld [vmem:[#allocation5 + $0x1480] sm:$0xff]
    %v748 = vld [vmem:[#allocation5 + $0x1488] sm:$0xff]
    %v749 = vld [vmem:[#allocation5 + $0x1490] sm:$0xff]
    %v750 = vld [vmem:[#allocation5 + $0x1498] sm:$0xff]
    %v751 = vld [vmem:[#allocation5 + $0x14a0] sm:$0xff]
    %v752 = vld [vmem:[#allocation5 + $0x14a8] sm:$0xff]
    %v753 = vld [vmem:[#allocation5 + $0x14b0] sm:$0xff]
    %v754 = vld [vmem:[#allocation5 + $0x14b8] sm:$0xff]
    %v755 = vld [vmem:[#allocation5 + $0x14c0] sm:$0xff]
    %v756 = vld [vmem:[#allocation5 + $0x14c8] sm:$0xff]
    %v757 = vld [vmem:[#allocation5 + $0x14d0] sm:$0xff]
    %v758 = vld [vmem:[#allocation5 + $0x14d8] sm:$0xff]
    %v759 = vld [vmem:[#allocation5 + $0x14e0] sm:$0xff]
    %v760 = vld [vmem:[#allocation5 + $0x14e8] sm:$0xff]
    %v761 = vld [vmem:[#allocation5 + $0x14f0] sm:$0xff]
    %v762 = vld [vmem:[#allocation5 + $0x14f8] sm:$0xff]
    %v763 = vld [vmem:[#allocation5 + $0x1500] sm:$0xff]
    %v764 = vld [vmem:[#allocation5 + $0x1508] sm:$0xff]
    %v765 = vld [vmem:[#allocation5 + $0x1510] sm:$0xff]
    %v766 = vld [vmem:[#allocation5 + $0x1518] sm:$0xff]
    %v767 = vld [vmem:[#allocation5 + $0x1520] sm:$0xff]
    %v768 = vld [vmem:[#allocation5 + $0x1528] sm:$0xff]
    %v769 = vld [vmem:[#allocation5 + $0x1530] sm:$0xff]
    %v770 = vld [vmem:[#allocation5 + $0x1538] sm:$0xff]
    %v771 = vld [vmem:[#allocation5 + $0x1540] sm:$0xff]
    %v772 = vld [vmem:[#allocation5 + $0x1548] sm:$0xff]
    %v773 = vld [vmem:[#allocation5 + $0x1550] sm:$0xff]
    %v774 = vld [vmem:[#allocation5 + $0x1558] sm:$0xff]
    %v775 = vld [vmem:[#allocation5 + $0x1560] sm:$0xff]
    %v776 = vld [vmem:[#allocation5 + $0x1568] sm:$0xff]
    %v777 = vld [vmem:[#allocation5 + $0x1570] sm:$0xff]
    %v778 = vld [vmem:[#allocation5 + $0x1578] sm:$0xff]
    %v779 = vld [vmem:[#allocation5 + $0x1580] sm:$0xff]
    %v780 = vld [vmem:[#allocation5 + $0x1588] sm:$0xff]
    %v781 = vld [vmem:[#allocation5 + $0x1590] sm:$0xff]
    %v782 = vld [vmem:[#allocation5 + $0x1598] sm:$0xff]
    %v783 = vld [vmem:[#allocation5 + $0x15a0] sm:$0xff]
    %v784 = vld [vmem:[#allocation5 + $0x15a8] sm:$0xff]
    %v785 = vld [vmem:[#allocation5 + $0x15b0] sm:$0xff]
    %v786 = vld [vmem:[#allocation5 + $0x15b8] sm:$0xff]
    %v787 = vld [vmem:[#allocation5 + $0x15c0] sm:$0xff]
    %v788 = vld [vmem:[#allocation5 + $0x15c8] sm:$0xff]
    %v789 = vld [vmem:[#allocation5 + $0x15d0] sm:$0xff]
    %v790 = vld [vmem:[#allocation5 + $0x15d8] sm:$0xff]
    %v791 = vld [vmem:[#allocation5 + $0x15e0] sm:$0xff]
    %v792 = vld [vmem:[#allocation5 + $0x15e8] sm:$0xff]
    %v793 = vld [vmem:[#allocation5 + $0x15f0] sm:$0xff]
    %v794 = vld [vmem:[#allocation5 + $0x15f8] sm:$0xff]
    %v795 = vld [vmem:[#allocation5 + $0x1600] sm:$0xff]
    %v796 = vld [vmem:[#allocation5 + $0x1608] sm:$0xff]
    %v797 = vld [vmem:[#allocation5 + $0x1610] sm:$0xff]
    %v798 = vld [vmem:[#allocation5 + $0x1618] sm:$0xff]
    %v799 = vld [vmem:[#allocation5 + $0x1620] sm:$0xff]
    %v800 = vld [vmem:[#allocation5 + $0x1628] sm:$0xff]
    %v801 = vld [vmem:[#allocation5 + $0x1630] sm:$0xff]
    %v802 = vld [vmem:[#allocation5 + $0x1638] sm:$0xff]
    %v803 = vld [vmem:[#allocation5 + $0x1640] sm:$0xff]
    %v804 = vld [vmem:[#allocation5 + $0x1648] sm:$0xff]
    %v805 = vld [vmem:[#allocation5 + $0x1650] sm:$0xff]
    %v806 = vld [vmem:[#allocation5 + $0x1658] sm:$0xff]
    %v807 = vld [vmem:[#allocation5 + $0x1660] sm:$0xff]
    %v808 = vld [vmem:[#allocation5 + $0x1668] sm:$0xff]
    %v809 = vld [vmem:[#allocation5 + $0x1670] sm:$0xff]
    %v810 = vld [vmem:[#allocation5 + $0x1678] sm:$0xff]
    %v811 = vld [vmem:[#allocation5 + $0x1680] sm:$0xff]
    %v812 = vld [vmem:[#allocation5 + $0x1688] sm:$0xff]
    %v813 = vld [vmem:[#allocation5 + $0x1690] sm:$0xff]
    %v814 = vld [vmem:[#allocation5 + $0x1698] sm:$0xff]
    %v815 = vld [vmem:[#allocation5 + $0x16a0] sm:$0xff]
    %v816 = vld [vmem:[#allocation5 + $0x16a8] sm:$0xff]
    %v817 = vld [vmem:[#allocation5 + $0x16b0] sm:$0xff]
    %v818 = vld [vmem:[#allocation5 + $0x16b8] sm:$0xff]
    %v819 = vld [vmem:[#allocation5 + $0x16c0] sm:$0xff]
    %v820 = vld [vmem:[#allocation5 + $0x16c8] sm:$0xff]
    %v821 = vld [vmem:[#allocation5 + $0x16d0] sm:$0xff]
    %v822 = vld [vmem:[#allocation5 + $0x16d8] sm:$0xff]
    %v823 = vld [vmem:[#allocation5 + $0x16e0] sm:$0xff]
    %v824 = vld [vmem:[#allocation5 + $0x16e8] sm:$0xff]
    %v825 = vld [vmem:[#allocation5 + $0x16f0] sm:$0xff]
    %v826 = vld [vmem:[#allocation5 + $0x16f8] sm:$0xff]
    %v827 = vld [vmem:[#allocation5 + $0x1700] sm:$0xff]
    %v828 = vld [vmem:[#allocation5 + $0x1708] sm:$0xff]
    %v829 = vld [vmem:[#allocation5 + $0x1710] sm:$0xff]
    %v830 = vld [vmem:[#allocation5 + $0x1718] sm:$0xff]
    %v831 = vld [vmem:[#allocation5 + $0x1720] sm:$0xff]
    %v832 = vld [vmem:[#allocation5 + $0x1728] sm:$0xff]
    %v833 = vld [vmem:[#allocation5 + $0x1730] sm:$0xff]
    %v834 = vld [vmem:[#allocation5 + $0x1738] sm:$0xff]
    %v835 = vld [vmem:[#allocation5 + $0x1740] sm:$0xff]
    %v836 = vld [vmem:[#allocation5 + $0x1748] sm:$0xff]
    %v837 = vld [vmem:[#allocation5 + $0x1750] sm:$0xff]
    %v838 = vld [vmem:[#allocation5 + $0x1758] sm:$0xff]
    %v839 = vld [vmem:[#allocation5 + $0x1760] sm:$0xff]
    %v840 = vld [vmem:[#allocation5 + $0x1768] sm:$0xff]
    %v841 = vld [vmem:[#allocation5 + $0x1770] sm:$0xff]
    %v842 = vld [vmem:[#allocation5 + $0x1778] sm:$0xff]
    %v843 = vld [vmem:[#allocation5 + $0x1780] sm:$0xff]
    %v844 = vld [vmem:[#allocation5 + $0x1788] sm:$0xff]
    %v845 = vld [vmem:[#allocation5 + $0x1790] sm:$0xff]
    %v846 = vld [vmem:[#allocation5 + $0x1798] sm:$0xff]
    %v847 = vld [vmem:[#allocation5 + $0x17a0] sm:$0xff]
    %v848 = vld [vmem:[#allocation5 + $0x17a8] sm:$0xff]
    %v849 = vld [vmem:[#allocation5 + $0x17b0] sm:$0xff]
    %v850 = vld [vmem:[#allocation5 + $0x17b8] sm:$0xff]
    %v851 = vld [vmem:[#allocation5 + $0x17c0] sm:$0xff]
    %v852 = vld [vmem:[#allocation5 + $0x17c8] sm:$0xff]
    %v853 = vld [vmem:[#allocation5 + $0x17d0] sm:$0xff]
    %v854 = vld [vmem:[#allocation5 + $0x17d8] sm:$0xff]
    %v855 = vld [vmem:[#allocation5 + $0x17e0] sm:$0xff]
    %v856 = vld [vmem:[#allocation5 + $0x17e8] sm:$0xff]
    %v857 = vld [vmem:[#allocation5 + $0x17f0] sm:$0xff]
    %v858 = vld [vmem:[#allocation5 + $0x17f8] sm:$0xff]
    %v859 = vld [vmem:[#allocation5 + $0x1800] sm:$0xff]
    %v860 = vld [vmem:[#allocation5 + $0x1808] sm:$0xff]
    %v861 = vld [vmem:[#allocation5 + $0x1810] sm:$0xff]
    %v862 = vld [vmem:[#allocation5 + $0x1818] sm:$0xff]
    %v863 = vld [vmem:[#allocation5 + $0x1820] sm:$0xff]
    %v864 = vld [vmem:[#allocation5 + $0x1828] sm:$0xff]
    %v865 = vld [vmem:[#allocation5 + $0x1830] sm:$0xff]
    %v866 = vld [vmem:[#allocation5 + $0x1838] sm:$0xff]
    %v867 = vld [vmem:[#allocation5 + $0x1840] sm:$0xff]
    %v868 = vld [vmem:[#allocation5 + $0x1848] sm:$0xff]
    %v869 = vld [vmem:[#allocation5 + $0x1850] sm:$0xff]
    %v870 = vld [vmem:[#allocation5 + $0x1858] sm:$0xff]
    %v871 = vld [vmem:[#allocation5 + $0x1860] sm:$0xff]
    %v872 = vld [vmem:[#allocation5 + $0x1868] sm:$0xff]
    %v873 = vld [vmem:[#allocation5 + $0x1870] sm:$0xff]
    %v874 = vld [vmem:[#allocation5 + $0x1878] sm:$0xff]
    %v875 = vld [vmem:[#allocation5 + $0x1880] sm:$0xff]
    %v876 = vld [vmem:[#allocation5 + $0x1888] sm:$0xff]
    %v877 = vld [vmem:[#allocation5 + $0x1890] sm:$0xff]
    %v878 = vld [vmem:[#allocation5 + $0x1898] sm:$0xff]
    %v879 = vld [vmem:[#allocation5 + $0x18a0] sm:$0xff]
    %v880 = vld [vmem:[#allocation5 + $0x18a8] sm:$0xff]
    %v881 = vld [vmem:[#allocation5 + $0x18b0] sm:$0xff]
    %v882 = vld [vmem:[#allocation5 + $0x18b8] sm:$0xff]
    %v883 = vld [vmem:[#allocation5 + $0x18c0] sm:$0xff]
    %v884 = vld [vmem:[#allocation5 + $0x18c8] sm:$0xff]
    %v885 = vld [vmem:[#allocation5 + $0x18d0] sm:$0xff]
    %v886 = vld [vmem:[#allocation5 + $0x18d8] sm:$0xff]
    %v887 = vld [vmem:[#allocation5 + $0x18e0] sm:$0xff]
    %v888 = vld [vmem:[#allocation5 + $0x18e8] sm:$0xff]
    %v889 = vld [vmem:[#allocation5 + $0x18f0] sm:$0xff]
    %v890 = vld [vmem:[#allocation5 + $0x18f8] sm:$0xff]
    %v891 = vld [vmem:[#allocation5 + $0x1900] sm:$0xff]
    %v892 = vld [vmem:[#allocation5 + $0x1908] sm:$0xff]
    %v893 = vld [vmem:[#allocation5 + $0x1910] sm:$0xff]
    %v894 = vld [vmem:[#allocation5 + $0x1918] sm:$0xff]
    %v895 = vld [vmem:[#allocation5 + $0x1920] sm:$0xff]
    %v896 = vld [vmem:[#allocation5 + $0x1928] sm:$0xff]
    %v897 = vld [vmem:[#allocation5 + $0x1930] sm:$0xff]
    %v898 = vld [vmem:[#allocation5 + $0x1938] sm:$0xff]
    %v899 = vld [vmem:[#allocation5 + $0x1940] sm:$0xff]
    %v900 = vld [vmem:[#allocation5 + $0x1948] sm:$0xff]
    %v901 = vld [vmem:[#allocation5 + $0x1950] sm:$0xff]
    %v902 = vld [vmem:[#allocation5 + $0x1958] sm:$0xff]
    %v903 = vld [vmem:[#allocation5 + $0x1960] sm:$0xff]
    %v904 = vld [vmem:[#allocation5 + $0x1968] sm:$0xff]
    %v905 = vld [vmem:[#allocation5 + $0x1970] sm:$0xff]
    %v906 = vld [vmem:[#allocation5 + $0x1978] sm:$0xff]
    %v907 = vld [vmem:[#allocation5 + $0x1980] sm:$0xff]
    %v908 = vld [vmem:[#allocation5 + $0x1988] sm:$0xff]
    %v909 = vld [vmem:[#allocation5 + $0x1990] sm:$0xff]
    %v910 = vld [vmem:[#allocation5 + $0x1998] sm:$0xff]
    %v911 = vld [vmem:[#allocation5 + $0x19a0] sm:$0xff]
    %v912 = vld [vmem:[#allocation5 + $0x19a8] sm:$0xff]
    %v913 = vld [vmem:[#allocation5 + $0x19b0] sm:$0xff]
    %v914 = vld [vmem:[#allocation5 + $0x19b8] sm:$0xff]
    %v915 = vld [vmem:[#allocation5 + $0x19c0] sm:$0xff]
    %v916 = vld [vmem:[#allocation5 + $0x19c8] sm:$0xff]
    %v917 = vld [vmem:[#allocation5 + $0x19d0] sm:$0xff]
    %v918 = vld [vmem:[#allocation5 + $0x19d8] sm:$0xff]
    %v919 = vld [vmem:[#allocation5 + $0x19e0] sm:$0xff]
    %v920 = vld [vmem:[#allocation5 + $0x19e8] sm:$0xff]
    %v921 = vld [vmem:[#allocation5 + $0x19f0] sm:$0xff]
    %v922 = vld [vmem:[#allocation5 + $0x19f8] sm:$0xff]
    %v923 = vld [vmem:[#allocation5 + $0x1a00] sm:$0xff]
    %v924 = vld [vmem:[#allocation5 + $0x1a08] sm:$0xff]
    %v925 = vld [vmem:[#allocation5 + $0x1a10] sm:$0xff]
    %v926 = vld [vmem:[#allocation5 + $0x1a18] sm:$0xff]
    %v927 = vld [vmem:[#allocation5 + $0x1a20] sm:$0xff]
    %v928 = vld [vmem:[#allocation5 + $0x1a28] sm:$0xff]
    %v929 = vld [vmem:[#allocation5 + $0x1a30] sm:$0xff]
    %v930 = vld [vmem:[#allocation5 + $0x1a38] sm:$0xff]
    %v931 = vld [vmem:[#allocation5 + $0x1a40] sm:$0xff]
    %v932 = vld [vmem:[#allocation5 + $0x1a48] sm:$0xff]
    %v933 = vld [vmem:[#allocation5 + $0x1a50] sm:$0xff]
    %v934 = vld [vmem:[#allocation5 + $0x1a58] sm:$0xff]
    %v935 = vld [vmem:[#allocation5 + $0x1a60] sm:$0xff]
    %v936 = vld [vmem:[#allocation5 + $0x1a68] sm:$0xff]
    %v937 = vld [vmem:[#allocation5 + $0x1a70] sm:$0xff]
    %v938 = vld [vmem:[#allocation5 + $0x1a78] sm:$0xff]
    %v939 = vld [vmem:[#allocation5 + $0x1a80] sm:$0xff]
    %v940 = vld [vmem:[#allocation5 + $0x1a88] sm:$0xff]
    %v941 = vld [vmem:[#allocation5 + $0x1a90] sm:$0xff]
    %v942 = vld [vmem:[#allocation5 + $0x1a98] sm:$0xff]
    %v943 = vld [vmem:[#allocation5 + $0x1aa0] sm:$0xff]
    %v944 = vld [vmem:[#allocation5 + $0x1aa8] sm:$0xff]
    %v945 = vld [vmem:[#allocation5 + $0x1ab0] sm:$0xff]
    %v946 = vld [vmem:[#allocation5 + $0x1ab8] sm:$0xff]
    %v947 = vld [vmem:[#allocation5 + $0x1ac0] sm:$0xff]
    %v948 = vld [vmem:[#allocation5 + $0x1ac8] sm:$0xff]
    %v949 = vld [vmem:[#allocation5 + $0x1ad0] sm:$0xff]
    %v950 = vld [vmem:[#allocation5 + $0x1ad8] sm:$0xff]
    %v951 = vld [vmem:[#allocation5 + $0x1ae0] sm:$0xff]
    %v952 = vld [vmem:[#allocation5 + $0x1ae8] sm:$0xff]
    %v953 = vld [vmem:[#allocation5 + $0x1af0] sm:$0xff]
    %v954 = vld [vmem:[#allocation5 + $0x1af8] sm:$0xff]
    %v955 = vld [vmem:[#allocation5 + $0x1b00] sm:$0xff]
    %v956 = vld [vmem:[#allocation5 + $0x1b08] sm:$0xff]
    %v957 = vld [vmem:[#allocation5 + $0x1b10] sm:$0xff]
    %v958 = vld [vmem:[#allocation5 + $0x1b18] sm:$0xff]
    %v959 = vld [vmem:[#allocation5 + $0x1b20] sm:$0xff]
    %v960 = vld [vmem:[#allocation5 + $0x1b28] sm:$0xff]
    %v961 = vld [vmem:[#allocation5 + $0x1b30] sm:$0xff]
    %v962 = vld [vmem:[#allocation5 + $0x1b38] sm:$0xff]
    %v963 = vld [vmem:[#allocation5 + $0x1b40] sm:$0xff]
    %v964 = vld [vmem:[#allocation5 + $0x1b48] sm:$0xff]
    %v965 = vld [vmem:[#allocation5 + $0x1b50] sm:$0xff]
    %v966 = vld [vmem:[#allocation5 + $0x1b58] sm:$0xff]
    %v967 = vld [vmem:[#allocation5 + $0x1b60] sm:$0xff]
    %v968 = vld [vmem:[#allocation5 + $0x1b68] sm:$0xff]
    %v969 = vld [vmem:[#allocation5 + $0x1b70] sm:$0xff]
    %v970 = vld [vmem:[#allocation5 + $0x1b78] sm:$0xff]
    %v971 = vld [vmem:[#allocation5 + $0x1b80] sm:$0xff]
    %v972 = vld [vmem:[#allocation5 + $0x1b88] sm:$0xff]
    %v973 = vld [vmem:[#allocation5 + $0x1b90] sm:$0xff]
    %v974 = vld [vmem:[#allocation5 + $0x1b98] sm:$0xff]
    %v975 = vld [vmem:[#allocation5 + $0x1ba0] sm:$0xff]
    %v976 = vld [vmem:[#allocation5 + $0x1ba8] sm:$0xff]
    %v977 = vld [vmem:[#allocation5 + $0x1bb0] sm:$0xff]
    %v978 = vld [vmem:[#allocation5 + $0x1bb8] sm:$0xff]
    %v979 = vld [vmem:[#allocation5 + $0x1bc0] sm:$0xff]
    %v980 = vld [vmem:[#allocation5 + $0x1bc8] sm:$0xff]
    %v981 = vld [vmem:[#allocation5 + $0x1bd0] sm:$0xff]
    %v982 = vld [vmem:[#allocation5 + $0x1bd8] sm:$0xff]
    %v983 = vld [vmem:[#allocation5 + $0x1be0] sm:$0xff]
    %v984 = vld [vmem:[#allocation5 + $0x1be8] sm:$0xff]
    %v985 = vld [vmem:[#allocation5 + $0x1bf0] sm:$0xff]
    %v986 = vld [vmem:[#allocation5 + $0x1bf8] sm:$0xff]
    %v987 = vld [vmem:[#allocation5 + $0x1c00] sm:$0xff]
    %v988 = vld [vmem:[#allocation5 + $0x1c08] sm:$0xff]
    %v989 = vld [vmem:[#allocation5 + $0x1c10] sm:$0xff]
    %v990 = vld [vmem:[#allocation5 + $0x1c18] sm:$0xff]
    %v991 = vld [vmem:[#allocation5 + $0x1c20] sm:$0xff]
    %v992 = vld [vmem:[#allocation5 + $0x1c28] sm:$0xff]
    %v993 = vld [vmem:[#allocation5 + $0x1c30] sm:$0xff]
    %v994 = vld [vmem:[#allocation5 + $0x1c38] sm:$0xff]
    %v995 = vld [vmem:[#allocation5 + $0x1c40] sm:$0xff]
    %v996 = vld [vmem:[#allocation5 + $0x1c48] sm:$0xff]
    %v997 = vld [vmem:[#allocation5 + $0x1c50] sm:$0xff]
    %v998 = vld [vmem:[#allocation5 + $0x1c58] sm:$0xff]
    %v999 = vld [vmem:[#allocation5 + $0x1c60] sm:$0xff]
    %v1000 = vld [vmem:[#allocation5 + $0x1c68] sm:$0xff]
    %v1001 = vld [vmem:[#allocation5 + $0x1c70] sm:$0xff]
    %v1002 = vld [vmem:[#allocation5 + $0x1c78] sm:$0xff]
    %v1003 = vld [vmem:[#allocation5 + $0x1c80] sm:$0xff]
    %v1004 = vld [vmem:[#allocation5 + $0x1c88] sm:$0xff]
    %v1005 = vld [vmem:[#allocation5 + $0x1c90] sm:$0xff]
    %v1006 = vld [vmem:[#allocation5 + $0x1c98] sm:$0xff]
    %v1007 = vld [vmem:[#allocation5 + $0x1ca0] sm:$0xff]
    %v1008 = vld [vmem:[#allocation5 + $0x1ca8] sm:$0xff]
    %v1009 = vld [vmem:[#allocation5 + $0x1cb0] sm:$0xff]
    %v1010 = vld [vmem:[#allocation5 + $0x1cb8] sm:$0xff]
    %v1011 = vld [vmem:[#allocation5 + $0x1cc0] sm:$0xff]
    %v1012 = vld [vmem:[#allocation5 + $0x1cc8] sm:$0xff]
    %v1013 = vld [vmem:[#allocation5 + $0x1cd0] sm:$0xff]
    %v1014 = vld [vmem:[#allocation5 + $0x1cd8] sm:$0xff]
    %v1015 = vld [vmem:[#allocation5 + $0x1ce0] sm:$0xff]
    %v1016 = vld [vmem:[#allocation5 + $0x1ce8] sm:$0xff]
    %v1017 = vld [vmem:[#allocation5 + $0x1cf0] sm:$0xff]
    %v1018 = vld [vmem:[#allocation5 + $0x1cf8] sm:$0xff]
    %v1019 = vld [vmem:[#allocation5 + $0x1d00] sm:$0xff]
    %v1020 = vld [vmem:[#allocation5 + $0x1d08] sm:$0xff]
    %v1021 = vld [vmem:[#allocation5 + $0x1d10] sm:$0xff]
    %v1022 = vld [vmem:[#allocation5 + $0x1d18] sm:$0xff]
    %v1023 = vld [vmem:[#allocation5 + $0x1d20] sm:$0xff]
    %v1024 = vld [vmem:[#allocation5 + $0x1d28] sm:$0xff]
    %v1025 = vld [vmem:[#allocation5 + $0x1d30] sm:$0xff]
    %v1026 = vld [vmem:[#allocation5 + $0x1d38] sm:$0xff]
    %v1027 = vld [vmem:[#allocation5 + $0x1d40] sm:$0xff]
    %v1028 = vld [vmem:[#allocation5 + $0x1d48] sm:$0xff]
    %v1029 = vld [vmem:[#allocation5 + $0x1d50] sm:$0xff]
    %v1030 = vld [vmem:[#allocation5 + $0x1d58] sm:$0xff]
    %v1031 = vld [vmem:[#allocation5 + $0x1d60] sm:$0xff]
    %v1032 = vld [vmem:[#allocation5 + $0x1d68] sm:$0xff]
    %v1033 = vld [vmem:[#allocation5 + $0x1d70] sm:$0xff]
    %v1034 = vld [vmem:[#allocation5 + $0x1d78] sm:$0xff]
    %v1035 = vld [vmem:[#allocation5 + $0x1d80] sm:$0xff]
    %v1036 = vld [vmem:[#allocation5 + $0x1d88] sm:$0xff]
    %v1037 = vld [vmem:[#allocation5 + $0x1d90] sm:$0xff]
    %v1038 = vld [vmem:[#allocation5 + $0x1d98] sm:$0xff]
    %v1039 = vld [vmem:[#allocation5 + $0x1da0] sm:$0xff]
    %v1040 = vld [vmem:[#allocation5 + $0x1da8] sm:$0xff]
    %v1041 = vld [vmem:[#allocation5 + $0x1db0] sm:$0xff]
    %v1042 = vld [vmem:[#allocation5 + $0x1db8] sm:$0xff]
    %v1043 = vld [vmem:[#allocation5 + $0x1dc0] sm:$0xff]
    %v1044 = vld [vmem:[#allocation5 + $0x1dc8] sm:$0xff]
    %v1045 = vld [vmem:[#allocation5 + $0x1dd0] sm:$0xff]
    %v1046 = vld [vmem:[#allocation5 + $0x1dd8] sm:$0xff]
    %v1047 = vld [vmem:[#allocation5 + $0x1de0] sm:$0xff]
    %v1048 = vld [vmem:[#allocation5 + $0x1de8] sm:$0xff]
    %v1049 = vld [vmem:[#allocation5 + $0x1df0] sm:$0xff]
    %v1050 = vld [vmem:[#allocation5 + $0x1df8] sm:$0xff]
    %v1051 = vld [vmem:[#allocation5 + $0x1e00] sm:$0xff]
    %v1052 = vld [vmem:[#allocation5 + $0x1e08] sm:$0xff]
    %v1053 = vld [vmem:[#allocation5 + $0x1e10] sm:$0xff]
    %v1054 = vld [vmem:[#allocation5 + $0x1e18] sm:$0xff]
    %v1055 = vld [vmem:[#allocation5 + $0x1e20] sm:$0xff]
    %v1056 = vld [vmem:[#allocation5 + $0x1e28] sm:$0xff]
    %v1057 = vld [vmem:[#allocation5 + $0x1e30] sm:$0xff]
    %v1058 = vld [vmem:[#allocation5 + $0x1e38] sm:$0xff]
    %v1059 = vld [vmem:[#allocation5 + $0x1e40] sm:$0xff]
    %v1060 = vld [vmem:[#allocation5 + $0x1e48] sm:$0xff]
    %v1061 = vld [vmem:[#allocation5 + $0x1e50] sm:$0xff]
    %v1062 = vld [vmem:[#allocation5 + $0x1e58] sm:$0xff]
    %v1063 = vld [vmem:[#allocation5 + $0x1e60] sm:$0xff]
    %v1064 = vld [vmem:[#allocation5 + $0x1e68] sm:$0xff]
    %v1065 = vld [vmem:[#allocation5 + $0x1e70] sm:$0xff]
    %v1066 = vld [vmem:[#allocation5 + $0x1e78] sm:$0xff]
    %v1067 = vld [vmem:[#allocation5 + $0x1e80] sm:$0xff]
    %v1068 = vld [vmem:[#allocation5 + $0x1e88] sm:$0xff]
    %v1069 = vld [vmem:[#allocation5 + $0x1e90] sm:$0xff]
    %v1070 = vld [vmem:[#allocation5 + $0x1e98] sm:$0xff]
    %v1071 = vld [vmem:[#allocation5 + $0x1ea0] sm:$0xff]
    %v1072 = vld [vmem:[#allocation5 + $0x1ea8] sm:$0xff]
    %v1073 = vld [vmem:[#allocation5 + $0x1eb0] sm:$0xff]
    %v1074 = vld [vmem:[#allocation5 + $0x1eb8] sm:$0xff]
    %v1075 = vld [vmem:[#allocation5 + $0x1ec0] sm:$0xff]
    %v1076 = vld [vmem:[#allocation5 + $0x1ec8] sm:$0xff]
    %v1077 = vld [vmem:[#allocation5 + $0x1ed0] sm:$0xff]
    %v1078 = vld [vmem:[#allocation5 + $0x1ed8] sm:$0xff]
    %v1079 = vld [vmem:[#allocation5 + $0x1ee0] sm:$0xff]
    %v1080 = vld [vmem:[#allocation5 + $0x1ee8] sm:$0xff]
    %v1081 = vld [vmem:[#allocation5 + $0x1ef0] sm:$0xff]
    %v1082 = vld [vmem:[#allocation5 + $0x1ef8] sm:$0xff]
    %v1083 = vld [vmem:[#allocation5 + $0x1f00] sm:$0xff]
    %v1084 = vld [vmem:[#allocation5 + $0x1f08] sm:$0xff]
    %v1085 = vld [vmem:[#allocation5 + $0x1f10] sm:$0xff]
    %v1086 = vld [vmem:[#allocation5 + $0x1f18] sm:$0xff]
    %v1087 = vld [vmem:[#allocation5 + $0x1f20] sm:$0xff]
    %v1088 = vld [vmem:[#allocation5 + $0x1f28] sm:$0xff]
    %v1089 = vld [vmem:[#allocation5 + $0x1f30] sm:$0xff]
    %v1090 = vld [vmem:[#allocation5 + $0x1f38] sm:$0xff]
    %v1091 = vld [vmem:[#allocation5 + $0x1f40] sm:$0xff]
    %v1092 = vld [vmem:[#allocation5 + $0x1f48] sm:$0xff]
    %v1093 = vld [vmem:[#allocation5 + $0x1f50] sm:$0xff]
    %v1094 = vld [vmem:[#allocation5 + $0x1f58] sm:$0xff]
    %v1095 = vld [vmem:[#allocation5 + $0x1f60] sm:$0xff]
    %v1096 = vld [vmem:[#allocation5 + $0x1f68] sm:$0xff]
    %v1097 = vld [vmem:[#allocation5 + $0x1f70] sm:$0xff]
    %v1098 = vld [vmem:[#allocation5 + $0x1f78] sm:$0xff]
    %v1099 = vld [vmem:[#allocation5 + $0x1f80] sm:$0xff]
    %v1100 = vld [vmem:[#allocation5 + $0x1f88] sm:$0xff]
    %v1101 = vld [vmem:[#allocation5 + $0x1f90] sm:$0xff]
    %v1102 = vld [vmem:[#allocation5 + $0x1f98] sm:$0xff]
    %v1103 = vld [vmem:[#allocation5 + $0x1fa0] sm:$0xff]
    %v1104 = vld [vmem:[#allocation5 + $0x1fa8] sm:$0xff]
    %v1105 = vld [vmem:[#allocation5 + $0x1fb0] sm:$0xff]
    %v1106 = vld [vmem:[#allocation5 + $0x1fb8] sm:$0xff]
    %v1107 = vld [vmem:[#allocation5 + $0x1fc0] sm:$0xff]
    %v1108 = vld [vmem:[#allocation5 + $0x1fc8] sm:$0xff]
    %v1109 = vld [vmem:[#allocation5 + $0x1fd0] sm:$0xff]
    %v1110 = vld [vmem:[#allocation5 + $0x1fd8] sm:$0xff]
    %v1111 = vld [vmem:[#allocation5 + $0x1fe0] sm:$0xff]
    %v1112 = vld [vmem:[#allocation5 + $0x1fe8] sm:$0xff]
    %v1113 = vld [vmem:[#allocation5 + $0x1ff0] sm:$0xff]
    %v1114 = vld [vmem:[#allocation5 + $0x1ff8] sm:$0xff]
    %v1115 = vld [vmem:[#allocation7] sm:$0xff]
    %v1116 = vld [vmem:[#allocation7 + $0x8] sm:$0xff]
    %v1119 = vlaneseq
    %v1120 = vshrl.u32 %v1119, 7
    %v1121 = vsub.s32 0, %v1120
    %v1122 = vrot.slane %v1115, %v1121
    %v1123 = vlaneseq
    %v1124 = vshrl.u32 %v1123, 7
    %v1125 = vsub.s32 1, %v1124
    %v1126 = vrot.slane %v1115, %v1125
    %v1127 = vlaneseq
    %v1128 = vshrl.u32 %v1127, 7
    %v1129 = vsub.s32 2, %v1128
    %v1130 = vrot.slane %v1115, %v1129
    %v1131 = vlaneseq
    %v1132 = vshrl.u32 %v1131, 7
    %v1133 = vsub.s32 3, %v1132
    %v1134 = vrot.slane %v1115, %v1133
    %v1135 = vlaneseq
    %v1136 = vshrl.u32 %v1135, 7
    %v1137 = vsub.s32 4, %v1136
    %v1138 = vrot.slane %v1115, %v1137
    %v1139 = vlaneseq
    %v1140 = vshrl.u32 %v1139, 7
    %v1141 = vsub.s32 5, %v1140
    %v1142 = vrot.slane %v1115, %v1141
    %v1143 = vlaneseq
    %v1144 = vshrl.u32 %v1143, 7
    %v1145 = vsub.s32 6, %v1144
    %v1146 = vrot.slane %v1115, %v1145
    %v1147 = vlaneseq
    %v1148 = vshrl.u32 %v1147, 7
    %v1149 = vsub.s32 7, %v1148
    %v1150 = vrot.slane %v1115, %v1149
    %v1151 = vlaneseq
    %v1152 = vshrl.u32 %v1151, 7
    %v1153 = vsub.s32 0, %v1152
    %v1154 = vrot.slane %v1116, %v1153
    %v1155 = vlaneseq
    %v1156 = vshrl.u32 %v1155, 7
    %v1157 = vsub.s32 1, %v1156
    %v1158 = vrot.slane %v1116, %v1157
    %v1159 = vlaneseq
    %v1160 = vshrl.u32 %v1159, 7
    %v1161 = vsub.s32 2, %v1160
    %v1162 = vrot.slane %v1116, %v1161
    %v1163 = vlaneseq
    %v1164 = vshrl.u32 %v1163, 7
    %v1165 = vsub.s32 3, %v1164
    %v1166 = vrot.slane %v1116, %v1165
    %v1167 = vlaneseq
    %v1168 = vshrl.u32 %v1167, 7
    %v1169 = vsub.s32 4, %v1168
    %v1170 = vrot.slane %v1116, %v1169
    %v1171 = vlaneseq
    %v1172 = vshrl.u32 %v1171, 7
    %v1173 = vsub.s32 5, %v1172
    %v1174 = vrot.slane %v1116, %v1173
    %v1175 = vlaneseq
    %v1176 = vshrl.u32 %v1175, 7
    %v1177 = vsub.s32 6, %v1176
    %v1178 = vrot.slane %v1116, %v1177
    %v1179 = vlaneseq
    %v1180 = vshrl.u32 %v1179, 7
    %v1181 = vsub.s32 7, %v1180
    %v1182 = vrot.slane %v1116, %v1181
    %1199 = vmatprep.subr.mxu0 %v92
    %1200 = vmatpush1.msra.mxu0 %v91
    %1201 = vmatprep.subr.mxu0 %v108
    %1202 = vmatpush1.msra.mxu0 %v107
    %1203 = vmatprep.subr.mxu0 %v124
    %1204 = vmatpush1.msra.mxu0 %v123
    %1205 = vmatprep.subr.mxu0 %v140
    %1206 = vmatpush1.msra.mxu0 %v139
    %1207 = vmatprep.subr.mxu0 %v156
    %1208 = vmatpush1.msra.mxu0 %v155
    %1209 = vmatprep.subr.mxu0 %v172
    %1210 = vmatpush1.msra.mxu0 %v171
    %1211 = vmatprep.subr.mxu0 %v188
    %1212 = vmatpush1.msra.mxu0 %v187
    %1213 = vmatprep.subr.mxu0 %v204
    %1214 = vmatpush1.msra.mxu0 %v203
    %1215 = vmatprep.subr.mxu0 %v220
    %1216 = vmatpush1.msra.mxu0 %v219
    %1217 = vmatprep.subr.mxu0 %v236
    %1218 = vmatpush1.msra.mxu0 %v235
    %1219 = vmatprep.subr.mxu0 %v252
    %1220 = vmatpush1.msra.mxu0 %v251
    %1221 = vmatprep.subr.mxu0 %v268
    %1222 = vmatpush1.msra.mxu0 %v267
    %1223 = vmatprep.subr.mxu0 %v284
    %1224 = vmatpush1.msra.mxu0 %v283
    %1225 = vmatprep.subr.mxu0 %v300
    %1226 = vmatpush1.msra.mxu0 %v299
    %1227 = vmatprep.subr.mxu0 %v316
    %1228 = vmatpush1.msra.mxu0 %v315
    %1229 = vmatprep.subr.mxu0 %v332
    %1230 = vmatpush1.msra.mxu0 %v331
    %1231 = vmatprep.subr.mxu0 %v348
    %1232 = vmatpush1.msra.mxu0 %v347
    %1233 = vmatprep.subr.mxu0 %v364
    %1234 = vmatpush1.msra.mxu0 %v363
    %1235 = vmatprep.subr.mxu0 %v380
    %1236 = vmatpush1.msra.mxu0 %v379
    %1237 = vmatprep.subr.mxu0 %v396
    %1238 = vmatpush1.msra.mxu0 %v395
    %1239 = vmatprep.subr.mxu0 %v412
    %1240 = vmatpush1.msra.mxu0 %v411
    %1241 = vmatprep.subr.mxu0 %v428
    %1242 = vmatpush1.msra.mxu0 %v427
    %1243 = vmatprep.subr.mxu0 %v444
    %1244 = vmatpush1.msra.mxu0 %v443
    %1245 = vmatprep.subr.mxu0 %v460
    %1246 = vmatpush1.msra.mxu0 %v459
    %1247 = vmatprep.subr.mxu0 %v476
    %1248 = vmatpush1.msra.mxu0 %v475
    %1249 = vmatprep.subr.mxu0 %v492
    %1250 = vmatpush1.msra.mxu0 %v491
    %1251 = vmatprep.subr.mxu0 %v508
    %1252 = vmatpush1.msra.mxu0 %v507
    %1253 = vmatprep.subr.mxu0 %v524
    %1254 = vmatpush1.msra.mxu0 %v523
    %1255 = vmatprep.subr.mxu0 %v540
    %1256 = vmatpush1.msra.mxu0 %v539
    %1257 = vmatprep.subr.mxu0 %v556
    %1258 = vmatpush1.msra.mxu0 %v555
    %1259 = vmatprep.subr.mxu0 %v572
    %1260 = vmatpush1.msra.mxu0 %v571
    %1261 = vmatprep.subr.mxu0 %v588
    %1262 = vmatpush1.msra.mxu0 %v587
    %1263 = vmatprep.mubr.f32.mxu0 %v88
    %1264 = vmatmul.mubr.f32.gmra.mrb[0].mxu0 %v87
    %v1265 = vpop.f32.mrb[0].mxu0
    %v1266 = vadd.f32 %v1122, %v1265
    %v1267 = vpop.f32.mrb[0].mxu0
    %v1268 = vadd.f32 %v1126, %v1267
    %1269 = vdwg.mxu0
    %1270 = vmatprep.subr.mxu0 %v604
    %1271 = vmatpush1.msra.mxu0 %v603
    %1272 = vmatprep.subr.mxu0 %v620
    %1273 = vmatpush1.msra.mxu0 %v619
    %1274 = vmatprep.subr.mxu0 %v636
    %1275 = vmatpush1.msra.mxu0 %v635
    %1276 = vmatprep.subr.mxu0 %v652
    %1277 = vmatpush1.msra.mxu0 %v651
    %1278 = vmatprep.subr.mxu0 %v668
    %1279 = vmatpush1.msra.mxu0 %v667
    %1280 = vmatprep.subr.mxu0 %v684
    %1281 = vmatpush1.msra.mxu0 %v683
    %1282 = vmatprep.subr.mxu0 %v700
    %1283 = vmatpush1.msra.mxu0 %v699
    %1284 = vmatprep.subr.mxu0 %v716
    %1285 = vmatpush1.msra.mxu0 %v715
    %1286 = vmatprep.subr.mxu0 %v732
    %1287 = vmatpush1.msra.mxu0 %v731
    %1288 = vmatprep.subr.mxu0 %v748
    %1289 = vmatpush1.msra.mxu0 %v747
    %1290 = vmatprep.subr.mxu0 %v764
    %1291 = vmatpush1.msra.mxu0 %v763
    %1292 = vmatprep.subr.mxu0 %v780
    %1293 = vmatpush1.msra.mxu0 %v779
    %1294 = vmatprep.subr.mxu0 %v796
    %1295 = vmatpush1.msra.mxu0 %v795
    %1296 = vmatprep.subr.mxu0 %v812
    %1297 = vmatpush1.msra.mxu0 %v811
    %1298 = vmatprep.subr.mxu0 %v828
    %1299 = vmatpush1.msra.mxu0 %v827
    %1300 = vmatprep.subr.mxu0 %v844
    %1301 = vmatpush1.msra.mxu0 %v843
    %1302 = vmatprep.subr.mxu0 %v860
    %1303 = vmatpush1.msra.mxu0 %v859
    %1304 = vmatprep.subr.mxu0 %v876
    %1305 = vmatpush1.msra.mxu0 %v875
    %1306 = vmatprep.subr.mxu0 %v892
    %1307 = vmatpush1.msra.mxu0 %v891
    %1308 = vmatprep.subr.mxu0 %v908
    %1309 = vmatpush1.msra.mxu0 %v907
    %1310 = vmatprep.subr.mxu0 %v924
    %1311 = vmatpush1.msra.mxu0 %v923
    %1312 = vmatprep.subr.mxu0 %v940
    %1313 = vmatpush1.msra.mxu0 %v939
    %1314 = vmatprep.subr.mxu0 %v956
    %1315 = vmatpush1.msra.mxu0 %v955
    %1316 = vmatprep.subr.mxu0 %v972
    %1317 = vmatpush1.msra.mxu0 %v971
    %1318 = vmatprep.subr.mxu0 %v988
    %1319 = vmatpush1.msra.mxu0 %v987
    %1320 = vmatprep.subr.mxu0 %v1004
    %1321 = vmatpush1.msra.mxu0 %v1003
    %1322 = vmatprep.subr.mxu0 %v1020
    %1323 = vmatpush1.msra.mxu0 %v1019
    %1324 = vmatprep.subr.mxu0 %v1036
    %1325 = vmatpush1.msra.mxu0 %v1035
    %1326 = vmatprep.subr.mxu0 %v1052
    %1327 = vmatpush1.msra.mxu0 %v1051
    %1328 = vmatprep.subr.mxu0 %v1068
    %1329 = vmatpush1.msra.mxu0 %v1067
    %1330 = vmatprep.subr.mxu0 %v1084
    %1331 = vmatpush1.msra.mxu0 %v1083
    %1332 = vmatprep.subr.mxu0 %v1100
    %1333 = vmatpush1.msra.mxu0 %v1099
    %1334 = vmatprep.mubr.f32.mxu0 %v90
    %1335 = vmatmul.mubr.f32.gmra.mrb[0].mxu0 %v89
    %v1336 = vpop.f32.mrb[0].mxu0
    %v1337 = vadd.f32 %v1266, %v1336
    %v1338 = vpop.f32.mrb[0].mxu0
    %v1339 = vadd.f32 %v1268, %v1338
    %1340 = vdwg.mxu0
    %1341 = vmatprep.subr.mxu0 %v94
    %1342 = vmatpush1.msra.mxu0 %v93
    %1343 = vmatprep.subr.mxu0 %v110
    %1344 = vmatpush1.msra.mxu0 %v109
    %1345 = vmatprep.subr.mxu0 %v126
    %1346 = vmatpush1.msra.mxu0 %v125
    %1347 = vmatprep.subr.mxu0 %v142
    %1348 = vmatpush1.msra.mxu0 %v141
    %1349 = vmatprep.subr.mxu0 %v158
    %1350 = vmatpush1.msra.mxu0 %v157
    %1351 = vmatprep.subr.mxu0 %v174
    %1352 = vmatpush1.msra.mxu0 %v173
    %1353 = vmatprep.subr.mxu0 %v190
    %1354 = vmatpush1.msra.mxu0 %v189
    %1355 = vmatprep.subr.mxu0 %v206
    %1356 = vmatpush1.msra.mxu0 %v205
    %1357 = vmatprep.subr.mxu0 %v222
    %1358 = vmatpush1.msra.mxu0 %v221
    %1359 = vmatprep.subr.mxu0 %v238
    %1360 = vmatpush1.msra.mxu0 %v237
    %1361 = vmatprep.subr.mxu0 %v254
    %1362 = vmatpush1.msra.mxu0 %v253
    %1363 = vmatprep.subr.mxu0 %v270
    %1364 = vmatpush1.msra.mxu0 %v269
    %1365 = vmatprep.subr.mxu0 %v286
    %1366 = vmatpush1.msra.mxu0 %v285
    %1367 = vmatprep.subr.mxu0 %v302
    %1368 = vmatpush1.msra.mxu0 %v301
    %1369 = vmatprep.subr.mxu0 %v318
    %1370 = vmatpush1.msra.mxu0 %v317
    %1371 = vmatprep.subr.mxu0 %v334
    %1372 = vmatpush1.msra.mxu0 %v333
    %1373 = vmatprep.subr.mxu0 %v350
    %1374 = vmatpush1.msra.mxu0 %v349
    %1375 = vmatprep.subr.mxu0 %v366
    %1376 = vmatpush1.msra.mxu0 %v365
    %1377 = vmatprep.subr.mxu0 %v382
    %1378 = vmatpush1.msra.mxu0 %v381
    %1379 = vmatprep.subr.mxu0 %v398
    %1380 = vmatpush1.msra.mxu0 %v397
    %1381 = vmatprep.subr.mxu0 %v414
    %1382 = vmatpush1.msra.mxu0 %v413
    %1383 = vmatprep.subr.mxu0 %v430
    %1384 = vmatpush1.msra.mxu0 %v429
    %1385 = vmatprep.subr.mxu0 %v446
    %1386 = vmatpush1.msra.mxu0 %v445
    %1387 = vmatprep.subr.mxu0 %v462
    %1388 = vmatpush1.msra.mxu0 %v461
    %1389 = vmatprep.subr.mxu0 %v478
    %1390 = vmatpush1.msra.mxu0 %v477
    %1391 = vmatprep.subr.mxu0 %v494
    %1392 = vmatpush1.msra.mxu0 %v493
    %1393 = vmatprep.subr.mxu0 %v510
    %1394 = vmatpush1.msra.mxu0 %v509
    %1395 = vmatprep.subr.mxu0 %v526
    %1396 = vmatpush1.msra.mxu0 %v525
    %1397 = vmatprep.subr.mxu0 %v542
    %1398 = vmatpush1.msra.mxu0 %v541
    %1399 = vmatprep.subr.mxu0 %v558
    %1400 = vmatpush1.msra.mxu0 %v557
    %1401 = vmatprep.subr.mxu0 %v574
    %1402 = vmatpush1.msra.mxu0 %v573
    %1403 = vmatprep.subr.mxu0 %v590
    %1404 = vmatpush1.msra.mxu0 %v589
    %1405 = vmatprep.mubr.f32.mxu0 %v88
    %1406 = vmatmul.mubr.f32.gmra.mrb[0].mxu0 %v87
    %v1407 = vpop.f32.mrb[0].mxu0
    %v1408 = vadd.f32 %v1130, %v1407
    %v1409 = vpop.f32.mrb[0].mxu0
    %v1410 = vadd.f32 %v1134, %v1409
    %1411 = vdwg.mxu0
    %1412 = vmatprep.subr.mxu0 %v606
    %1413 = vmatpush1.msra.mxu0 %v605
    %1414 = vmatprep.subr.mxu0 %v622
    %1415 = vmatpush1.msra.mxu0 %v621
    %1416 = vmatprep.subr.mxu0 %v638
    %1417 = vmatpush1.msra.mxu0 %v637
    %1418 = vmatprep.subr.mxu0 %v654
    %1419 = vmatpush1.msra.mxu0 %v653
    %1420 = vmatprep.subr.mxu0 %v670
    %1421 = vmatpush1.msra.mxu0 %v669
    %1422 = vmatprep.subr.mxu0 %v686
    %1423 = vmatpush1.msra.mxu0 %v685
    %1424 = vmatprep.subr.mxu0 %v702
    %1425 = vmatpush1.msra.mxu0 %v701
    %1426 = vmatprep.subr.mxu0 %v718
    %1427 = vmatpush1.msra.mxu0 %v717
    %1428 = vmatprep.subr.mxu0 %v734
    %1429 = vmatpush1.msra.mxu0 %v733
    %1430 = vmatprep.subr.mxu0 %v750
    %1431 = vmatpush1.msra.mxu0 %v749
    %1432 = vmatprep.subr.mxu0 %v766
    %1433 = vmatpush1.msra.mxu0 %v765
    %1434 = vmatprep.subr.mxu0 %v782
    %1435 = vmatpush1.msra.mxu0 %v781
    %1436 = vmatprep.subr.mxu0 %v798
    %1437 = vmatpush1.msra.mxu0 %v797
    %1438 = vmatprep.subr.mxu0 %v814
    %1439 = vmatpush1.msra.mxu0 %v813
    %1440 = vmatprep.subr.mxu0 %v830
    %1441 = vmatpush1.msra.mxu0 %v829
    %1442 = vmatprep.subr.mxu0 %v846
    %1443 = vmatpush1.msra.mxu0 %v845
    %1444 = vmatprep.subr.mxu0 %v862
    %1445 = vmatpush1.msra.mxu0 %v861
    %1446 = vmatprep.subr.mxu0 %v878
    %1447 = vmatpush1.msra.mxu0 %v877
    %1448 = vmatprep.subr.mxu0 %v894
    %1449 = vmatpush1.msra.mxu0 %v893
    %1450 = vmatprep.subr.mxu0 %v910
    %1451 = vmatpush1.msra.mxu0 %v909
    %1452 = vmatprep.subr.mxu0 %v926
    %1453 = vmatpush1.msra.mxu0 %v925
    %1454 = vmatprep.subr.mxu0 %v942
    %1455 = vmatpush1.msra.mxu0 %v941
    %1456 = vmatprep.subr.mxu0 %v958
    %1457 = vmatpush1.msra.mxu0 %v957
    %1458 = vmatprep.subr.mxu0 %v974
    %1459 = vmatpush1.msra.mxu0 %v973
    %1460 = vmatprep.subr.mxu0 %v990
    %1461 = vmatpush1.msra.mxu0 %v989
    %1462 = vmatprep.subr.mxu0 %v1006
    %1463 = vmatpush1.msra.mxu0 %v1005
    %1464 = vmatprep.subr.mxu0 %v1022
    %1465 = vmatpush1.msra.mxu0 %v1021
    %1466 = vmatprep.subr.mxu0 %v1038
    %1467 = vmatpush1.msra.mxu0 %v1037
    %1468 = vmatprep.subr.mxu0 %v1054
    %1469 = vmatpush1.msra.mxu0 %v1053
    %1470 = vmatprep.subr.mxu0 %v1070
    %1471 = vmatpush1.msra.mxu0 %v1069
    %1472 = vmatprep.subr.mxu0 %v1086
    %1473 = vmatpush1.msra.mxu0 %v1085
    %1474 = vmatprep.subr.mxu0 %v1102
    %1475 = vmatpush1.msra.mxu0 %v1101
    %1476 = vmatprep.mubr.f32.mxu0 %v90
    %1477 = vmatmul.mubr.f32.gmra.mrb[0].mxu0 %v89
    %v1478 = vpop.f32.mrb[0].mxu0
    %v1479 = vadd.f32 %v1408, %v1478
    %v1480 = vpop.f32.mrb[0].mxu0
    %v1481 = vadd.f32 %v1410, %v1480
    %1482 = vdwg.mxu0
    %1483 = vmatprep.subr.mxu0 %v96
    %1484 = vmatpush1.msra.mxu0 %v95
    %1485 = vmatprep.subr.mxu0 %v112
    %1486 = vmatpush1.msra.mxu0 %v111
    %1487 = vmatprep.subr.mxu0 %v128
    %1488 = vmatpush1.msra.mxu0 %v127
    %1489 = vmatprep.subr.mxu0 %v144
    %1490 = vmatpush1.msra.mxu0 %v143
    %1491 = vmatprep.subr.mxu0 %v160
    %1492 = vmatpush1.msra.mxu0 %v159
    %1493 = vmatprep.subr.mxu0 %v176
    %1494 = vmatpush1.msra.mxu0 %v175
    %1495 = vmatprep.subr.mxu0 %v192
    %1496 = vmatpush1.msra.mxu0 %v191
    %1497 = vmatprep.subr.mxu0 %v208
    %1498 = vmatpush1.msra.mxu0 %v207
    %1499 = vmatprep.subr.mxu0 %v224
    %1500 = vmatpush1.msra.mxu0 %v223
    %1501 = vmatprep.subr.mxu0 %v240
    %1502 = vmatpush1.msra.mxu0 %v239
    %1503 = vmatprep.subr.mxu0 %v256
    %1504 = vmatpush1.msra.mxu0 %v255
    %1505 = vmatprep.subr.mxu0 %v272
    %1506 = vmatpush1.msra.mxu0 %v271
    %1507 = vmatprep.subr.mxu0 %v288
    %1508 = vmatpush1.msra.mxu0 %v287
    %1509 = vmatprep.subr.mxu0 %v304
    %1510 = vmatpush1.msra.mxu0 %v303
    %1511 = vmatprep.subr.mxu0 %v320
    %1512 = vmatpush1.msra.mxu0 %v319
    %1513 = vmatprep.subr.mxu0 %v336
    %1514 = vmatpush1.msra.mxu0 %v335
    %1515 = vmatprep.subr.mxu0 %v352
    %1516 = vmatpush1.msra.mxu0 %v351
    %1517 = vmatprep.subr.mxu0 %v368
    %1518 = vmatpush1.msra.mxu0 %v367
    %1519 = vmatprep.subr.mxu0 %v384
    %1520 = vmatpush1.msra.mxu0 %v383
    %1521 = vmatprep.subr.mxu0 %v400
    %1522 = vmatpush1.msra.mxu0 %v399
    %1523 = vmatprep.subr.mxu0 %v416
    %1524 = vmatpush1.msra.mxu0 %v415
    %1525 = vmatprep.subr.mxu0 %v432
    %1526 = vmatpush1.msra.mxu0 %v431
    %1527 = vmatprep.subr.mxu0 %v448
    %1528 = vmatpush1.msra.mxu0 %v447
    %1529 = vmatprep.subr.mxu0 %v464
    %1530 = vmatpush1.msra.mxu0 %v463
    %1531 = vmatprep.subr.mxu0 %v480
    %1532 = vmatpush1.msra.mxu0 %v479
    %1533 = vmatprep.subr.mxu0 %v496
    %1534 = vmatpush1.msra.mxu0 %v495
    %1535 = vmatprep.subr.mxu0 %v512
    %1536 = vmatpush1.msra.mxu0 %v511
    %1537 = vmatprep.subr.mxu0 %v528
    %1538 = vmatpush1.msra.mxu0 %v527
    %1539 = vmatprep.subr.mxu0 %v544
    %1540 = vmatpush1.msra.mxu0 %v543
    %1541 = vmatprep.subr.mxu0 %v560
    %1542 = vmatpush1.msra.mxu0 %v559
    %1543 = vmatprep.subr.mxu0 %v576
    %1544 = vmatpush1.msra.mxu0 %v575
    %1545 = vmatprep.subr.mxu0 %v592
    %1546 = vmatpush1.msra.mxu0 %v591
    %1547 = vmatprep.mubr.f32.mxu0 %v88
    %1548 = vmatmul.mubr.f32.gmra.mrb[0].mxu0 %v87
    %v1549 = vpop.f32.mrb[0].mxu0
    %v1550 = vadd.f32 %v1138, %v1549
    %v1551 = vpop.f32.mrb[0].mxu0
    %v1552 = vadd.f32 %v1142, %v1551
    %1553 = vdwg.mxu0
    %1554 = vmatprep.subr.mxu0 %v608
    %1555 = vmatpush1.msra.mxu0 %v607
    %1556 = vmatprep.subr.mxu0 %v624
    %1557 = vmatpush1.msra.mxu0 %v623
    %1558 = vmatprep.subr.mxu0 %v640
    %1559 = vmatpush1.msra.mxu0 %v639
    %1560 = vmatprep.subr.mxu0 %v656
    %1561 = vmatpush1.msra.mxu0 %v655
    %1562 = vmatprep.subr.mxu0 %v672
    %1563 = vmatpush1.msra.mxu0 %v671
    %1564 = vmatprep.subr.mxu0 %v688
    %1565 = vmatpush1.msra.mxu0 %v687
    %1566 = vmatprep.subr.mxu0 %v704
    %1567 = vmatpush1.msra.mxu0 %v703
    %1568 = vmatprep.subr.mxu0 %v720
    %1569 = vmatpush1.msra.mxu0 %v719
    %1570 = vmatprep.subr.mxu0 %v736
    %1571 = vmatpush1.msra.mxu0 %v735
    %1572 = vmatprep.subr.mxu0 %v752
    %1573 = vmatpush1.msra.mxu0 %v751
    %1574 = vmatprep.subr.mxu0 %v768
    %1575 = vmatpush1.msra.mxu0 %v767
    %1576 = vmatprep.subr.mxu0 %v784
    %1577 = vmatpush1.msra.mxu0 %v783
    %1578 = vmatprep.subr.mxu0 %v800
    %1579 = vmatpush1.msra.mxu0 %v799
    %1580 = vmatprep.subr.mxu0 %v816
    %1581 = vmatpush1.msra.mxu0 %v815
    %1582 = vmatprep.subr.mxu0 %v832
    %1583 = vmatpush1.msra.mxu0 %v831
    %1584 = vmatprep.subr.mxu0 %v848
    %1585 = vmatpush1.msra.mxu0 %v847
    %1586 = vmatprep.subr.mxu0 %v864
    %1587 = vmatpush1.msra.mxu0 %v863
    %1588 = vmatprep.subr.mxu0 %v880
    %1589 = vmatpush1.msra.mxu0 %v879
    %1590 = vmatprep.subr.mxu0 %v896
    %1591 = vmatpush1.msra.mxu0 %v895
    %1592 = vmatprep.subr.mxu0 %v912
    %1593 = vmatpush1.msra.mxu0 %v911
    %1594 = vmatprep.subr.mxu0 %v928
    %1595 = vmatpush1.msra.mxu0 %v927
    %1596 = vmatprep.subr.mxu0 %v944
    %1597 = vmatpush1.msra.mxu0 %v943
    %1598 = vmatprep.subr.mxu0 %v960
    %1599 = vmatpush1.msra.mxu0 %v959
    %1600 = vmatprep.subr.mxu0 %v976
    %1601 = vmatpush1.msra.mxu0 %v975
    %1602 = vmatprep.subr.mxu0 %v992
    %1603 = vmatpush1.msra.mxu0 %v991
    %1604 = vmatprep.subr.mxu0 %v1008
    %1605 = vmatpush1.msra.mxu0 %v1007
    %1606 = vmatprep.subr.mxu0 %v1024
    %1607 = vmatpush1.msra.mxu0 %v1023
    %1608 = vmatprep.subr.mxu0 %v1040
    %1609 = vmatpush1.msra.mxu0 %v1039
    %1610 = vmatprep.subr.mxu0 %v1056
    %1611 = vmatpush1.msra.mxu0 %v1055
    %1612 = vmatprep.subr.mxu0 %v1072
    %1613 = vmatpush1.msra.mxu0 %v1071
    %1614 = vmatprep.subr.mxu0 %v1088
    %1615 = vmatpush1.msra.mxu0 %v1087
    %1616 = vmatprep.subr.mxu0 %v1104
    %1617 = vmatpush1.msra.mxu0 %v1103
    %1618 = vmatprep.mubr.f32.mxu0 %v90
    %1619 = vmatmul.mubr.f32.gmra.mrb[0].mxu0 %v89
    %v1620 = vpop.f32.mrb[0].mxu0
    %v1621 = vadd.f32 %v1550, %v1620
    %v1622 = vpop.f32.mrb[0].mxu0
    %v1623 = vadd.f32 %v1552, %v1622
    %1624 = vdwg.mxu0
    %1625 = vmatprep.subr.mxu0 %v98
    %1626 = vmatpush1.msra.mxu0 %v97
    %1627 = vmatprep.subr.mxu0 %v114
    %1628 = vmatpush1.msra.mxu0 %v113
    %1629 = vmatprep.subr.mxu0 %v130
    %1630 = vmatpush1.msra.mxu0 %v129
    %1631 = vmatprep.subr.mxu0 %v146
    %1632 = vmatpush1.msra.mxu0 %v145
    %1633 = vmatprep.subr.mxu0 %v162
    %1634 = vmatpush1.msra.mxu0 %v161
    %1635 = vmatprep.subr.mxu0 %v178
    %1636 = vmatpush1.msra.mxu0 %v177
    %1637 = vmatprep.subr.mxu0 %v194
    %1638 = vmatpush1.msra.mxu0 %v193
    %1639 = vmatprep.subr.mxu0 %v210
    %1640 = vmatpush1.msra.mxu0 %v209
    %1641 = vmatprep.subr.mxu0 %v226
    %1642 = vmatpush1.msra.mxu0 %v225
    %1643 = vmatprep.subr.mxu0 %v242
    %1644 = vmatpush1.msra.mxu0 %v241
    %1645 = vmatprep.subr.mxu0 %v258
    %1646 = vmatpush1.msra.mxu0 %v257
    %1647 = vmatprep.subr.mxu0 %v274
    %1648 = vmatpush1.msra.mxu0 %v273
    %1649 = vmatprep.subr.mxu0 %v290
    %1650 = vmatpush1.msra.mxu0 %v289
    %1651 = vmatprep.subr.mxu0 %v306
    %1652 = vmatpush1.msra.mxu0 %v305
    %1653 = vmatprep.subr.mxu0 %v322
    %1654 = vmatpush1.msra.mxu0 %v321
    %1655 = vmatprep.subr.mxu0 %v338
    %1656 = vmatpush1.msra.mxu0 %v337
    %1657 = vmatprep.subr.mxu0 %v354
    %1658 = vmatpush1.msra.mxu0 %v353
    %1659 = vmatprep.subr.mxu0 %v370
    %1660 = vmatpush1.msra.mxu0 %v369
    %1661 = vmatprep.subr.mxu0 %v386
    %1662 = vmatpush1.msra.mxu0 %v385
    %1663 = vmatprep.subr.mxu0 %v402
    %1664 = vmatpush1.msra.mxu0 %v401
    %1665 = vmatprep.subr.mxu0 %v418
    %1666 = vmatpush1.msra.mxu0 %v417
    %1667 = vmatprep.subr.mxu0 %v434
    %1668 = vmatpush1.msra.mxu0 %v433
    %1669 = vmatprep.subr.mxu0 %v450
    %1670 = vmatpush1.msra.mxu0 %v449
    %1671 = vmatprep.subr.mxu0 %v466
    %1672 = vmatpush1.msra.mxu0 %v465
    %1673 = vmatprep.subr.mxu0 %v482
    %1674 = vmatpush1.msra.mxu0 %v481
    %1675 = vmatprep.subr.mxu0 %v498
    %1676 = vmatpush1.msra.mxu0 %v497
    %1677 = vmatprep.subr.mxu0 %v514
    %1678 = vmatpush1.msra.mxu0 %v513
    %1679 = vmatprep.subr.mxu0 %v530
    %1680 = vmatpush1.msra.mxu0 %v529
    %1681 = vmatprep.subr.mxu0 %v546
    %1682 = vmatpush1.msra.mxu0 %v545
    %1683 = vmatprep.subr.mxu0 %v562
    %1684 = vmatpush1.msra.mxu0 %v561
    %1685 = vmatprep.subr.mxu0 %v578
    %1686 = vmatpush1.msra.mxu0 %v577
    %1687 = vmatprep.subr.mxu0 %v594
    %1688 = vmatpush1.msra.mxu0 %v593
    %1689 = vmatprep.mubr.f32.mxu0 %v88
    %1690 = vmatmul.mubr.f32.gmra.mrb[0].mxu0 %v87
    %v1691 = vpop.f32.mrb[0].mxu0
    %v1692 = vadd.f32 %v1146, %v1691
    %v1693 = vpop.f32.mrb[0].mxu0
    %v1694 = vadd.f32 %v1150, %v1693
    %1695 = vdwg.mxu0
    %1696 = vmatprep.subr.mxu0 %v610
    %1697 = vmatpush1.msra.mxu0 %v609
    %1698 = vmatprep.subr.mxu0 %v626
    %1699 = vmatpush1.msra.mxu0 %v625
    %1700 = vmatprep.subr.mxu0 %v642
    %1701 = vmatpush1.msra.mxu0 %v641
    %1702 = vmatprep.subr.mxu0 %v658
    %1703 = vmatpush1.msra.mxu0 %v657
    %1704 = vmatprep.subr.mxu0 %v674
    %1705 = vmatpush1.msra.mxu0 %v673
    %1706 = vmatprep.subr.mxu0 %v690
    %1707 = vmatpush1.msra.mxu0 %v689
    %1708 = vmatprep.subr.mxu0 %v706
    %1709 = vmatpush1.msra.mxu0 %v705
    %1710 = vmatprep.subr.mxu0 %v722
    %1711 = vmatpush1.msra.mxu0 %v721
    %1712 = vmatprep.subr.mxu0 %v738
    %1713 = vmatpush1.msra.mxu0 %v737
    %1714 = vmatprep.subr.mxu0 %v754
    %1715 = vmatpush1.msra.mxu0 %v753
    %1716 = vmatprep.subr.mxu0 %v770
    %1717 = vmatpush1.msra.mxu0 %v769
    %1718 = vmatprep.subr.mxu0 %v786
    %1719 = vmatpush1.msra.mxu0 %v785
    %1720 = vmatprep.subr.mxu0 %v802
    %1721 = vmatpush1.msra.mxu0 %v801
    %1722 = vmatprep.subr.mxu0 %v818
    %1723 = vmatpush1.msra.mxu0 %v817
    %1724 = vmatprep.subr.mxu0 %v834
    %1725 = vmatpush1.msra.mxu0 %v833
    %1726 = vmatprep.subr.mxu0 %v850
    %1727 = vmatpush1.msra.mxu0 %v849
    %1728 = vmatprep.subr.mxu0 %v866
    %1729 = vmatpush1.msra.mxu0 %v865
    %1730 = vmatprep.subr.mxu0 %v882
    %1731 = vmatpush1.msra.mxu0 %v881
    %1732 = vmatprep.subr.mxu0 %v898
    %1733 = vmatpush1.msra.mxu0 %v897
    %1734 = vmatprep.subr.mxu0 %v914
    %1735 = vmatpush1.msra.mxu0 %v913
    %1736 = vmatprep.subr.mxu0 %v930
    %1737 = vmatpush1.msra.mxu0 %v929
    %1738 = vmatprep.subr.mxu0 %v946
    %1739 = vmatpush1.msra.mxu0 %v945
    %1740 = vmatprep.subr.mxu0 %v962
    %1741 = vmatpush1.msra.mxu0 %v961
    %1742 = vmatprep.subr.mxu0 %v978
    %1743 = vmatpush1.msra.mxu0 %v977
    %1744 = vmatprep.subr.mxu0 %v994
    %1745 = vmatpush1.msra.mxu0 %v993
    %1746 = vmatprep.subr.mxu0 %v1010
    %1747 = vmatpush1.msra.mxu0 %v1009
    %1748 = vmatprep.subr.mxu0 %v1026
    %1749 = vmatpush1.msra.mxu0 %v1025
    %1750 = vmatprep.subr.mxu0 %v1042
    %1751 = vmatpush1.msra.mxu0 %v1041
    %1752 = vmatprep.subr.mxu0 %v1058
    %1753 = vmatpush1.msra.mxu0 %v1057
    %1754 = vmatprep.subr.mxu0 %v1074
    %1755 = vmatpush1.msra.mxu0 %v1073
    %1756 = vmatprep.subr.mxu0 %v1090
    %1757 = vmatpush1.msra.mxu0 %v1089
    %1758 = vmatprep.subr.mxu0 %v1106
    %1759 = vmatpush1.msra.mxu0 %v1105
    %1760 = vmatprep.mubr.f32.mxu0 %v90
    %1761 = vmatmul.mubr.f32.gmra.mrb[0].mxu0 %v89
    %v1762 = vpop.f32.mrb[0].mxu0
    %v1763 = vadd.f32 %v1692, %v1762
    %v1764 = vpop.f32.mrb[0].mxu0
    %v1765 = vadd.f32 %v1694, %v1764
    %1766 = vdwg.mxu0
    %1767 = vmatprep.subr.mxu0 %v100
    %1768 = vmatpush1.msra.mxu0 %v99
    %1769 = vmatprep.subr.mxu0 %v116
    %1770 = vmatpush1.msra.mxu0 %v115
    %1771 = vmatprep.subr.mxu0 %v132
    %1772 = vmatpush1.msra.mxu0 %v131
    %1773 = vmatprep.subr.mxu0 %v148
    %1774 = vmatpush1.msra.mxu0 %v147
    %1775 = vmatprep.subr.mxu0 %v164
    %1776 = vmatpush1.msra.mxu0 %v163
    %1777 = vmatprep.subr.mxu0 %v180
    %1778 = vmatpush1.msra.mxu0 %v179
    %1779 = vmatprep.subr.mxu0 %v196
    %1780 = vmatpush1.msra.mxu0 %v195
    %1781 = vmatprep.subr.mxu0 %v212
    %1782 = vmatpush1.msra.mxu0 %v211
    %1783 = vmatprep.subr.mxu0 %v228
    %1784 = vmatpush1.msra.mxu0 %v227
    %1785 = vmatprep.subr.mxu0 %v244
    %1786 = vmatpush1.msra.mxu0 %v243
    %1787 = vmatprep.subr.mxu0 %v260
    %1788 = vmatpush1.msra.mxu0 %v259
    %1789 = vmatprep.subr.mxu0 %v276
    %1790 = vmatpush1.msra.mxu0 %v275
    %1791 = vmatprep.subr.mxu0 %v292
    %1792 = vmatpush1.msra.mxu0 %v291
    %1793 = vmatprep.subr.mxu0 %v308
    %1794 = vmatpush1.msra.mxu0 %v307
    %1795 = vmatprep.subr.mxu0 %v324
    %1796 = vmatpush1.msra.mxu0 %v323
    %1797 = vmatprep.subr.mxu0 %v340
    %1798 = vmatpush1.msra.mxu0 %v339
    %1799 = vmatprep.subr.mxu0 %v356
    %1800 = vmatpush1.msra.mxu0 %v355
    %1801 = vmatprep.subr.mxu0 %v372
    %1802 = vmatpush1.msra.mxu0 %v371
    %1803 = vmatprep.subr.mxu0 %v388
    %1804 = vmatpush1.msra.mxu0 %v387
    %1805 = vmatprep.subr.mxu0 %v404
    %1806 = vmatpush1.msra.mxu0 %v403
    %1807 = vmatprep.subr.mxu0 %v420
    %1808 = vmatpush1.msra.mxu0 %v419
    %1809 = vmatprep.subr.mxu0 %v436
    %1810 = vmatpush1.msra.mxu0 %v435
    %1811 = vmatprep.subr.mxu0 %v452
    %1812 = vmatpush1.msra.mxu0 %v451
    %1813 = vmatprep.subr.mxu0 %v468
    %1814 = vmatpush1.msra.mxu0 %v467
    %1815 = vmatprep.subr.mxu0 %v484
    %1816 = vmatpush1.msra.mxu0 %v483
    %1817 = vmatprep.subr.mxu0 %v500
    %1818 = vmatpush1.msra.mxu0 %v499
    %1819 = vmatprep.subr.mxu0 %v516
    %1820 = vmatpush1.msra.mxu0 %v515
    %1821 = vmatprep.subr.mxu0 %v532
    %1822 = vmatpush1.msra.mxu0 %v531
    %1823 = vmatprep.subr.mxu0 %v548
    %1824 = vmatpush1.msra.mxu0 %v547
    %1825 = vmatprep.subr.mxu0 %v564
    %1826 = vmatpush1.msra.mxu0 %v563
    %1827 = vmatprep.subr.mxu0 %v580
    %1828 = vmatpush1.msra.mxu0 %v579
    %1829 = vmatprep.subr.mxu0 %v596
    %1830 = vmatpush1.msra.mxu0 %v595
    %1831 = vmatprep.mubr.f32.mxu0 %v88
    %1832 = vmatmul.mubr.f32.gmra.mrb[0].mxu0 %v87
    %v1833 = vpop.f32.mrb[0].mxu0
    %v1834 = vadd.f32 %v1154, %v1833
    %v1835 = vpop.f32.mrb[0].mxu0
    %v1836 = vadd.f32 %v1158, %v1835
    %1837 = vdwg.mxu0
    %1838 = vmatprep.subr.mxu0 %v612
    %1839 = vmatpush1.msra.mxu0 %v611
    %1840 = vmatprep.subr.mxu0 %v628
    %1841 = vmatpush1.msra.mxu0 %v627
    %1842 = vmatprep.subr.mxu0 %v644
    %1843 = vmatpush1.msra.mxu0 %v643
    %1844 = vmatprep.subr.mxu0 %v660
    %1845 = vmatpush1.msra.mxu0 %v659
    %1846 = vmatprep.subr.mxu0 %v676
    %1847 = vmatpush1.msra.mxu0 %v675
    %1848 = vmatprep.subr.mxu0 %v692
    %1849 = vmatpush1.msra.mxu0 %v691
    %1850 = vmatprep.subr.mxu0 %v708
    %1851 = vmatpush1.msra.mxu0 %v707
    %1852 = vmatprep.subr.mxu0 %v724
    %1853 = vmatpush1.msra.mxu0 %v723
    %1854 = vmatprep.subr.mxu0 %v740
    %1855 = vmatpush1.msra.mxu0 %v739
    %1856 = vmatprep.subr.mxu0 %v756
    %1857 = vmatpush1.msra.mxu0 %v755
    %1858 = vmatprep.subr.mxu0 %v772
    %1859 = vmatpush1.msra.mxu0 %v771
    %1860 = vmatprep.subr.mxu0 %v788
    %1861 = vmatpush1.msra.mxu0 %v787
    %1862 = vmatprep.subr.mxu0 %v804
    %1863 = vmatpush1.msra.mxu0 %v803
    %1864 = vmatprep.subr.mxu0 %v820
    %1865 = vmatpush1.msra.mxu0 %v819
    %1866 = vmatprep.subr.mxu0 %v836
    %1867 = vmatpush1.msra.mxu0 %v835
    %1868 = vmatprep.subr.mxu0 %v852
    %1869 = vmatpush1.msra.mxu0 %v851
    %1870 = vmatprep.subr.mxu0 %v868
    %1871 = vmatpush1.msra.mxu0 %v867
    %1872 = vmatprep.subr.mxu0 %v884
    %1873 = vmatpush1.msra.mxu0 %v883
    %1874 = vmatprep.subr.mxu0 %v900
    %1875 = vmatpush1.msra.mxu0 %v899
    %1876 = vmatprep.subr.mxu0 %v916
    %1877 = vmatpush1.msra.mxu0 %v915
    %1878 = vmatprep.subr.mxu0 %v932
    %1879 = vmatpush1.msra.mxu0 %v931
    %1880 = vmatprep.subr.mxu0 %v948
    %1881 = vmatpush1.msra.mxu0 %v947
    %1882 = vmatprep.subr.mxu0 %v964
    %1883 = vmatpush1.msra.mxu0 %v963
    %1884 = vmatprep.subr.mxu0 %v980
    %1885 = vmatpush1.msra.mxu0 %v979
    %1886 = vmatprep.subr.mxu0 %v996
    %1887 = vmatpush1.msra.mxu0 %v995
    %1888 = vmatprep.subr.mxu0 %v1012
    %1889 = vmatpush1.msra.mxu0 %v1011
    %1890 = vmatprep.subr.mxu0 %v1028
    %1891 = vmatpush1.msra.mxu0 %v1027
    %1892 = vmatprep.subr.mxu0 %v1044
    %1893 = vmatpush1.msra.mxu0 %v1043
    %1894 = vmatprep.subr.mxu0 %v1060
    %1895 = vmatpush1.msra.mxu0 %v1059
    %1896 = vmatprep.subr.mxu0 %v1076
    %1897 = vmatpush1.msra.mxu0 %v1075
    %1898 = vmatprep.subr.mxu0 %v1092
    %1899 = vmatpush1.msra.mxu0 %v1091
    %1900 = vmatprep.subr.mxu0 %v1108
    %1901 = vmatpush1.msra.mxu0 %v1107
    %1902 = vmatprep.mubr.f32.mxu0 %v90
    %1903 = vmatmul.mubr.f32.gmra.mrb[0].mxu0 %v89
    %v1904 = vpop.f32.mrb[0].mxu0
    %v1905 = vadd.f32 %v1834, %v1904
    %v1906 = vpop.f32.mrb[0].mxu0
    %v1907 = vadd.f32 %v1836, %v1906
    %1908 = vdwg.mxu0
    %1909 = vmatprep.subr.mxu0 %v102
    %1910 = vmatpush1.msra.mxu0 %v101
    %1911 = vmatprep.subr.mxu0 %v118
    %1912 = vmatpush1.msra.mxu0 %v117
    %1913 = vmatprep.subr.mxu0 %v134
    %1914 = vmatpush1.msra.mxu0 %v133
    %1915 = vmatprep.subr.mxu0 %v150
    %1916 = vmatpush1.msra.mxu0 %v149
    %1917 = vmatprep.subr.mxu0 %v166
    %1918 = vmatpush1.msra.mxu0 %v165
    %1919 = vmatprep.subr.mxu0 %v182
    %1920 = vmatpush1.msra.mxu0 %v181
    %1921 = vmatprep.subr.mxu0 %v198
    %1922 = vmatpush1.msra.mxu0 %v197
    %1923 = vmatprep.subr.mxu0 %v214
    %1924 = vmatpush1.msra.mxu0 %v213
    %1925 = vmatprep.subr.mxu0 %v230
    %1926 = vmatpush1.msra.mxu0 %v229
    %1927 = vmatprep.subr.mxu0 %v246
    %1928 = vmatpush1.msra.mxu0 %v245
    %1929 = vmatprep.subr.mxu0 %v262
    %1930 = vmatpush1.msra.mxu0 %v261
    %1931 = vmatprep.subr.mxu0 %v278
    %1932 = vmatpush1.msra.mxu0 %v277
    %1933 = vmatprep.subr.mxu0 %v294
    %1934 = vmatpush1.msra.mxu0 %v293
    %1935 = vmatprep.subr.mxu0 %v310
    %1936 = vmatpush1.msra.mxu0 %v309
    %1937 = vmatprep.subr.mxu0 %v326
    %1938 = vmatpush1.msra.mxu0 %v325
    %1939 = vmatprep.subr.mxu0 %v342
    %1940 = vmatpush1.msra.mxu0 %v341
    %1941 = vmatprep.subr.mxu0 %v358
    %1942 = vmatpush1.msra.mxu0 %v357
    %1943 = vmatprep.subr.mxu0 %v374
    %1944 = vmatpush1.msra.mxu0 %v373
    %1945 = vmatprep.subr.mxu0 %v390
    %1946 = vmatpush1.msra.mxu0 %v389
    %1947 = vmatprep.subr.mxu0 %v406
    %1948 = vmatpush1.msra.mxu0 %v405
    %1949 = vmatprep.subr.mxu0 %v422
    %1950 = vmatpush1.msra.mxu0 %v421
    %1951 = vmatprep.subr.mxu0 %v438
    %1952 = vmatpush1.msra.mxu0 %v437
    %1953 = vmatprep.subr.mxu0 %v454
    %1954 = vmatpush1.msra.mxu0 %v453
    %1955 = vmatprep.subr.mxu0 %v470
    %1956 = vmatpush1.msra.mxu0 %v469
    %1957 = vmatprep.subr.mxu0 %v486
    %1958 = vmatpush1.msra.mxu0 %v485
    %1959 = vmatprep.subr.mxu0 %v502
    %1960 = vmatpush1.msra.mxu0 %v501
    %1961 = vmatprep.subr.mxu0 %v518
    %1962 = vmatpush1.msra.mxu0 %v517
    %1963 = vmatprep.subr.mxu0 %v534
    %1964 = vmatpush1.msra.mxu0 %v533
    %1965 = vmatprep.subr.mxu0 %v550
    %1966 = vmatpush1.msra.mxu0 %v549
    %1967 = vmatprep.subr.mxu0 %v566
    %1968 = vmatpush1.msra.mxu0 %v565
    %1969 = vmatprep.subr.mxu0 %v582
    %1970 = vmatpush1.msra.mxu0 %v581
    %1971 = vmatprep.subr.mxu0 %v598
    %1972 = vmatpush1.msra.mxu0 %v597
    %1973 = vmatprep.mubr.f32.mxu0 %v88
    %1974 = vmatmul.mubr.f32.gmra.mrb[0].mxu0 %v87
    %v1975 = vpop.f32.mrb[0].mxu0
    %v1976 = vadd.f32 %v1162, %v1975
    %v1977 = vpop.f32.mrb[0].mxu0
    %v1978 = vadd.f32 %v1166, %v1977
    %1979 = vdwg.mxu0
    %1980 = vmatprep.subr.mxu0 %v614
    %1981 = vmatpush1.msra.mxu0 %v613
    %1982 = vmatprep.subr.mxu0 %v630
    %1983 = vmatpush1.msra.mxu0 %v629
    %1984 = vmatprep.subr.mxu0 %v646
    %1985 = vmatpush1.msra.mxu0 %v645
    %1986 = vmatprep.subr.mxu0 %v662
    %1987 = vmatpush1.msra.mxu0 %v661
    %1988 = vmatprep.subr.mxu0 %v678
    %1989 = vmatpush1.msra.mxu0 %v677
    %1990 = vmatprep.subr.mxu0 %v694
    %1991 = vmatpush1.msra.mxu0 %v693
    %1992 = vmatprep.subr.mxu0 %v710
    %1993 = vmatpush1.msra.mxu0 %v709
    %1994 = vmatprep.subr.mxu0 %v726
    %1995 = vmatpush1.msra.mxu0 %v725
    %1996 = vmatprep.subr.mxu0 %v742
    %1997 = vmatpush1.msra.mxu0 %v741
    %1998 = vmatprep.subr.mxu0 %v758
    %1999 = vmatpush1.msra.mxu0 %v757
    %2000 = vmatprep.subr.mxu0 %v774
    %2001 = vmatpush1.msra.mxu0 %v773
    %2002 = vmatprep.subr.mxu0 %v790
    %2003 = vmatpush1.msra.mxu0 %v789
    %2004 = vmatprep.subr.mxu0 %v806
    %2005 = vmatpush1.msra.mxu0 %v805
    %2006 = vmatprep.subr.mxu0 %v822
    %2007 = vmatpush1.msra.mxu0 %v821
    %2008 = vmatprep.subr.mxu0 %v838
    %2009 = vmatpush1.msra.mxu0 %v837
    %2010 = vmatprep.subr.mxu0 %v854
    %2011 = vmatpush1.msra.mxu0 %v853
    %2012 = vmatprep.subr.mxu0 %v870
    %2013 = vmatpush1.msra.mxu0 %v869
    %2014 = vmatprep.subr.mxu0 %v886
    %2015 = vmatpush1.msra.mxu0 %v885
    %2016 = vmatprep.subr.mxu0 %v902
    %2017 = vmatpush1.msra.mxu0 %v901
    %2018 = vmatprep.subr.mxu0 %v918
    %2019 = vmatpush1.msra.mxu0 %v917
    %2020 = vmatprep.subr.mxu0 %v934
    %2021 = vmatpush1.msra.mxu0 %v933
    %2022 = vmatprep.subr.mxu0 %v950
    %2023 = vmatpush1.msra.mxu0 %v949
    %2024 = vmatprep.subr.mxu0 %v966
    %2025 = vmatpush1.msra.mxu0 %v965
    %2026 = vmatprep.subr.mxu0 %v982
    %2027 = vmatpush1.msra.mxu0 %v981
    %2028 = vmatprep.subr.mxu0 %v998
    %2029 = vmatpush1.msra.mxu0 %v997
    %2030 = vmatprep.subr.mxu0 %v1014
    %2031 = vmatpush1.msra.mxu0 %v1013
    %2032 = vmatprep.subr.mxu0 %v1030
    %2033 = vmatpush1.msra.mxu0 %v1029
    %2034 = vmatprep.subr.mxu0 %v1046
    %2035 = vmatpush1.msra.mxu0 %v1045
    %2036 = vmatprep.subr.mxu0 %v1062
    %2037 = vmatpush1.msra.mxu0 %v1061
    %2038 = vmatprep.subr.mxu0 %v1078
    %2039 = vmatpush1.msra.mxu0 %v1077
    %2040 = vmatprep.subr.mxu0 %v1094
    %2041 = vmatpush1.msra.mxu0 %v1093
    %2042 = vmatprep.subr.mxu0 %v1110
    %2043 = vmatpush1.msra.mxu0 %v1109
    %2044 = vmatprep.mubr.f32.mxu0 %v90
    %2045 = vmatmul.mubr.f32.gmra.mrb[0].mxu0 %v89
    %v2046 = vpop.f32.mrb[0].mxu0
    %v2047 = vadd.f32 %v1976, %v2046
    %v2048 = vpop.f32.mrb[0].mxu0
    %v2049 = vadd.f32 %v1978, %v2048
    %2050 = vdwg.mxu0
    %2051 = vmatprep.subr.mxu0 %v104
    %2052 = vmatpush1.msra.mxu0 %v103
    %2053 = vmatprep.subr.mxu0 %v120
    %2054 = vmatpush1.msra.mxu0 %v119
    %2055 = vmatprep.subr.mxu0 %v136
    %2056 = vmatpush1.msra.mxu0 %v135
    %2057 = vmatprep.subr.mxu0 %v152
    %2058 = vmatpush1.msra.mxu0 %v151
    %2059 = vmatprep.subr.mxu0 %v168
    %2060 = vmatpush1.msra.mxu0 %v167
    %2061 = vmatprep.subr.mxu0 %v184
    %2062 = vmatpush1.msra.mxu0 %v183
    %2063 = vmatprep.subr.mxu0 %v200
    %2064 = vmatpush1.msra.mxu0 %v199
    %2065 = vmatprep.subr.mxu0 %v216
    %2066 = vmatpush1.msra.mxu0 %v215
    %2067 = vmatprep.subr.mxu0 %v232
    %2068 = vmatpush1.msra.mxu0 %v231
    %2069 = vmatprep.subr.mxu0 %v248
    %2070 = vmatpush1.msra.mxu0 %v247
    %2071 = vmatprep.subr.mxu0 %v264
    %2072 = vmatpush1.msra.mxu0 %v263
    %2073 = vmatprep.subr.mxu0 %v280
    %2074 = vmatpush1.msra.mxu0 %v279
    %2075 = vmatprep.subr.mxu0 %v296
    %2076 = vmatpush1.msra.mxu0 %v295
    %2077 = vmatprep.subr.mxu0 %v312
    %2078 = vmatpush1.msra.mxu0 %v311
    %2079 = vmatprep.subr.mxu0 %v328
    %2080 = vmatpush1.msra.mxu0 %v327
    %2081 = vmatprep.subr.mxu0 %v344
    %2082 = vmatpush1.msra.mxu0 %v343
    %2083 = vmatprep.subr.mxu0 %v360
    %2084 = vmatpush1.msra.mxu0 %v359
    %2085 = vmatprep.subr.mxu0 %v376
    %2086 = vmatpush1.msra.mxu0 %v375
    %2087 = vmatprep.subr.mxu0 %v392
    %2088 = vmatpush1.msra.mxu0 %v391
    %2089 = vmatprep.subr.mxu0 %v408
    %2090 = vmatpush1.msra.mxu0 %v407
    %2091 = vmatprep.subr.mxu0 %v424
    %2092 = vmatpush1.msra.mxu0 %v423
    %2093 = vmatprep.subr.mxu0 %v440
    %2094 = vmatpush1.msra.mxu0 %v439
    %2095 = vmatprep.subr.mxu0 %v456
    %2096 = vmatpush1.msra.mxu0 %v455
    %2097 = vmatprep.subr.mxu0 %v472
    %2098 = vmatpush1.msra.mxu0 %v471
    %2099 = vmatprep.subr.mxu0 %v488
    %2100 = vmatpush1.msra.mxu0 %v487
    %2101 = vmatprep.subr.mxu0 %v504
    %2102 = vmatpush1.msra.mxu0 %v503
    %2103 = vmatprep.subr.mxu0 %v520
    %2104 = vmatpush1.msra.mxu0 %v519
    %2105 = vmatprep.subr.mxu0 %v536
    %2106 = vmatpush1.msra.mxu0 %v535
    %2107 = vmatprep.subr.mxu0 %v552
    %2108 = vmatpush1.msra.mxu0 %v551
    %2109 = vmatprep.subr.mxu0 %v568
    %2110 = vmatpush1.msra.mxu0 %v567
    %2111 = vmatprep.subr.mxu0 %v584
    %2112 = vmatpush1.msra.mxu0 %v583
    %2113 = vmatprep.subr.mxu0 %v600
    %2114 = vmatpush1.msra.mxu0 %v599
    %2115 = vmatprep.mubr.f32.mxu0 %v88
    %2116 = vmatmul.mubr.f32.gmra.mrb[0].mxu0 %v87
    %v2117 = vpop.f32.mrb[0].mxu0
    %v2118 = vadd.f32 %v1170, %v2117
    %v2119 = vpop.f32.mrb[0].mxu0
    %v2120 = vadd.f32 %v1174, %v2119
    %2121 = vdwg.mxu0
    %2122 = vmatprep.subr.mxu0 %v616
    %2123 = vmatpush1.msra.mxu0 %v615
    %2124 = vmatprep.subr.mxu0 %v632
    %2125 = vmatpush1.msra.mxu0 %v631
    %2126 = vmatprep.subr.mxu0 %v648
    %2127 = vmatpush1.msra.mxu0 %v647
    %2128 = vmatprep.subr.mxu0 %v664
    %2129 = vmatpush1.msra.mxu0 %v663
    %2130 = vmatprep.subr.mxu0 %v680
    %2131 = vmatpush1.msra.mxu0 %v679
    %2132 = vmatprep.subr.mxu0 %v696
    %2133 = vmatpush1.msra.mxu0 %v695
    %2134 = vmatprep.subr.mxu0 %v712
    %2135 = vmatpush1.msra.mxu0 %v711
    %2136 = vmatprep.subr.mxu0 %v728
    %2137 = vmatpush1.msra.mxu0 %v727
    %2138 = vmatprep.subr.mxu0 %v744
    %2139 = vmatpush1.msra.mxu0 %v743
    %2140 = vmatprep.subr.mxu0 %v760
    %2141 = vmatpush1.msra.mxu0 %v759
    %2142 = vmatprep.subr.mxu0 %v776
    %2143 = vmatpush1.msra.mxu0 %v775
    %2144 = vmatprep.subr.mxu0 %v792
    %2145 = vmatpush1.msra.mxu0 %v791
    %2146 = vmatprep.subr.mxu0 %v808
    %2147 = vmatpush1.msra.mxu0 %v807
    %2148 = vmatprep.subr.mxu0 %v824
    %2149 = vmatpush1.msra.mxu0 %v823
    %2150 = vmatprep.subr.mxu0 %v840
    %2151 = vmatpush1.msra.mxu0 %v839
    %2152 = vmatprep.subr.mxu0 %v856
    %2153 = vmatpush1.msra.mxu0 %v855
    %2154 = vmatprep.subr.mxu0 %v872
    %2155 = vmatpush1.msra.mxu0 %v871
    %2156 = vmatprep.subr.mxu0 %v888
    %2157 = vmatpush1.msra.mxu0 %v887
    %2158 = vmatprep.subr.mxu0 %v904
    %2159 = vmatpush1.msra.mxu0 %v903
    %2160 = vmatprep.subr.mxu0 %v920
    %2161 = vmatpush1.msra.mxu0 %v919
    %2162 = vmatprep.subr.mxu0 %v936
    %2163 = vmatpush1.msra.mxu0 %v935
    %2164 = vmatprep.subr.mxu0 %v952
    %2165 = vmatpush1.msra.mxu0 %v951
    %2166 = vmatprep.subr.mxu0 %v968
    %2167 = vmatpush1.msra.mxu0 %v967
    %2168 = vmatprep.subr.mxu0 %v984
    %2169 = vmatpush1.msra.mxu0 %v983
    %2170 = vmatprep.subr.mxu0 %v1000
    %2171 = vmatpush1.msra.mxu0 %v999
    %2172 = vmatprep.subr.mxu0 %v1016
    %2173 = vmatpush1.msra.mxu0 %v1015
    %2174 = vmatprep.subr.mxu0 %v1032
    %2175 = vmatpush1.msra.mxu0 %v1031
    %2176 = vmatprep.subr.mxu0 %v1048
    %2177 = vmatpush1.msra.mxu0 %v1047
    %2178 = vmatprep.subr.mxu0 %v1064
    %2179 = vmatpush1.msra.mxu0 %v1063
    %2180 = vmatprep.subr.mxu0 %v1080
    %2181 = vmatpush1.msra.mxu0 %v1079
    %2182 = vmatprep.subr.mxu0 %v1096
    %2183 = vmatpush1.msra.mxu0 %v1095
    %2184 = vmatprep.subr.mxu0 %v1112
    %2185 = vmatpush1.msra.mxu0 %v1111
    %2186 = vmatprep.mubr.f32.mxu0 %v90
    %2187 = vmatmul.mubr.f32.gmra.mrb[0].mxu0 %v89
    %v2188 = vpop.f32.mrb[0].mxu0
    %v2189 = vadd.f32 %v2118, %v2188
    %v2190 = vpop.f32.mrb[0].mxu0
    %v2191 = vadd.f32 %v2120, %v2190
    %2192 = vdwg.mxu0
    %2193 = vmatprep.subr.mxu0 %v106
    %2194 = vmatpush1.msra.mxu0 %v105
    %2195 = vmatprep.subr.mxu0 %v122
    %2196 = vmatpush1.msra.mxu0 %v121
    %2197 = vmatprep.subr.mxu0 %v138
    %2198 = vmatpush1.msra.mxu0 %v137
    %2199 = vmatprep.subr.mxu0 %v154
    %2200 = vmatpush1.msra.mxu0 %v153
    %2201 = vmatprep.subr.mxu0 %v170
    %2202 = vmatpush1.msra.mxu0 %v169
    %2203 = vmatprep.subr.mxu0 %v186
    %2204 = vmatpush1.msra.mxu0 %v185
    %2205 = vmatprep.subr.mxu0 %v202
    %2206 = vmatpush1.msra.mxu0 %v201
    %2207 = vmatprep.subr.mxu0 %v218
    %2208 = vmatpush1.msra.mxu0 %v217
    %2209 = vmatprep.subr.mxu0 %v234
    %2210 = vmatpush1.msra.mxu0 %v233
    %2211 = vmatprep.subr.mxu0 %v250
    %2212 = vmatpush1.msra.mxu0 %v249
    %2213 = vmatprep.subr.mxu0 %v266
    %2214 = vmatpush1.msra.mxu0 %v265
    %2215 = vmatprep.subr.mxu0 %v282
    %2216 = vmatpush1.msra.mxu0 %v281
    %2217 = vmatprep.subr.mxu0 %v298
    %2218 = vmatpush1.msra.mxu0 %v297
    %2219 = vmatprep.subr.mxu0 %v314
    %2220 = vmatpush1.msra.mxu0 %v313
    %2221 = vmatprep.subr.mxu0 %v330
    %2222 = vmatpush1.msra.mxu0 %v329
    %2223 = vmatprep.subr.mxu0 %v346
    %2224 = vmatpush1.msra.mxu0 %v345
    %2225 = vmatprep.subr.mxu0 %v362
    %2226 = vmatpush1.msra.mxu0 %v361
    %2227 = vmatprep.subr.mxu0 %v378
    %2228 = vmatpush1.msra.mxu0 %v377
    %2229 = vmatprep.subr.mxu0 %v394
    %2230 = vmatpush1.msra.mxu0 %v393
    %2231 = vmatprep.subr.mxu0 %v410
    %2232 = vmatpush1.msra.mxu0 %v409
    %2233 = vmatprep.subr.mxu0 %v426
    %2234 = vmatpush1.msra.mxu0 %v425
    %2235 = vmatprep.subr.mxu0 %v442
    %2236 = vmatpush1.msra.mxu0 %v441
    %2237 = vmatprep.subr.mxu0 %v458
    %2238 = vmatpush1.msra.mxu0 %v457
    %2239 = vmatprep.subr.mxu0 %v474
    %2240 = vmatpush1.msra.mxu0 %v473
    %2241 = vmatprep.subr.mxu0 %v490
    %2242 = vmatpush1.msra.mxu0 %v489
    %2243 = vmatprep.subr.mxu0 %v506
    %2244 = vmatpush1.msra.mxu0 %v505
    %2245 = vmatprep.subr.mxu0 %v522
    %2246 = vmatpush1.msra.mxu0 %v521
    %2247 = vmatprep.subr.mxu0 %v538
    %2248 = vmatpush1.msra.mxu0 %v537
    %2249 = vmatprep.subr.mxu0 %v554
    %2250 = vmatpush1.msra.mxu0 %v553
    %2251 = vmatprep.subr.mxu0 %v570
    %2252 = vmatpush1.msra.mxu0 %v569
    %2253 = vmatprep.subr.mxu0 %v586
    %2254 = vmatpush1.msra.mxu0 %v585
    %2255 = vmatprep.subr.mxu0 %v602
    %2256 = vmatpush1.msra.mxu0 %v601
    %2257 = vmatprep.mubr.f32.mxu0 %v88
    %2258 = vmatmul.mubr.f32.gmra.mrb[0].mxu0 %v87
    %v2259 = vpop.f32.mrb[0].mxu0
    %v2260 = vadd.f32 %v1178, %v2259
    %v2261 = vpop.f32.mrb[0].mxu0
    %v2262 = vadd.f32 %v1182, %v2261
    %2263 = vdwg.mxu0
    %2264 = vmatprep.subr.mxu0 %v618
    %2265 = vmatpush1.msra.mxu0 %v617
    %2266 = vmatprep.subr.mxu0 %v634
    %2267 = vmatpush1.msra.mxu0 %v633
    %2268 = vmatprep.subr.mxu0 %v650
    %2269 = vmatpush1.msra.mxu0 %v649
    %2270 = vmatprep.subr.mxu0 %v666
    %2271 = vmatpush1.msra.mxu0 %v665
    %2272 = vmatprep.subr.mxu0 %v682
    %2273 = vmatpush1.msra.mxu0 %v681
    %2274 = vmatprep.subr.mxu0 %v698
    %2275 = vmatpush1.msra.mxu0 %v697
    %2276 = vmatprep.subr.mxu0 %v714
    %2277 = vmatpush1.msra.mxu0 %v713
    %2278 = vmatprep.subr.mxu0 %v730
    %2279 = vmatpush1.msra.mxu0 %v729
    %2280 = vmatprep.subr.mxu0 %v746
    %2281 = vmatpush1.msra.mxu0 %v745
    %2282 = vmatprep.subr.mxu0 %v762
    %2283 = vmatpush1.msra.mxu0 %v761
    %2284 = vmatprep.subr.mxu0 %v778
    %2285 = vmatpush1.msra.mxu0 %v777
    %2286 = vmatprep.subr.mxu0 %v794
    %2287 = vmatpush1.msra.mxu0 %v793
    %2288 = vmatprep.subr.mxu0 %v810
    %2289 = vmatpush1.msra.mxu0 %v809
    %2290 = vmatprep.subr.mxu0 %v826
    %2291 = vmatpush1.msra.mxu0 %v825
    %2292 = vmatprep.subr.mxu0 %v842
    %2293 = vmatpush1.msra.mxu0 %v841
    %2294 = vmatprep.subr.mxu0 %v858
    %2295 = vmatpush1.msra.mxu0 %v857
    %2296 = vmatprep.subr.mxu0 %v874
    %2297 = vmatpush1.msra.mxu0 %v873
    %2298 = vmatprep.subr.mxu0 %v890
    %2299 = vmatpush1.msra.mxu0 %v889
    %2300 = vmatprep.subr.mxu0 %v906
    %2301 = vmatpush1.msra.mxu0 %v905
    %2302 = vmatprep.subr.mxu0 %v922
    %2303 = vmatpush1.msra.mxu0 %v921
    %2304 = vmatprep.subr.mxu0 %v938
    %2305 = vmatpush1.msra.mxu0 %v937
    %2306 = vmatprep.subr.mxu0 %v954
    %2307 = vmatpush1.msra.mxu0 %v953
    %2308 = vmatprep.subr.mxu0 %v970
    %2309 = vmatpush1.msra.mxu0 %v969
    %2310 = vmatprep.subr.mxu0 %v986
    %2311 = vmatpush1.msra.mxu0 %v985
    %2312 = vmatprep.subr.mxu0 %v1002
    %2313 = vmatpush1.msra.mxu0 %v1001
    %2314 = vmatprep.subr.mxu0 %v1018
    %2315 = vmatpush1.msra.mxu0 %v1017
    %2316 = vmatprep.subr.mxu0 %v1034
    %2317 = vmatpush1.msra.mxu0 %v1033
    %2318 = vmatprep.subr.mxu0 %v1050
    %2319 = vmatpush1.msra.mxu0 %v1049
    %2320 = vmatprep.subr.mxu0 %v1066
    %2321 = vmatpush1.msra.mxu0 %v1065
    %2322 = vmatprep.subr.mxu0 %v1082
    %2323 = vmatpush1.msra.mxu0 %v1081
    %2324 = vmatprep.subr.mxu0 %v1098
    %2325 = vmatpush1.msra.mxu0 %v1097
    %2326 = vmatprep.subr.mxu0 %v1114
    %2327 = vmatpush1.msra.mxu0 %v1113
    %2328 = vmatprep.mubr.f32.mxu0 %v90
    %2329 = vmatmul.mubr.f32.gmra.mrb[0].mxu0 %v89
    %v2330 = vpop.f32.mrb[0].mxu0
    %v2331 = vadd.f32 %v2260, %v2330
    %v2332 = vpop.f32.mrb[0].mxu0
    %v2333 = vadd.f32 %v2262, %v2332
    %2334 = vdwg.mxu0
    %v2335 = vtanh.pop %v1337
    %v2336 = vtanh.pop %v1339
    %v2337 = vtanh.pop %v1479
    %v2338 = vtanh.pop %v1481
    %v2339 = vtanh.pop %v1621
    %v2340 = vtanh.pop %v1623
    %v2341 = vtanh.pop %v1763
    %v2342 = vtanh.pop %v1765
    %v2343 = vtanh.pop %v1905
    %v2344 = vtanh.pop %v1907
    %v2345 = vtanh.pop %v2047
    %v2346 = vtanh.pop %v2049
    %v2347 = vtanh.pop %v2189
    %v2348 = vtanh.pop %v2191
    %v2349 = vtanh.pop %v2331
    %v2350 = vtanh.pop %v2333
    %v2351 = vld [vmem:[#allocation8] sm:$0xff]
    %v2352 = vld [vmem:[#allocation8 + $0x8] sm:$0xff]
    %v2353 = vld [vmem:[#allocation8 + $0x10] sm:$0xff]
    %v2354 = vld [vmem:[#allocation8 + $0x18] sm:$0xff]
    %v2355 = vld [vmem:[#allocation8 + $0x20] sm:$0xff]
    %v2356 = vld [vmem:[#allocation8 + $0x28] sm:$0xff]
    %v2357 = vld [vmem:[#allocation8 + $0x30] sm:$0xff]
    %v2358 = vld [vmem:[#allocation8 + $0x38] sm:$0xff]
    %v2359 = vld [vmem:[#allocation8 + $0x40] sm:$0xff]
    %v2360 = vld [vmem:[#allocation8 + $0x48] sm:$0xff]
    %v2361 = vld [vmem:[#allocation8 + $0x50] sm:$0xff]
    %v2362 = vld [vmem:[#allocation8 + $0x58] sm:$0xff]
    %v2363 = vld [vmem:[#allocation8 + $0x60] sm:$0xff]
    %v2364 = vld [vmem:[#allocation8 + $0x68] sm:$0xff]
    %v2365 = vld [vmem:[#allocation8 + $0x70] sm:$0xff]
    %v2366 = vld [vmem:[#allocation8 + $0x78] sm:$0xff]
    %v2367 = vld [vmem:[#allocation8 + $0x80] sm:$0xff]
    %v2368 = vld [vmem:[#allocation8 + $0x88] sm:$0xff]
    %v2369 = vld [vmem:[#allocation8 + $0x90] sm:$0xff]
    %v2370 = vld [vmem:[#allocation8 + $0x98] sm:$0xff]
    %v2371 = vld [vmem:[#allocation8 + $0xa0] sm:$0xff]
    %v2372 = vld [vmem:[#allocation8 + $0xa8] sm:$0xff]
    %v2373 = vld [vmem:[#allocation8 + $0xb0] sm:$0xff]
    %v2374 = vld [vmem:[#allocation8 + $0xb8] sm:$0xff]
    %v2375 = vld [vmem:[#allocation8 + $0xc0] sm:$0xff]
    %v2376 = vld [vmem:[#allocation8 + $0xc8] sm:$0xff]
    %v2377 = vld [vmem:[#allocation8 + $0xd0] sm:$0xff]
    %v2378 = vld [vmem:[#allocation8 + $0xd8] sm:$0xff]
    %v2379 = vld [vmem:[#allocation8 + $0xe0] sm:$0xff]
    %v2380 = vld [vmem:[#allocation8 + $0xe8] sm:$0xff]
    %v2381 = vld [vmem:[#allocation8 + $0xf0] sm:$0xff]
    %v2382 = vld [vmem:[#allocation8 + $0xf8] sm:$0xff]
    %v2383 = vld [vmem:[#allocation8 + $0x100] sm:$0xff]
    %v2384 = vld [vmem:[#allocation8 + $0x108] sm:$0xff]
    %v2385 = vld [vmem:[#allocation8 + $0x110] sm:$0xff]
    %v2386 = vld [vmem:[#allocation8 + $0x118] sm:$0xff]
    %v2387 = vld [vmem:[#allocation8 + $0x120] sm:$0xff]
    %v2388 = vld [vmem:[#allocation8 + $0x128] sm:$0xff]
    %v2389 = vld [vmem:[#allocation8 + $0x130] sm:$0xff]
    %v2390 = vld [vmem:[#allocation8 + $0x138] sm:$0xff]
    %v2391 = vld [vmem:[#allocation8 + $0x140] sm:$0xff]
    %v2392 = vld [vmem:[#allocation8 + $0x148] sm:$0xff]
    %v2393 = vld [vmem:[#allocation8 + $0x150] sm:$0xff]
    %v2394 = vld [vmem:[#allocation8 + $0x158] sm:$0xff]
    %v2395 = vld [vmem:[#allocation8 + $0x160] sm:$0xff]
    %v2396 = vld [vmem:[#allocation8 + $0x168] sm:$0xff]
    %v2397 = vld [vmem:[#allocation8 + $0x170] sm:$0xff]
    %v2398 = vld [vmem:[#allocation8 + $0x178] sm:$0xff]
    %v2399 = vld [vmem:[#allocation8 + $0x180] sm:$0xff]
    %v2400 = vld [vmem:[#allocation8 + $0x188] sm:$0xff]
    %v2401 = vld [vmem:[#allocation8 + $0x190] sm:$0xff]
    %v2402 = vld [vmem:[#allocation8 + $0x198] sm:$0xff]
    %v2403 = vld [vmem:[#allocation8 + $0x1a0] sm:$0xff]
    %v2404 = vld [vmem:[#allocation8 + $0x1a8] sm:$0xff]
    %v2405 = vld [vmem:[#allocation8 + $0x1b0] sm:$0xff]
    %v2406 = vld [vmem:[#allocation8 + $0x1b8] sm:$0xff]
    %v2407 = vld [vmem:[#allocation8 + $0x1c0] sm:$0xff]
    %v2408 = vld [vmem:[#allocation8 + $0x1c8] sm:$0xff]
    %v2409 = vld [vmem:[#allocation8 + $0x1d0] sm:$0xff]
    %v2410 = vld [vmem:[#allocation8 + $0x1d8] sm:$0xff]
    %v2411 = vld [vmem:[#allocation8 + $0x1e0] sm:$0xff]
    %v2412 = vld [vmem:[#allocation8 + $0x1e8] sm:$0xff]
    %v2413 = vld [vmem:[#allocation8 + $0x1f0] sm:$0xff]
    %v2414 = vld [vmem:[#allocation8 + $0x1f8] sm:$0xff]
    %v2415 = vld [vmem:[#allocation8 + $0x200] sm:$0xff]
    %v2416 = vld [vmem:[#allocation8 + $0x208] sm:$0xff]
    %v2417 = vld [vmem:[#allocation8 + $0x210] sm:$0xff]
    %v2418 = vld [vmem:[#allocation8 + $0x218] sm:$0xff]
    %v2419 = vld [vmem:[#allocation8 + $0x220] sm:$0xff]
    %v2420 = vld [vmem:[#allocation8 + $0x228] sm:$0xff]
    %v2421 = vld [vmem:[#allocation8 + $0x230] sm:$0xff]
    %v2422 = vld [vmem:[#allocation8 + $0x238] sm:$0xff]
    %v2423 = vld [vmem:[#allocation8 + $0x240] sm:$0xff]
    %v2424 = vld [vmem:[#allocation8 + $0x248] sm:$0xff]
    %v2425 = vld [vmem:[#allocation8 + $0x250] sm:$0xff]
    %v2426 = vld [vmem:[#allocation8 + $0x258] sm:$0xff]
    %v2427 = vld [vmem:[#allocation8 + $0x260] sm:$0xff]
    %v2428 = vld [vmem:[#allocation8 + $0x268] sm:$0xff]
    %v2429 = vld [vmem:[#allocation8 + $0x270] sm:$0xff]
    %v2430 = vld [vmem:[#allocation8 + $0x278] sm:$0xff]
    %v2431 = vld [vmem:[#allocation8 + $0x280] sm:$0xff]
    %v2432 = vld [vmem:[#allocation8 + $0x288] sm:$0xff]
    %v2433 = vld [vmem:[#allocation8 + $0x290] sm:$0xff]
    %v2434 = vld [vmem:[#allocation8 + $0x298] sm:$0xff]
    %v2435 = vld [vmem:[#allocation8 + $0x2a0] sm:$0xff]
    %v2436 = vld [vmem:[#allocation8 + $0x2a8] sm:$0xff]
    %v2437 = vld [vmem:[#allocation8 + $0x2b0] sm:$0xff]
    %v2438 = vld [vmem:[#allocation8 + $0x2b8] sm:$0xff]
    %v2439 = vld [vmem:[#allocation8 + $0x2c0] sm:$0xff]
    %v2440 = vld [vmem:[#allocation8 + $0x2c8] sm:$0xff]
    %v2441 = vld [vmem:[#allocation8 + $0x2d0] sm:$0xff]
    %v2442 = vld [vmem:[#allocation8 + $0x2d8] sm:$0xff]
    %v2443 = vld [vmem:[#allocation8 + $0x2e0] sm:$0xff]
    %v2444 = vld [vmem:[#allocation8 + $0x2e8] sm:$0xff]
    %v2445 = vld [vmem:[#allocation8 + $0x2f0] sm:$0xff]
    %v2446 = vld [vmem:[#allocation8 + $0x2f8] sm:$0xff]
    %v2447 = vld [vmem:[#allocation8 + $0x300] sm:$0xff]
    %v2448 = vld [vmem:[#allocation8 + $0x308] sm:$0xff]
    %v2449 = vld [vmem:[#allocation8 + $0x310] sm:$0xff]
    %v2450 = vld [vmem:[#allocation8 + $0x318] sm:$0xff]
    %v2451 = vld [vmem:[#allocation8 + $0x320] sm:$0xff]
    %v2452 = vld [vmem:[#allocation8 + $0x328] sm:$0xff]
    %v2453 = vld [vmem:[#allocation8 + $0x330] sm:$0xff]
    %v2454 = vld [vmem:[#allocation8 + $0x338] sm:$0xff]
    %v2455 = vld [vmem:[#allocation8 + $0x340] sm:$0xff]
    %v2456 = vld [vmem:[#allocation8 + $0x348] sm:$0xff]
    %v2457 = vld [vmem:[#allocation8 + $0x350] sm:$0xff]
    %v2458 = vld [vmem:[#allocation8 + $0x358] sm:$0xff]
    %v2459 = vld [vmem:[#allocation8 + $0x360] sm:$0xff]
    %v2460 = vld [vmem:[#allocation8 + $0x368] sm:$0xff]
    %v2461 = vld [vmem:[#allocation8 + $0x370] sm:$0xff]
    %v2462 = vld [vmem:[#allocation8 + $0x378] sm:$0xff]
    %v2463 = vld [vmem:[#allocation8 + $0x380] sm:$0xff]
    %v2464 = vld [vmem:[#allocation8 + $0x388] sm:$0xff]
    %v2465 = vld [vmem:[#allocation8 + $0x390] sm:$0xff]
    %v2466 = vld [vmem:[#allocation8 + $0x398] sm:$0xff]
    %v2467 = vld [vmem:[#allocation8 + $0x3a0] sm:$0xff]
    %v2468 = vld [vmem:[#allocation8 + $0x3a8] sm:$0xff]
    %v2469 = vld [vmem:[#allocation8 + $0x3b0] sm:$0xff]
    %v2470 = vld [vmem:[#allocation8 + $0x3b8] sm:$0xff]
    %v2471 = vld [vmem:[#allocation8 + $0x3c0] sm:$0xff]
    %v2472 = vld [vmem:[#allocation8 + $0x3c8] sm:$0xff]
    %v2473 = vld [vmem:[#allocation8 + $0x3d0] sm:$0xff]
    %v2474 = vld [vmem:[#allocation8 + $0x3d8] sm:$0xff]
    %v2475 = vld [vmem:[#allocation8 + $0x3e0] sm:$0xff]
    %v2476 = vld [vmem:[#allocation8 + $0x3e8] sm:$0xff]
    %v2477 = vld [vmem:[#allocation8 + $0x3f0] sm:$0xff]
    %v2478 = vld [vmem:[#allocation8 + $0x3f8] sm:$0xff]
    %v2479 = vld [vmem:[#allocation8 + $0x400] sm:$0xff]
    %v2480 = vld [vmem:[#allocation8 + $0x408] sm:$0xff]
    %v2481 = vld [vmem:[#allocation8 + $0x410] sm:$0xff]
    %v2482 = vld [vmem:[#allocation8 + $0x418] sm:$0xff]
    %v2483 = vld [vmem:[#allocation8 + $0x420] sm:$0xff]
    %v2484 = vld [vmem:[#allocation8 + $0x428] sm:$0xff]
    %v2485 = vld [vmem:[#allocation8 + $0x430] sm:$0xff]
    %v2486 = vld [vmem:[#allocation8 + $0x438] sm:$0xff]
    %v2487 = vld [vmem:[#allocation8 + $0x440] sm:$0xff]
    %v2488 = vld [vmem:[#allocation8 + $0x448] sm:$0xff]
    %v2489 = vld [vmem:[#allocation8 + $0x450] sm:$0xff]
    %v2490 = vld [vmem:[#allocation8 + $0x458] sm:$0xff]
    %v2491 = vld [vmem:[#allocation8 + $0x460] sm:$0xff]
    %v2492 = vld [vmem:[#allocation8 + $0x468] sm:$0xff]
    %v2493 = vld [vmem:[#allocation8 + $0x470] sm:$0xff]
    %v2494 = vld [vmem:[#allocation8 + $0x478] sm:$0xff]
    %v2495 = vld [vmem:[#allocation8 + $0x480] sm:$0xff]
    %v2496 = vld [vmem:[#allocation8 + $0x488] sm:$0xff]
    %v2497 = vld [vmem:[#allocation8 + $0x490] sm:$0xff]
    %v2498 = vld [vmem:[#allocation8 + $0x498] sm:$0xff]
    %v2499 = vld [vmem:[#allocation8 + $0x4a0] sm:$0xff]
    %v2500 = vld [vmem:[#allocation8 + $0x4a8] sm:$0xff]
    %v2501 = vld [vmem:[#allocation8 + $0x4b0] sm:$0xff]
    %v2502 = vld [vmem:[#allocation8 + $0x4b8] sm:$0xff]
    %v2503 = vld [vmem:[#allocation8 + $0x4c0] sm:$0xff]
    %v2504 = vld [vmem:[#allocation8 + $0x4c8] sm:$0xff]
    %v2505 = vld [vmem:[#allocation8 + $0x4d0] sm:$0xff]
    %v2506 = vld [vmem:[#allocation8 + $0x4d8] sm:$0xff]
    %v2507 = vld [vmem:[#allocation8 + $0x4e0] sm:$0xff]
    %v2508 = vld [vmem:[#allocation8 + $0x4e8] sm:$0xff]
    %v2509 = vld [vmem:[#allocation8 + $0x4f0] sm:$0xff]
    %v2510 = vld [vmem:[#allocation8 + $0x4f8] sm:$0xff]
    %v2511 = vld [vmem:[#allocation8 + $0x500] sm:$0xff]
    %v2512 = vld [vmem:[#allocation8 + $0x508] sm:$0xff]
    %v2513 = vld [vmem:[#allocation8 + $0x510] sm:$0xff]
    %v2514 = vld [vmem:[#allocation8 + $0x518] sm:$0xff]
    %v2515 = vld [vmem:[#allocation8 + $0x520] sm:$0xff]
    %v2516 = vld [vmem:[#allocation8 + $0x528] sm:$0xff]
    %v2517 = vld [vmem:[#allocation8 + $0x530] sm:$0xff]
    %v2518 = vld [vmem:[#allocation8 + $0x538] sm:$0xff]
    %v2519 = vld [vmem:[#allocation8 + $0x540] sm:$0xff]
    %v2520 = vld [vmem:[#allocation8 + $0x548] sm:$0xff]
    %v2521 = vld [vmem:[#allocation8 + $0x550] sm:$0xff]
    %v2522 = vld [vmem:[#allocation8 + $0x558] sm:$0xff]
    %v2523 = vld [vmem:[#allocation8 + $0x560] sm:$0xff]
    %v2524 = vld [vmem:[#allocation8 + $0x568] sm:$0xff]
    %v2525 = vld [vmem:[#allocation8 + $0x570] sm:$0xff]
    %v2526 = vld [vmem:[#allocation8 + $0x578] sm:$0xff]
    %v2527 = vld [vmem:[#allocation8 + $0x580] sm:$0xff]
    %v2528 = vld [vmem:[#allocation8 + $0x588] sm:$0xff]
    %v2529 = vld [vmem:[#allocation8 + $0x590] sm:$0xff]
    %v2530 = vld [vmem:[#allocation8 + $0x598] sm:$0xff]
    %v2531 = vld [vmem:[#allocation8 + $0x5a0] sm:$0xff]
    %v2532 = vld [vmem:[#allocation8 + $0x5a8] sm:$0xff]
    %v2533 = vld [vmem:[#allocation8 + $0x5b0] sm:$0xff]
    %v2534 = vld [vmem:[#allocation8 + $0x5b8] sm:$0xff]
    %v2535 = vld [vmem:[#allocation8 + $0x5c0] sm:$0xff]
    %v2536 = vld [vmem:[#allocation8 + $0x5c8] sm:$0xff]
    %v2537 = vld [vmem:[#allocation8 + $0x5d0] sm:$0xff]
    %v2538 = vld [vmem:[#allocation8 + $0x5d8] sm:$0xff]
    %v2539 = vld [vmem:[#allocation8 + $0x5e0] sm:$0xff]
    %v2540 = vld [vmem:[#allocation8 + $0x5e8] sm:$0xff]
    %v2541 = vld [vmem:[#allocation8 + $0x5f0] sm:$0xff]
    %v2542 = vld [vmem:[#allocation8 + $0x5f8] sm:$0xff]
    %v2543 = vld [vmem:[#allocation8 + $0x600] sm:$0xff]
    %v2544 = vld [vmem:[#allocation8 + $0x608] sm:$0xff]
    %v2545 = vld [vmem:[#allocation8 + $0x610] sm:$0xff]
    %v2546 = vld [vmem:[#allocation8 + $0x618] sm:$0xff]
    %v2547 = vld [vmem:[#allocation8 + $0x620] sm:$0xff]
    %v2548 = vld [vmem:[#allocation8 + $0x628] sm:$0xff]
    %v2549 = vld [vmem:[#allocation8 + $0x630] sm:$0xff]
    %v2550 = vld [vmem:[#allocation8 + $0x638] sm:$0xff]
    %v2551 = vld [vmem:[#allocation8 + $0x640] sm:$0xff]
    %v2552 = vld [vmem:[#allocation8 + $0x648] sm:$0xff]
    %v2553 = vld [vmem:[#allocation8 + $0x650] sm:$0xff]
    %v2554 = vld [vmem:[#allocation8 + $0x658] sm:$0xff]
    %v2555 = vld [vmem:[#allocation8 + $0x660] sm:$0xff]
    %v2556 = vld [vmem:[#allocation8 + $0x668] sm:$0xff]
    %v2557 = vld [vmem:[#allocation8 + $0x670] sm:$0xff]
    %v2558 = vld [vmem:[#allocation8 + $0x678] sm:$0xff]
    %v2559 = vld [vmem:[#allocation8 + $0x680] sm:$0xff]
    %v2560 = vld [vmem:[#allocation8 + $0x688] sm:$0xff]
    %v2561 = vld [vmem:[#allocation8 + $0x690] sm:$0xff]
    %v2562 = vld [vmem:[#allocation8 + $0x698] sm:$0xff]
    %v2563 = vld [vmem:[#allocation8 + $0x6a0] sm:$0xff]
    %v2564 = vld [vmem:[#allocation8 + $0x6a8] sm:$0xff]
    %v2565 = vld [vmem:[#allocation8 + $0x6b0] sm:$0xff]
    %v2566 = vld [vmem:[#allocation8 + $0x6b8] sm:$0xff]
    %v2567 = vld [vmem:[#allocation8 + $0x6c0] sm:$0xff]
    %v2568 = vld [vmem:[#allocation8 + $0x6c8] sm:$0xff]
    %v2569 = vld [vmem:[#allocation8 + $0x6d0] sm:$0xff]
    %v2570 = vld [vmem:[#allocation8 + $0x6d8] sm:$0xff]
    %v2571 = vld [vmem:[#allocation8 + $0x6e0] sm:$0xff]
    %v2572 = vld [vmem:[#allocation8 + $0x6e8] sm:$0xff]
    %v2573 = vld [vmem:[#allocation8 + $0x6f0] sm:$0xff]
    %v2574 = vld [vmem:[#allocation8 + $0x6f8] sm:$0xff]
    %v2575 = vld [vmem:[#allocation8 + $0x700] sm:$0xff]
    %v2576 = vld [vmem:[#allocation8 + $0x708] sm:$0xff]
    %v2577 = vld [vmem:[#allocation8 + $0x710] sm:$0xff]
    %v2578 = vld [vmem:[#allocation8 + $0x718] sm:$0xff]
    %v2579 = vld [vmem:[#allocation8 + $0x720] sm:$0xff]
    %v2580 = vld [vmem:[#allocation8 + $0x728] sm:$0xff]
    %v2581 = vld [vmem:[#allocation8 + $0x730] sm:$0xff]
    %v2582 = vld [vmem:[#allocation8 + $0x738] sm:$0xff]
    %v2583 = vld [vmem:[#allocation8 + $0x740] sm:$0xff]
    %v2584 = vld [vmem:[#allocation8 + $0x748] sm:$0xff]
    %v2585 = vld [vmem:[#allocation8 + $0x750] sm:$0xff]
    %v2586 = vld [vmem:[#allocation8 + $0x758] sm:$0xff]
    %v2587 = vld [vmem:[#allocation8 + $0x760] sm:$0xff]
    %v2588 = vld [vmem:[#allocation8 + $0x768] sm:$0xff]
    %v2589 = vld [vmem:[#allocation8 + $0x770] sm:$0xff]
    %v2590 = vld [vmem:[#allocation8 + $0x778] sm:$0xff]
    %v2591 = vld [vmem:[#allocation8 + $0x780] sm:$0xff]
    %v2592 = vld [vmem:[#allocation8 + $0x788] sm:$0xff]
    %v2593 = vld [vmem:[#allocation8 + $0x790] sm:$0xff]
    %v2594 = vld [vmem:[#allocation8 + $0x798] sm:$0xff]
    %v2595 = vld [vmem:[#allocation8 + $0x7a0] sm:$0xff]
    %v2596 = vld [vmem:[#allocation8 + $0x7a8] sm:$0xff]
    %v2597 = vld [vmem:[#allocation8 + $0x7b0] sm:$0xff]
    %v2598 = vld [vmem:[#allocation8 + $0x7b8] sm:$0xff]
    %v2599 = vld [vmem:[#allocation8 + $0x7c0] sm:$0xff]
    %v2600 = vld [vmem:[#allocation8 + $0x7c8] sm:$0xff]
    %v2601 = vld [vmem:[#allocation8 + $0x7d0] sm:$0xff]
    %v2602 = vld [vmem:[#allocation8 + $0x7d8] sm:$0xff]
    %v2603 = vld [vmem:[#allocation8 + $0x7e0] sm:$0xff]
    %v2604 = vld [vmem:[#allocation8 + $0x7e8] sm:$0xff]
    %v2605 = vld [vmem:[#allocation8 + $0x7f0] sm:$0xff]
    %v2606 = vld [vmem:[#allocation8 + $0x7f8] sm:$0xff]
    %v2607 = vld [vmem:[#allocation10] sm:$0x1]
    %v2609 = vlaneseq
    %v2610 = vshrl.u32 %v2609, 7
    %v2611 = vsub.s32 0, %v2610
    %v2612 = vrot.slane %v2607, %v2611
    %2614 = vmatprep.subr.mxu0 0.0
    %2615 = vmatpush1.msra.mxu0 %v2351
    %2616 = vmatprep.subr.mxu0 0.0
    %2617 = vmatpush1.msra.mxu0 %v2352
    %2618 = vmatprep.subr.mxu0 0.0
    %2619 = vmatpush1.msra.mxu0 %v2353
    %2620 = vmatprep.subr.mxu0 0.0
    %2621 = vmatpush1.msra.mxu0 %v2354
    %2622 = vmatprep.subr.mxu0 0.0
    %2623 = vmatpush1.msra.mxu0 %v2355
    %2624 = vmatprep.subr.mxu0 0.0
    %2625 = vmatpush1.msra.mxu0 %v2356
    %2626 = vmatprep.subr.mxu0 0.0
    %2627 = vmatpush1.msra.mxu0 %v2357
    %2628 = vmatprep.subr.mxu0 0.0
    %2629 = vmatpush1.msra.mxu0 %v2358
    %2630 = vmatprep.subr.mxu0 0.0
    %2631 = vmatpush1.msra.mxu0 %v2359
    %2632 = vmatprep.subr.mxu0 0.0
    %2633 = vmatpush1.msra.mxu0 %v2360
    %2634 = vmatprep.subr.mxu0 0.0
    %2635 = vmatpush1.msra.mxu0 %v2361
    %2636 = vmatprep.subr.mxu0 0.0
    %2637 = vmatpush1.msra.mxu0 %v2362
    %2638 = vmatprep.subr.mxu0 0.0
    %2639 = vmatpush1.msra.mxu0 %v2363
    %2640 = vmatprep.subr.mxu0 0.0
    %2641 = vmatpush1.msra.mxu0 %v2364
    %2642 = vmatprep.subr.mxu0 0.0
    %2643 = vmatpush1.msra.mxu0 %v2365
    %2644 = vmatprep.subr.mxu0 0.0
    %2645 = vmatpush1.msra.mxu0 %v2366
    %2646 = vmatprep.subr.mxu0 0.0
    %2647 = vmatpush1.msra.mxu0 %v2367
    %2648 = vmatprep.subr.mxu0 0.0
    %2649 = vmatpush1.msra.mxu0 %v2368
    %2650 = vmatprep.subr.mxu0 0.0
    %2651 = vmatpush1.msra.mxu0 %v2369
    %2652 = vmatprep.subr.mxu0 0.0
    %2653 = vmatpush1.msra.mxu0 %v2370
    %2654 = vmatprep.subr.mxu0 0.0
    %2655 = vmatpush1.msra.mxu0 %v2371
    %2656 = vmatprep.subr.mxu0 0.0
    %2657 = vmatpush1.msra.mxu0 %v2372
    %2658 = vmatprep.subr.mxu0 0.0
    %2659 = vmatpush1.msra.mxu0 %v2373
    %2660 = vmatprep.subr.mxu0 0.0
    %2661 = vmatpush1.msra.mxu0 %v2374
    %2662 = vmatprep.subr.mxu0 0.0
    %2663 = vmatpush1.msra.mxu0 %v2375
    %2664 = vmatprep.subr.mxu0 0.0
    %2665 = vmatpush1.msra.mxu0 %v2376
    %2666 = vmatprep.subr.mxu0 0.0
    %2667 = vmatpush1.msra.mxu0 %v2377
    %2668 = vmatprep.subr.mxu0 0.0
    %2669 = vmatpush1.msra.mxu0 %v2378
    %2670 = vmatprep.subr.mxu0 0.0
    %2671 = vmatpush1.msra.mxu0 %v2379
    %2672 = vmatprep.subr.mxu0 0.0
    %2673 = vmatpush1.msra.mxu0 %v2380
    %2674 = vmatprep.subr.mxu0 0.0
    %2675 = vmatpush1.msra.mxu0 %v2381
    %2676 = vmatprep.subr.mxu0 0.0
    %2677 = vmatpush1.msra.mxu0 %v2382
    %2678 = vmatprep.mubr.f32.mxu0 %v2336
    %2679 = vmatmul.mubr.f32.gmra.mrb[0].mxu0 %v2335
    %v2680 = vpop.f32.mrb[0].mxu0
    %v2681 = vadd.f32 %v2612, %v2680
    %v2682 = vpop.f32.mrb[0].mxu0
    %2683 = vdwg.mxu0
    %2684 = vmatprep.subr.mxu0 0.0
    %2685 = vmatpush1.msra.mxu0 %v2383
    %2686 = vmatprep.subr.mxu0 0.0
    %2687 = vmatpush1.msra.mxu0 %v2384
    %2688 = vmatprep.subr.mxu0 0.0
    %2689 = vmatpush1.msra.mxu0 %v2385
    %2690 = vmatprep.subr.mxu0 0.0
    %2691 = vmatpush1.msra.mxu0 %v2386
    %2692 = vmatprep.subr.mxu0 0.0
    %2693 = vmatpush1.msra.mxu0 %v2387
    %2694 = vmatprep.subr.mxu0 0.0
    %2695 = vmatpush1.msra.mxu0 %v2388
    %2696 = vmatprep.subr.mxu0 0.0
    %2697 = vmatpush1.msra.mxu0 %v2389
    %2698 = vmatprep.subr.mxu0 0.0
    %2699 = vmatpush1.msra.mxu0 %v2390
    %2700 = vmatprep.subr.mxu0 0.0
    %2701 = vmatpush1.msra.mxu0 %v2391
    %2702 = vmatprep.subr.mxu0 0.0
    %2703 = vmatpush1.msra.mxu0 %v2392
    %2704 = vmatprep.subr.mxu0 0.0
    %2705 = vmatpush1.msra.mxu0 %v2393
    %2706 = vmatprep.subr.mxu0 0.0
    %2707 = vmatpush1.msra.mxu0 %v2394
    %2708 = vmatprep.subr.mxu0 0.0
    %2709 = vmatpush1.msra.mxu0 %v2395
    %2710 = vmatprep.subr.mxu0 0.0
    %2711 = vmatpush1.msra.mxu0 %v2396
    %2712 = vmatprep.subr.mxu0 0.0
    %2713 = vmatpush1.msra.mxu0 %v2397
    %2714 = vmatprep.subr.mxu0 0.0
    %2715 = vmatpush1.msra.mxu0 %v2398
    %2716 = vmatprep.subr.mxu0 0.0
    %2717 = vmatpush1.msra.mxu0 %v2399
    %2718 = vmatprep.subr.mxu0 0.0
    %2719 = vmatpush1.msra.mxu0 %v2400
    %2720 = vmatprep.subr.mxu0 0.0
    %2721 = vmatpush1.msra.mxu0 %v2401
    %2722 = vmatprep.subr.mxu0 0.0
    %2723 = vmatpush1.msra.mxu0 %v2402
    %2724 = vmatprep.subr.mxu0 0.0
    %2725 = vmatpush1.msra.mxu0 %v2403
    %2726 = vmatprep.subr.mxu0 0.0
    %2727 = vmatpush1.msra.mxu0 %v2404
    %2728 = vmatprep.subr.mxu0 0.0
    %2729 = vmatpush1.msra.mxu0 %v2405
    %2730 = vmatprep.subr.mxu0 0.0
    %2731 = vmatpush1.msra.mxu0 %v2406
    %2732 = vmatprep.subr.mxu0 0.0
    %2733 = vmatpush1.msra.mxu0 %v2407
    %2734 = vmatprep.subr.mxu0 0.0
    %2735 = vmatpush1.msra.mxu0 %v2408
    %2736 = vmatprep.subr.mxu0 0.0
    %2737 = vmatpush1.msra.mxu0 %v2409
    %2738 = vmatprep.subr.mxu0 0.0
    %2739 = vmatpush1.msra.mxu0 %v2410
    %2740 = vmatprep.subr.mxu0 0.0
    %2741 = vmatpush1.msra.mxu0 %v2411
    %2742 = vmatprep.subr.mxu0 0.0
    %2743 = vmatpush1.msra.mxu0 %v2412
    %2744 = vmatprep.subr.mxu0 0.0
    %2745 = vmatpush1.msra.mxu0 %v2413
    %2746 = vmatprep.subr.mxu0 0.0
    %2747 = vmatpush1.msra.mxu0 %v2414
    %2748 = vmatprep.mubr.f32.mxu0 %v2338
    %2749 = vmatmul.mubr.f32.gmra.mrb[0].mxu0 %v2337
    %v2750 = vpop.f32.mrb[0].mxu0
    %v2751 = vadd.f32 %v2681, %v2750
    %v2752 = vpop.f32.mrb[0].mxu0
    %2753 = vdwg.mxu0
    %2754 = vmatprep.subr.mxu0 0.0
    %2755 = vmatpush1.msra.mxu0 %v2415
    %2756 = vmatprep.subr.mxu0 0.0
    %2757 = vmatpush1.msra.mxu0 %v2416
    %2758 = vmatprep.subr.mxu0 0.0
    %2759 = vmatpush1.msra.mxu0 %v2417
    %2760 = vmatprep.subr.mxu0 0.0
    %2761 = vmatpush1.msra.mxu0 %v2418
    %2762 = vmatprep.subr.mxu0 0.0
    %2763 = vmatpush1.msra.mxu0 %v2419
    %2764 = vmatprep.subr.mxu0 0.0
    %2765 = vmatpush1.msra.mxu0 %v2420
    %2766 = vmatprep.subr.mxu0 0.0
    %2767 = vmatpush1.msra.mxu0 %v2421
    %2768 = vmatprep.subr.mxu0 0.0
    %2769 = vmatpush1.msra.mxu0 %v2422
    %2770 = vmatprep.subr.mxu0 0.0
    %2771 = vmatpush1.msra.mxu0 %v2423
    %2772 = vmatprep.subr.mxu0 0.0
    %2773 = vmatpush1.msra.mxu0 %v2424
    %2774 = vmatprep.subr.mxu0 0.0
    %2775 = vmatpush1.msra.mxu0 %v2425
    %2776 = vmatprep.subr.mxu0 0.0
    %2777 = vmatpush1.msra.mxu0 %v2426
    %2778 = vmatprep.subr.mxu0 0.0
    %2779 = vmatpush1.msra.mxu0 %v2427
    %2780 = vmatprep.subr.mxu0 0.0
    %2781 = vmatpush1.msra.mxu0 %v2428
    %2782 = vmatprep.subr.mxu0 0.0
    %2783 = vmatpush1.msra.mxu0 %v2429
    %2784 = vmatprep.subr.mxu0 0.0
    %2785 = vmatpush1.msra.mxu0 %v2430
    %2786 = vmatprep.subr.mxu0 0.0
    %2787 = vmatpush1.msra.mxu0 %v2431
    %2788 = vmatprep.subr.mxu0 0.0
    %2789 = vmatpush1.msra.mxu0 %v2432
    %2790 = vmatprep.subr.mxu0 0.0
    %2791 = vmatpush1.msra.mxu0 %v2433
    %2792 = vmatprep.subr.mxu0 0.0
    %2793 = vmatpush1.msra.mxu0 %v2434
    %2794 = vmatprep.subr.mxu0 0.0
    %2795 = vmatpush1.msra.mxu0 %v2435
    %2796 = vmatprep.subr.mxu0 0.0
    %2797 = vmatpush1.msra.mxu0 %v2436
    %2798 = vmatprep.subr.mxu0 0.0
    %2799 = vmatpush1.msra.mxu0 %v2437
    %2800 = vmatprep.subr.mxu0 0.0
    %2801 = vmatpush1.msra.mxu0 %v2438
    %2802 = vmatprep.subr.mxu0 0.0
    %2803 = vmatpush1.msra.mxu0 %v2439
    %2804 = vmatprep.subr.mxu0 0.0
    %2805 = vmatpush1.msra.mxu0 %v2440
    %2806 = vmatprep.subr.mxu0 0.0
    %2807 = vmatpush1.msra.mxu0 %v2441
    %2808 = vmatprep.subr.mxu0 0.0
    %2809 = vmatpush1.msra.mxu0 %v2442
    %2810 = vmatprep.subr.mxu0 0.0
    %2811 = vmatpush1.msra.mxu0 %v2443
    %2812 = vmatprep.subr.mxu0 0.0
    %2813 = vmatpush1.msra.mxu0 %v2444
    %2814 = vmatprep.subr.mxu0 0.0
    %2815 = vmatpush1.msra.mxu0 %v2445
    %2816 = vmatprep.subr.mxu0 0.0
    %2817 = vmatpush1.msra.mxu0 %v2446
    %2818 = vmatprep.mubr.f32.mxu0 %v2340
    %2819 = vmatmul.mubr.f32.gmra.mrb[0].mxu0 %v2339
    %v2820 = vpop.f32.mrb[0].mxu0
    %v2821 = vadd.f32 %v2751, %v2820
    %v2822 = vpop.f32.mrb[0].mxu0
    %2823 = vdwg.mxu0
    %2824 = vmatprep.subr.mxu0 0.0
    %2825 = vmatpush1.msra.mxu0 %v2447
    %2826 = vmatprep.subr.mxu0 0.0
    %2827 = vmatpush1.msra.mxu0 %v2448
    %2828 = vmatprep.subr.mxu0 0.0
    %2829 = vmatpush1.msra.mxu0 %v2449
    %2830 = vmatprep.subr.mxu0 0.0
    %2831 = vmatpush1.msra.mxu0 %v2450
    %2832 = vmatprep.subr.mxu0 0.0
    %2833 = vmatpush1.msra.mxu0 %v2451
    %2834 = vmatprep.subr.mxu0 0.0
    %2835 = vmatpush1.msra.mxu0 %v2452
    %2836 = vmatprep.subr.mxu0 0.0
    %2837 = vmatpush1.msra.mxu0 %v2453
    %2838 = vmatprep.subr.mxu0 0.0
    %2839 = vmatpush1.msra.mxu0 %v2454
    %2840 = vmatprep.subr.mxu0 0.0
    %2841 = vmatpush1.msra.mxu0 %v2455
    %2842 = vmatprep.subr.mxu0 0.0
    %2843 = vmatpush1.msra.mxu0 %v2456
    %2844 = vmatprep.subr.mxu0 0.0
    %2845 = vmatpush1.msra.mxu0 %v2457
    %2846 = vmatprep.subr.mxu0 0.0
    %2847 = vmatpush1.msra.mxu0 %v2458
    %2848 = vmatprep.subr.mxu0 0.0
    %2849 = vmatpush1.msra.mxu0 %v2459
    %2850 = vmatprep.subr.mxu0 0.0
    %2851 = vmatpush1.msra.mxu0 %v2460
    %2852 = vmatprep.subr.mxu0 0.0
    %2853 = vmatpush1.msra.mxu0 %v2461
    %2854 = vmatprep.subr.mxu0 0.0
    %2855 = vmatpush1.msra.mxu0 %v2462
    %2856 = vmatprep.subr.mxu0 0.0
    %2857 = vmatpush1.msra.mxu0 %v2463
    %2858 = vmatprep.subr.mxu0 0.0
    %2859 = vmatpush1.msra.mxu0 %v2464
    %2860 = vmatprep.subr.mxu0 0.0
    %2861 = vmatpush1.msra.mxu0 %v2465
    %2862 = vmatprep.subr.mxu0 0.0
    %2863 = vmatpush1.msra.mxu0 %v2466
    %2864 = vmatprep.subr.mxu0 0.0
    %2865 = vmatpush1.msra.mxu0 %v2467
    %2866 = vmatprep.subr.mxu0 0.0
    %2867 = vmatpush1.msra.mxu0 %v2468
    %2868 = vmatprep.subr.mxu0 0.0
    %2869 = vmatpush1.msra.mxu0 %v2469
    %2870 = vmatprep.subr.mxu0 0.0
    %2871 = vmatpush1.msra.mxu0 %v2470
    %2872 = vmatprep.subr.mxu0 0.0
    %2873 = vmatpush1.msra.mxu0 %v2471
    %2874 = vmatprep.subr.mxu0 0.0
    %2875 = vmatpush1.msra.mxu0 %v2472
    %2876 = vmatprep.subr.mxu0 0.0
    %2877 = vmatpush1.msra.mxu0 %v2473
    %2878 = vmatprep.subr.mxu0 0.0
    %2879 = vmatpush1.msra.mxu0 %v2474
    %2880 = vmatprep.subr.mxu0 0.0
    %2881 = vmatpush1.msra.mxu0 %v2475
    %2882 = vmatprep.subr.mxu0 0.0
    %2883 = vmatpush1.msra.mxu0 %v2476
    %2884 = vmatprep.subr.mxu0 0.0
    %2885 = vmatpush1.msra.mxu0 %v2477
    %2886 = vmatprep.subr.mxu0 0.0
    %2887 = vmatpush1.msra.mxu0 %v2478
    %2888 = vmatprep.mubr.f32.mxu0 %v2342
    %2889 = vmatmul.mubr.f32.gmra.mrb[0].mxu0 %v2341
    %v2890 = vpop.f32.mrb[0].mxu0
    %v2891 = vadd.f32 %v2821, %v2890
    %v2892 = vpop.f32.mrb[0].mxu0
    %2893 = vdwg.mxu0
    %2894 = vmatprep.subr.mxu0 0.0
    %2895 = vmatpush1.msra.mxu0 %v2479
    %2896 = vmatprep.subr.mxu0 0.0
    %2897 = vmatpush1.msra.mxu0 %v2480
    %2898 = vmatprep.subr.mxu0 0.0
    %2899 = vmatpush1.msra.mxu0 %v2481
    %2900 = vmatprep.subr.mxu0 0.0
    %2901 = vmatpush1.msra.mxu0 %v2482
    %2902 = vmatprep.subr.mxu0 0.0
    %2903 = vmatpush1.msra.mxu0 %v2483
    %2904 = vmatprep.subr.mxu0 0.0
    %2905 = vmatpush1.msra.mxu0 %v2484
    %2906 = vmatprep.subr.mxu0 0.0
    %2907 = vmatpush1.msra.mxu0 %v2485
    %2908 = vmatprep.subr.mxu0 0.0
    %2909 = vmatpush1.msra.mxu0 %v2486
    %2910 = vmatprep.subr.mxu0 0.0
    %2911 = vmatpush1.msra.mxu0 %v2487
    %2912 = vmatprep.subr.mxu0 0.0
    %2913 = vmatpush1.msra.mxu0 %v2488
    %2914 = vmatprep.subr.mxu0 0.0
    %2915 = vmatpush1.msra.mxu0 %v2489
    %2916 = vmatprep.subr.mxu0 0.0
    %2917 = vmatpush1.msra.mxu0 %v2490
    %2918 = vmatprep.subr.mxu0 0.0
    %2919 = vmatpush1.msra.mxu0 %v2491
    %2920 = vmatprep.subr.mxu0 0.0
    %2921 = vmatpush1.msra.mxu0 %v2492
    %2922 = vmatprep.subr.mxu0 0.0
    %2923 = vmatpush1.msra.mxu0 %v2493
    %2924 = vmatprep.subr.mxu0 0.0
    %2925 = vmatpush1.msra.mxu0 %v2494
    %2926 = vmatprep.subr.mxu0 0.0
    %2927 = vmatpush1.msra.mxu0 %v2495
    %2928 = vmatprep.subr.mxu0 0.0
    %2929 = vmatpush1.msra.mxu0 %v2496
    %2930 = vmatprep.subr.mxu0 0.0
    %2931 = vmatpush1.msra.mxu0 %v2497
    %2932 = vmatprep.subr.mxu0 0.0
    %2933 = vmatpush1.msra.mxu0 %v2498
    %2934 = vmatprep.subr.mxu0 0.0
    %2935 = vmatpush1.msra.mxu0 %v2499
    %2936 = vmatprep.subr.mxu0 0.0
    %2937 = vmatpush1.msra.mxu0 %v2500
    %2938 = vmatprep.subr.mxu0 0.0
    %2939 = vmatpush1.msra.mxu0 %v2501
    %2940 = vmatprep.subr.mxu0 0.0
    %2941 = vmatpush1.msra.mxu0 %v2502
    %2942 = vmatprep.subr.mxu0 0.0
    %2943 = vmatpush1.msra.mxu0 %v2503
    %2944 = vmatprep.subr.mxu0 0.0
    %2945 = vmatpush1.msra.mxu0 %v2504
    %2946 = vmatprep.subr.mxu0 0.0
    %2947 = vmatpush1.msra.mxu0 %v2505
    %2948 = vmatprep.subr.mxu0 0.0
    %2949 = vmatpush1.msra.mxu0 %v2506
    %2950 = vmatprep.subr.mxu0 0.0
    %2951 = vmatpush1.msra.mxu0 %v2507
    %2952 = vmatprep.subr.mxu0 0.0
    %2953 = vmatpush1.msra.mxu0 %v2508
    %2954 = vmatprep.subr.mxu0 0.0
    %2955 = vmatpush1.msra.mxu0 %v2509
    %2956 = vmatprep.subr.mxu0 0.0
    %2957 = vmatpush1.msra.mxu0 %v2510
    %2958 = vmatprep.mubr.f32.mxu0 %v2344
    %2959 = vmatmul.mubr.f32.gmra.mrb[0].mxu0 %v2343
    %v2960 = vpop.f32.mrb[0].mxu0
    %v2961 = vadd.f32 %v2891, %v2960
    %v2962 = vpop.f32.mrb[0].mxu0
    %2963 = vdwg.mxu0
    %2964 = vmatprep.subr.mxu0 0.0
    %2965 = vmatpush1.msra.mxu0 %v2511
    %2966 = vmatprep.subr.mxu0 0.0
    %2967 = vmatpush1.msra.mxu0 %v2512
    %2968 = vmatprep.subr.mxu0 0.0
    %2969 = vmatpush1.msra.mxu0 %v2513
    %2970 = vmatprep.subr.mxu0 0.0
    %2971 = vmatpush1.msra.mxu0 %v2514
    %2972 = vmatprep.subr.mxu0 0.0
    %2973 = vmatpush1.msra.mxu0 %v2515
    %2974 = vmatprep.subr.mxu0 0.0
    %2975 = vmatpush1.msra.mxu0 %v2516
    %2976 = vmatprep.subr.mxu0 0.0
    %2977 = vmatpush1.msra.mxu0 %v2517
    %2978 = vmatprep.subr.mxu0 0.0
    %2979 = vmatpush1.msra.mxu0 %v2518
    %2980 = vmatprep.subr.mxu0 0.0
    %2981 = vmatpush1.msra.mxu0 %v2519
    %2982 = vmatprep.subr.mxu0 0.0
    %2983 = vmatpush1.msra.mxu0 %v2520
    %2984 = vmatprep.subr.mxu0 0.0
    %2985 = vmatpush1.msra.mxu0 %v2521
    %2986 = vmatprep.subr.mxu0 0.0
    %2987 = vmatpush1.msra.mxu0 %v2522
    %2988 = vmatprep.subr.mxu0 0.0
    %2989 = vmatpush1.msra.mxu0 %v2523
    %2990 = vmatprep.subr.mxu0 0.0
    %2991 = vmatpush1.msra.mxu0 %v2524
    %2992 = vmatprep.subr.mxu0 0.0
    %2993 = vmatpush1.msra.mxu0 %v2525
    %2994 = vmatprep.subr.mxu0 0.0
    %2995 = vmatpush1.msra.mxu0 %v2526
    %2996 = vmatprep.subr.mxu0 0.0
    %2997 = vmatpush1.msra.mxu0 %v2527
    %2998 = vmatprep.subr.mxu0 0.0
    %2999 = vmatpush1.msra.mxu0 %v2528
    %3000 = vmatprep.subr.mxu0 0.0
    %3001 = vmatpush1.msra.mxu0 %v2529
    %3002 = vmatprep.subr.mxu0 0.0
    %3003 = vmatpush1.msra.mxu0 %v2530
    %3004 = vmatprep.subr.mxu0 0.0
    %3005 = vmatpush1.msra.mxu0 %v2531
    %3006 = vmatprep.subr.mxu0 0.0
    %3007 = vmatpush1.msra.mxu0 %v2532
    %3008 = vmatprep.subr.mxu0 0.0
    %3009 = vmatpush1.msra.mxu0 %v2533
    %3010 = vmatprep.subr.mxu0 0.0
    %3011 = vmatpush1.msra.mxu0 %v2534
    %3012 = vmatprep.subr.mxu0 0.0
    %3013 = vmatpush1.msra.mxu0 %v2535
    %3014 = vmatprep.subr.mxu0 0.0
    %3015 = vmatpush1.msra.mxu0 %v2536
    %3016 = vmatprep.subr.mxu0 0.0
    %3017 = vmatpush1.msra.mxu0 %v2537
    %3018 = vmatprep.subr.mxu0 0.0
    %3019 = vmatpush1.msra.mxu0 %v2538
    %3020 = vmatprep.subr.mxu0 0.0
    %3021 = vmatpush1.msra.mxu0 %v2539
    %3022 = vmatprep.subr.mxu0 0.0
    %3023 = vmatpush1.msra.mxu0 %v2540
    %3024 = vmatprep.subr.mxu0 0.0
    %3025 = vmatpush1.msra.mxu0 %v2541
    %3026 = vmatprep.subr.mxu0 0.0
    %3027 = vmatpush1.msra.mxu0 %v2542
    %3028 = vmatprep.mubr.f32.mxu0 %v2346
    %3029 = vmatmul.mubr.f32.gmra.mrb[0].mxu0 %v2345
    %v3030 = vpop.f32.mrb[0].mxu0
    %v3031 = vadd.f32 %v2961, %v3030
    %v3032 = vpop.f32.mrb[0].mxu0
    %3033 = vdwg.mxu0
    %3034 = vmatprep.subr.mxu0 0.0
    %3035 = vmatpush1.msra.mxu0 %v2543
    %3036 = vmatprep.subr.mxu0 0.0
    %3037 = vmatpush1.msra.mxu0 %v2544
    %3038 = vmatprep.subr.mxu0 0.0
    %3039 = vmatpush1.msra.mxu0 %v2545
    %3040 = vmatprep.subr.mxu0 0.0
    %3041 = vmatpush1.msra.mxu0 %v2546
    %3042 = vmatprep.subr.mxu0 0.0
    %3043 = vmatpush1.msra.mxu0 %v2547
    %3044 = vmatprep.subr.mxu0 0.0
    %3045 = vmatpush1.msra.mxu0 %v2548
    %3046 = vmatprep.subr.mxu0 0.0
    %3047 = vmatpush1.msra.mxu0 %v2549
    %3048 = vmatprep.subr.mxu0 0.0
    %3049 = vmatpush1.msra.mxu0 %v2550
    %3050 = vmatprep.subr.mxu0 0.0
    %3051 = vmatpush1.msra.mxu0 %v2551
    %3052 = vmatprep.subr.mxu0 0.0
    %3053 = vmatpush1.msra.mxu0 %v2552
    %3054 = vmatprep.subr.mxu0 0.0
    %3055 = vmatpush1.msra.mxu0 %v2553
    %3056 = vmatprep.subr.mxu0 0.0
    %3057 = vmatpush1.msra.mxu0 %v2554
    %3058 = vmatprep.subr.mxu0 0.0
    %3059 = vmatpush1.msra.mxu0 %v2555
    %3060 = vmatprep.subr.mxu0 0.0
    %3061 = vmatpush1.msra.mxu0 %v2556
    %3062 = vmatprep.subr.mxu0 0.0
    %3063 = vmatpush1.msra.mxu0 %v2557
    %3064 = vmatprep.subr.mxu0 0.0
    %3065 = vmatpush1.msra.mxu0 %v2558
    %3066 = vmatprep.subr.mxu0 0.0
    %3067 = vmatpush1.msra.mxu0 %v2559
    %3068 = vmatprep.subr.mxu0 0.0
    %3069 = vmatpush1.msra.mxu0 %v2560
    %3070 = vmatprep.subr.mxu0 0.0
    %3071 = vmatpush1.msra.mxu0 %v2561
    %3072 = vmatprep.subr.mxu0 0.0
    %3073 = vmatpush1.msra.mxu0 %v2562
    %3074 = vmatprep.subr.mxu0 0.0
    %3075 = vmatpush1.msra.mxu0 %v2563
    %3076 = vmatprep.subr.mxu0 0.0
    %3077 = vmatpush1.msra.mxu0 %v2564
    %3078 = vmatprep.subr.mxu0 0.0
    %3079 = vmatpush1.msra.mxu0 %v2565
    %3080 = vmatprep.subr.mxu0 0.0
    %3081 = vmatpush1.msra.mxu0 %v2566
    %3082 = vmatprep.subr.mxu0 0.0
    %3083 = vmatpush1.msra.mxu0 %v2567
    %3084 = vmatprep.subr.mxu0 0.0
    %3085 = vmatpush1.msra.mxu0 %v2568
    %3086 = vmatprep.subr.mxu0 0.0
    %3087 = vmatpush1.msra.mxu0 %v2569
    %3088 = vmatprep.subr.mxu0 0.0
    %3089 = vmatpush1.msra.mxu0 %v2570
    %3090 = vmatprep.subr.mxu0 0.0
    %3091 = vmatpush1.msra.mxu0 %v2571
    %3092 = vmatprep.subr.mxu0 0.0
    %3093 = vmatpush1.msra.mxu0 %v2572
    %3094 = vmatprep.subr.mxu0 0.0
    %3095 = vmatpush1.msra.mxu0 %v2573
    %3096 = vmatprep.subr.mxu0 0.0
    %3097 = vmatpush1.msra.mxu0 %v2574
    %3098 = vmatprep.mubr.f32.mxu0 %v2348
    %3099 = vmatmul.mubr.f32.gmra.mrb[0].mxu0 %v2347
    %v3100 = vpop.f32.mrb[0].mxu0
    %v3101 = vadd.f32 %v3031, %v3100
    %v3102 = vpop.f32.mrb[0].mxu0
    %3103 = vdwg.mxu0
    %3104 = vmatprep.subr.mxu0 0.0
    %3105 = vmatpush1.msra.mxu0 %v2575
    %3106 = vmatprep.subr.mxu0 0.0
    %3107 = vmatpush1.msra.mxu0 %v2576
    %3108 = vmatprep.subr.mxu0 0.0
    %3109 = vmatpush1.msra.mxu0 %v2577
    %3110 = vmatprep.subr.mxu0 0.0
    %3111 = vmatpush1.msra.mxu0 %v2578
    %3112 = vmatprep.subr.mxu0 0.0
    %3113 = vmatpush1.msra.mxu0 %v2579
    %3114 = vmatprep.subr.mxu0 0.0
    %3115 = vmatpush1.msra.mxu0 %v2580
    %3116 = vmatprep.subr.mxu0 0.0
    %3117 = vmatpush1.msra.mxu0 %v2581
    %3118 = vmatprep.subr.mxu0 0.0
    %3119 = vmatpush1.msra.mxu0 %v2582
    %3120 = vmatprep.subr.mxu0 0.0
    %3121 = vmatpush1.msra.mxu0 %v2583
    %3122 = vmatprep.subr.mxu0 0.0
    %3123 = vmatpush1.msra.mxu0 %v2584
    %3124 = vmatprep.subr.mxu0 0.0
    %3125 = vmatpush1.msra.mxu0 %v2585
    %3126 = vmatprep.subr.mxu0 0.0
    %3127 = vmatpush1.msra.mxu0 %v2586
    %3128 = vmatprep.subr.mxu0 0.0
    %3129 = vmatpush1.msra.mxu0 %v2587
    %3130 = vmatprep.subr.mxu0 0.0
    %3131 = vmatpush1.msra.mxu0 %v2588
    %3132 = vmatprep.subr.mxu0 0.0
    %3133 = vmatpush1.msra.mxu0 %v2589
    %3134 = vmatprep.subr.mxu0 0.0
    %3135 = vmatpush1.msra.mxu0 %v2590
    %3136 = vmatprep.subr.mxu0 0.0
    %3137 = vmatpush1.msra.mxu0 %v2591
    %3138 = vmatprep.subr.mxu0 0.0
    %3139 = vmatpush1.msra.mxu0 %v2592
    %3140 = vmatprep.subr.mxu0 0.0
    %3141 = vmatpush1.msra.mxu0 %v2593
    %3142 = vmatprep.subr.mxu0 0.0
    %3143 = vmatpush1.msra.mxu0 %v2594
    %3144 = vmatprep.subr.mxu0 0.0
    %3145 = vmatpush1.msra.mxu0 %v2595
    %3146 = vmatprep.subr.mxu0 0.0
    %3147 = vmatpush1.msra.mxu0 %v2596
    %3148 = vmatprep.subr.mxu0 0.0
    %3149 = vmatpush1.msra.mxu0 %v2597
    %3150 = vmatprep.subr.mxu0 0.0
    %3151 = vmatpush1.msra.mxu0 %v2598
    %3152 = vmatprep.subr.mxu0 0.0
    %3153 = vmatpush1.msra.mxu0 %v2599
    %3154 = vmatprep.subr.mxu0 0.0
    %3155 = vmatpush1.msra.mxu0 %v2600
    %3156 = vmatprep.subr.mxu0 0.0
    %3157 = vmatpush1.msra.mxu0 %v2601
    %3158 = vmatprep.subr.mxu0 0.0
    %3159 = vmatpush1.msra.mxu0 %v2602
    %3160 = vmatprep.subr.mxu0 0.0
    %3161 = vmatpush1.msra.mxu0 %v2603
    %3162 = vmatprep.subr.mxu0 0.0
    %3163 = vmatpush1.msra.mxu0 %v2604
    %3164 = vmatprep.subr.mxu0 0.0
    %3165 = vmatpush1.msra.mxu0 %v2605
    %3166 = vmatprep.subr.mxu0 0.0
    %3167 = vmatpush1.msra.mxu0 %v2606
    %3168 = vmatprep.mubr.f32.mxu0 %v2350
    %3169 = vmatmul.mubr.f32.gmra.mrb[0].mxu0 %v2349
    %v3170 = vpop.f32.mrb[0].mxu0
    %v3171 = vadd.f32 %v3101, %v3170
    %v3172 = vpop.f32.mrb[0].mxu0
    %3173 = vdwg.mxu0
    %3174 = vst [vmem:[#allocation11] sm:$0xff] %v3171
    // Predicated region
    $region42: #{tpu_custom_call.1} parent=1 // pred_check
      _
    $region43: #{tpu_custom_call.1} parent=1 // pred_check_branch
      %3176 = sbr.rel (0) target = $region45
    $region44: #{tpu_custom_call.1} parent=1 // pred_region
      %s3178 = ssub.s32 128, 128
      %3179 = vsyncadd [#allocation4], %s3178
      %s3181 = sshll.u32 [#allocation11], 4
      %s3182 = int_to_ptr.vmem [resolvable:$true] %s3181
      %3184 = dma.vmem_to_hbm [thread:$0]  %s3182, 128, %s5, [#allocation4]
    $region45: #{tpu_custom_call.1} parent=1 // pred_fallthru
      _
    // Predicated region
    $region46: #{tpu_custom_call.1} parent=1 // pred_check
      _
    $region47: #{tpu_custom_call.1} parent=1 // pred_check_branch
      %3186 = sbr.rel (0) target = $region49
    $region48: #{tpu_custom_call.1} parent=1 // pred_region
      %3187 = dma.done [#allocation4], 128
    $region49: #{tpu_custom_call.1} parent=1 // pred_fallthru
      _
    %3188 = vsyncpa [#allocation3], 1
    %3189 = vsyncpa [#allocation6], 1
    %3190 = vsyncpa [#allocation9], 1
    %3191 = vsyncpa [#allocation4], 1

</llo_original>
